<compile_context>
chip_gen: v6e
topology: v6e:2x2x1
jax: 0.10.0
libtpu: 0.0.40
codegen_flags: <defaults>
</compile_context>

<pallas_src>
import math

import jax
import jax.numpy as jnp
from jax import lax
from jax.experimental import pallas as pl
from jax.experimental.pallas import tpu as pltpu

H = 30        # hiddens_hourly == hiddens_daily
F_IN = 4      # inputs_hourly == inputs_daily
HP = 32       # padded per-branch hidden block (32 lanes)
BP = 8        # padded batch (one sublane tile)
GL = 256      # fused per-layer gate lanes: 4 gates x (hourly 32 | daily 32)
NSTATE = 128  # fused h-state lanes: [h0_h | h0_d | h1_h | h1_d]

# Row offsets inside the packed 256-lane weight slab.
R_WIN = 0      # (64, 256)  layer-0 input weights, both branches
R_WIH1 = 64    # (64, 256)  layer-1 input weights, both branches
R_WA = 128     # (64, 256)  block-diag(fc1, fc3)
R_WB = 192     # (256, 256) block-diag(fc2, fc4)
R_BIAS = 448   # row 448: b0, 449: b1, 450: [b_fc1|b_fc3], 451: [b_fc2|b_fc4]
SLAB_ROWS = 456


# ----------------------------------------------------------------------------
# Fused Pallas kernel: both LSTM branches + both FC heads in one call.
# ----------------------------------------------------------------------------
def make_netz_kernel(Th, Td):
    Tmax = max(Th, Td)

    def kernel(x_ref, slab_ref, wrec_ref, out_ref, proj_ref):
        # Per-lane constants for sigmoid-via-tanh.  Per-layer gate layout over
        # 256 lanes: [i_h|i_d | f_h|f_d | g_h|g_d | o_h|o_d], 32 lanes each.
        # sigmoid lanes (i/f/o) use 0.5*tanh(0.5*x)+0.5, g lanes use tanh(x).
        lane = lax.broadcasted_iota(jnp.int32, (BP, GL), 1)
        is_g = (lane >= 128) & (lane < 192)
        sc = jnp.where(is_g, 1.0, 0.5)   # pre- and post-scale
        ad = jnp.where(is_g, 0.0, 0.5)   # post-add

        # Layer-0 input projection (+ bias) for the whole sequence, both
        # branches at once: one matmul into VMEM scratch.
        proj_ref[...] = (
            jnp.dot(x_ref[...], slab_ref[R_WIN:R_WIN + 64, :],
                    preferred_element_type=jnp.float32)
            + slab_ref[R_BIAS:R_BIAS + 1, :])

        b1 = slab_ref[R_BIAS + 1:R_BIAS + 2, :]          # (1, 256) layer-1 bias

        def activate(pre):
            return jnp.tanh(pre * sc) * sc + ad

        def cell(a, c_prev):
            i = a[:, 0:64]
            f = a[:, 64:128]
            g = a[:, 128:192]
            o = a[:, 192:256]
            c_new = f * c_prev + i * g
            h_new = o * jnp.tanh(c_new)
            return h_new, c_new

        zs = jnp.zeros((BP, 64), jnp.float32)
        h_state = jnp.zeros((BP, NSTATE), jnp.float32)
        c0 = zs
        c1 = zs
        hn_h = zs
        hn_d = zs

        # Fully unrolled fused time loop.  Both branches advance every step;
        # the shorter branch's lanes get zero input in the tail and its final
        # hidden state is snapshotted at its last real step.
        for t in range(Tmax):
            # One fused recurrent matmul (weights read from VMEM, not hoisted).
            rec = jnp.dot(h_state, wrec_ref[...],
                          preferred_element_type=jnp.float32)        # (8, 512)
            # Layer 0 (both branches).
            a0 = activate(proj_ref[t * BP:(t + 1) * BP, :] + rec[:, :GL])
            h0n, c0 = cell(a0, c0)
            # Layer 1 (both branches).
            g1 = (jnp.dot(h0n, slab_ref[R_WIH1:R_WIH1 + 64, :],
                          preferred_element_type=jnp.float32)
                  + rec[:, GL:2 * GL] + b1)
            a1 = activate(g1)
            h1n, c1 = cell(a1, c1)
            h_state = jnp.concatenate([h0n, h1n], axis=1)            # (8, 128)
            if t == Th - 1:
                hn_h = h1n
            if t == Td - 1:
                hn_d = h1n

        # Fused FC heads.  hn_* are (8,64) = [hourly 32 | daily 32]; pick the
        # hourly half of the hourly snapshot and the daily half of the daily
        # snapshot with a per-lane select (no lane movement).
        lane64 = lax.broadcasted_iota(jnp.int32, (BP, 64), 1)
        head_in = jnp.maximum(jnp.where(lane64 < HP, hn_h, hn_d), 0.0)
        y1 = (jnp.dot(head_in, slab_ref[R_WA:R_WA + 64, :],
                      preferred_element_type=jnp.float32)
              + slab_ref[R_BIAS + 2:R_BIAS + 3, :])                  # (8, 256)
        # fc3 output (daily lanes 128:256) gets ReLU before fc4; fc1 output
        # (hourly lanes 0:128) feeds fc2 directly.
        y1 = jnp.where(lane >= 128, jnp.maximum(y1, 0.0), y1)
        y2 = (jnp.dot(y1, slab_ref[R_WB:R_WB + 256, :],
                      preferred_element_type=jnp.float32)
              + slab_ref[R_BIAS + 3:R_BIAS + 4, :])                  # (8, 256)
        # fc2 output (hourly lanes) gets trailing ReLU; fc4 output does not.
        out_ref[...] = jnp.where(lane < 128, jnp.maximum(y2, 0.0), y2)

    return kernel


# ----------------------------------------------------------------------------
# pallas_call wrapper
# ----------------------------------------------------------------------------
def _prep_inputs(x_hourly, x_daily):
    """Pack both branches' inputs into one ((Tmax*8), 64) slab.

    hourly features -> cols [0:F), daily features -> cols [32:32+F).
    Padded batch rows / feature cols / daily tail steps are zero.
    """
    B, Th, Fh = x_hourly.shape
    Td = x_daily.shape[0]
    Fd = x_daily.shape[2]
    Tmax = max(Th, Td)
    xh = jnp.transpose(x_hourly, (1, 0, 2))          # (Th, B, F)
    xc = jnp.zeros((Tmax, BP, 64), jnp.float32)
    xc = xc.at[:Th, :B, 0:Fh].set(xh)
    xc = xc.at[:Td, :B, HP:HP + Fd].set(x_daily)
    return xc.reshape(Tmax * BP, 64), Th, Td


@jax.jit
def netz_forward(x_hourly, x_daily, packed):
    B = x_hourly.shape[0]
    assert B <= BP and x_hourly.shape[2] <= HP and x_daily.shape[2] <= HP
    assert x_daily.shape[1] == B

    x_comb, Th, Td = _prep_inputs(x_hourly, x_daily)
    Tmax = max(Th, Td)

    out = pl.pallas_call(
        make_netz_kernel(Th, Td),
        out_shape=jax.ShapeDtypeStruct((BP, GL), jnp.float32),
        grid=(1,),
        in_specs=[
            pl.BlockSpec((Tmax * BP, 64), lambda i: (0, 0)),
            pl.BlockSpec((SLAB_ROWS, GL), lambda i: (0, 0)),
            pl.BlockSpec((NSTATE, 2 * GL), lambda i: (0, 0)),
        ],
        out_specs=pl.BlockSpec((BP, GL), lambda i: (0, 0)),
        scratch_shapes=[pltpu.VMEM((Tmax * BP, GL), jnp.float32)],
        compiler_params=pltpu.CompilerParams(
            dimension_semantics=("arbitrary",)),
    )(x_comb, packed["slab"], packed["wrec"])

    weights_hourly = out[:B, 0:F_IN]
    out_daily = out[:B, 128:129]
    return out_daily, weights_hourly


# ----------------------------------------------------------------------------
# Parameters (deterministic synthetic init, PyTorch-style uniform ranges)
# ----------------------------------------------------------------------------
def init_lstm_raw(key, in_dim):
    k = 1.0 / math.sqrt(H)
    ks = jax.random.split(key, 8)
    u = lambda kk, s: jax.random.uniform(kk, s, jnp.float32, -k, k)
    return dict(
        wih0=u(ks[0], (in_dim, 4 * H)), whh0=u(ks[1], (H, 4 * H)),
        bih0=u(ks[2], (4 * H,)), bhh0=u(ks[3], (4 * H,)),
        wih1=u(ks[4], (H, 4 * H)), whh1=u(ks[5], (H, 4 * H)),
        bih1=u(ks[6], (4 * H,)), bhh1=u(ks[7], (4 * H,)),
    )


def init_linear_raw(key, in_dim, out_dim):
    k = 1.0 / math.sqrt(in_dim)
    k1, k2 = jax.random.split(key)
    w = jax.random.uniform(k1, (in_dim, out_dim), jnp.float32, -k, k)
    b = jax.random.uniform(k2, (out_dim,), jnp.float32, -k, k)
    return (w, b)


def init_params(key):
    kh, kd, k1, k2, k3, k4 = jax.random.split(key, 6)
    return dict(
        lstm_hourly=init_lstm_raw(kh, F_IN),
        lstm_daily=init_lstm_raw(kd, F_IN),
        fc1=init_linear_raw(k1, H, 128),
        fc2=init_linear_raw(k2, 128, F_IN),
        fc3=init_linear_raw(k3, H, 128),
        fc4=init_linear_raw(k4, 128, 1),
    )


def _set_gates(dst, row0, col0, w, branch):
    """Place an (in, 4H) gate-concatenated weight into the fused gate layout.

    Per-layer gate layout (256 lanes starting at col0):
      gate g in {i,f,g,o} -> cols col0 + g*64 + branch*32 + [0:H).
    """
    in_dim = w.shape[0]
    for g in range(4):
        c = col0 + g * 64 + branch * HP
        dst = dst.at[row0:row0 + in_dim, c:c + H].set(w[:, g * H:(g + 1) * H])
    return dst


def _gate_bias_row(b_h, b_d):
    row = jnp.zeros((GL,), jnp.float32)
    for g in range(4):
        row = row.at[g * 64:g * 64 + H].set(b_h[g * H:(g + 1) * H])
        row = row.at[g * 64 + HP:g * 64 + HP + H].set(b_d[g * H:(g + 1) * H])
    return row


def pack_params(raw):
    """Pack all weights/biases into two slabs (one 256-lane, one 512-lane)."""
    lh, ld = raw["lstm_hourly"], raw["lstm_daily"]
    slab = jnp.zeros((SLAB_ROWS, GL), jnp.float32)

    # W_in: rows [0:32] <- hourly x features, rows [32:64] <- daily x features.
    slab = _set_gates(slab, R_WIN + 0, 0, lh["wih0"], 0)
    slab = _set_gates(slab, R_WIN + HP, 0, ld["wih0"], 1)
    # W_ih1: rows [0:32] <- h0n hourly, rows [32:64] <- h0n daily.
    slab = _set_gates(slab, R_WIH1 + 0, 0, lh["wih1"], 0)
    slab = _set_gates(slab, R_WIH1 + HP, 0, ld["wih1"], 1)
    # W_a = block_diag(fc1, fc3): LHS = [relu(hn_h)(32) | relu(hn_d)(32)].
    w1, b1 = raw["fc1"]
    w3, b3 = raw["fc3"]
    slab = slab.at[R_WA + 0:R_WA + H, 0:128].set(w1)
    slab = slab.at[R_WA + HP:R_WA + HP + H, 128:256].set(w3)
    # W_b = block_diag(fc2, fc4): LHS = [fc1-out(128) | fc3-out(128)].
    w2, b2 = raw["fc2"]
    w4, b4 = raw["fc4"]
    slab = slab.at[R_WB + 0:R_WB + 128, 0:w2.shape[1]].set(w2)
    slab = slab.at[R_WB + 128:R_WB + 256, 128:128 + w4.shape[1]].set(w4)
    # Bias rows.
    slab = slab.at[R_BIAS + 0].set(
        _gate_bias_row(lh["bih0"] + lh["bhh0"], ld["bih0"] + ld["bhh0"]))
    slab = slab.at[R_BIAS + 1].set(
        _gate_bias_row(lh["bih1"] + lh["bhh1"], ld["bih1"] + ld["bhh1"]))
    ba = jnp.zeros((GL,), jnp.float32).at[0:128].set(b1).at[128:256].set(b3)
    bb = (jnp.zeros((GL,), jnp.float32)
          .at[0:w2.shape[1]].set(b2)
          .at[128:128 + w4.shape[1]].set(b4))
    slab = slab.at[R_BIAS + 2].set(ba)
    slab = slab.at[R_BIAS + 3].set(bb)

    # Block-diagonal fused recurrent weight.  LHS lane order:
    # [h0_h | h0_d | h1_h | h1_d]; output cols [0:256] layer-0 gates,
    # [256:512] layer-1 gates.
    wrec = jnp.zeros((NSTATE, 2 * GL), jnp.float32)
    wrec = _set_gates(wrec, 0, 0, lh["whh0"], 0)
    wrec = _set_gates(wrec, HP, 0, ld["whh0"], 1)
    wrec = _set_gates(wrec, 2 * HP, GL, lh["whh1"], 0)
    wrec = _set_gates(wrec, 3 * HP, GL, ld["whh1"], 1)

    return {"slab": slab, "wrec": wrec}


# ----------------------------------------------------------------------------
# Pure-JAX reference
# ----------------------------------------------------------------------------
def _lstm2_ref(x_tbf, raw):
    B = x_tbf.shape[1]

    def cell(xt, h, c, wih, whh, b):
        g = xt @ wih + h @ whh + b
        i = jax.nn.sigmoid(g[:, :H])
        f = jax.nn.sigmoid(g[:, H:2 * H])
        gg = jnp.tanh(g[:, 2 * H:3 * H])
        o = jax.nn.sigmoid(g[:, 3 * H:])
        c = f * c + i * gg
        return o * jnp.tanh(c), c

    def step(carry, xt):
        h0, c0, h1, c1 = carry
        h0, c0 = cell(xt, h0, c0, raw["wih0"], raw["whh0"],
                      raw["bih0"] + raw["bhh0"])
        h1, c1 = cell(h0, h1, c1, raw["wih1"], raw["whh1"],
                      raw["bih1"] + raw["bhh1"])
        return (h0, c0, h1, c1), None

    z = jnp.zeros((B, H), jnp.float32)
    (_, _, h1, _), _ = lax.scan(step, (z, z, z, z), x_tbf)
    return h1


def netz_forward_ref(x_hourly, x_daily, raw):
    hn_h = _lstm2_ref(jnp.transpose(x_hourly, (1, 0, 2)), raw["lstm_hourly"])
    w1, b1 = raw["fc1"]
    w2, b2 = raw["fc2"]
    wh = jnp.maximum(hn_h, 0.0) @ w1 + b1
    wh = jnp.maximum(wh @ w2 + b2, 0.0)
    hn_d = _lstm2_ref(x_daily, raw["lstm_daily"])
    w3, b3 = raw["fc3"]
    w4, b4 = raw["fc4"]
    y = jnp.maximum(jnp.maximum(hn_d, 0.0) @ w3 + b3, 0.0)
    out = y @ w4 + b4
    return out, wh


# ----------------------------------------------------------------------------
if __name__ == "__main__":
    key = jax.random.PRNGKey(0)
    k_params, k_xh, k_xd = jax.random.split(key, 3)

    B, T_HOURLY, T_DAILY = 2, 8, 6
    x_hourly = jax.random.normal(k_xh, (B, T_HOURLY, F_IN), jnp.float32)  # batch-first
    x_daily = jax.random.normal(k_xd, (T_DAILY, B, F_IN), jnp.float32)    # seq-first

    raw_params = init_params(k_params)
    packed_params = pack_params(raw_params)

    out, weights_hourly = jax.block_until_ready(
        netz_forward(x_hourly, x_daily, packed_params))

    out_ref, wh_ref = netz_forward_ref(x_hourly, x_daily, raw_params)
    assert out.shape == (B, 1) and weights_hourly.shape == (B, F_IN)
    assert jnp.allclose(out, out_ref, atol=1e-4, rtol=1e-4)
    assert jnp.allclose(weights_hourly, wh_ref, atol=1e-4, rtol=1e-4)

    print("KERNEL_OK")
</pallas_src>

<mosaic_0001>
module attributes {stable_mosaic.version = 11 : i64} {
  func.func @kernel(%arg0: i32, %arg1: memref<64x64xf32, #tpu.memory_space<vmem>>, %arg2: memref<456x256xf32, #tpu.memory_space<vmem>>, %arg3: memref<128x512xf32, #tpu.memory_space<vmem>>, %arg4: memref<8x256xf32, #tpu.memory_space<vmem>>, %arg5: memref<64x256xf32, #tpu.memory_space<vmem>>) attributes {dimension_semantics = [#tpu.dimension_semantics<arbitrary>], iteration_bounds = array<i64: 1>, scalar_prefetch = 0 : i64, scratch_operands = 1 : i64, tpu.core_type = #tpu.core_type<tc>, window_params = [{pipeline_mode = #tpu.pipeline_mode<synchronous>, transform_indices = @transform_0, window_bounds = array<i64: 64, 64>}, {pipeline_mode = #tpu.pipeline_mode<synchronous>, transform_indices = @transform_1, window_bounds = array<i64: 456, 256>}, {pipeline_mode = #tpu.pipeline_mode<synchronous>, transform_indices = @transform_2, window_bounds = array<i64: 128, 512>}, {pipeline_mode = #tpu.pipeline_mode<synchronous>, transform_indices = @transform_3, window_bounds = array<i64: 8, 256>}]} {
    %0 = tpu.iota {dimensions = array<i32: 1>} : vector<8x256xi32>
    %c128_i32 = arith.constant 128 : i32
    %1 = vector.broadcast %c128_i32 : i32 to vector<8x256xi32>
    %2 = arith.cmpi sge, %0, %1 : vector<8x256xi32>
    %c192_i32 = arith.constant 192 : i32
    %3 = vector.broadcast %c192_i32 : i32 to vector<8x256xi32>
    %4 = arith.cmpi slt, %0, %3 : vector<8x256xi32>
    %5 = arith.andi %2, %4 : vector<8x256xi1>
    %cst = arith.constant 1.000000e+00 : f32
    %cst_0 = arith.constant 5.000000e-01 : f32
    %6 = vector.broadcast %cst : f32 to vector<8x256xf32>
    %7 = vector.broadcast %cst_0 : f32 to vector<8x256xf32>
    %8 = arith.select %5, %6, %7 : vector<8x256xi1>, vector<8x256xf32>
    %cst_1 = arith.constant 0.000000e+00 : f32
    %cst_2 = arith.constant 5.000000e-01 : f32
    %9 = vector.broadcast %cst_1 : f32 to vector<8x256xf32>
    %10 = vector.broadcast %cst_2 : f32 to vector<8x256xf32>
    %11 = arith.select %5, %9, %10 : vector<8x256xi1>, vector<8x256xf32>
    %c0 = arith.constant 0 : index
    %c0_3 = arith.constant 0 : index
    %12 = vector.load %arg1[%c0, %c0_3] : memref<64x64xf32, #tpu.memory_space<vmem>>, vector<64x64xf32>
    %c0_4 = arith.constant 0 : index
    %c0_5 = arith.constant 0 : index
    %13 = vector.load %arg2[%c0_4, %c0_5] : memref<456x256xf32, #tpu.memory_space<vmem>>, vector<64x256xf32>
    %cst_6 = arith.constant dense<0.000000e+00> : vector<64x256xf32>
    %14 = tpu.matmul %12, %13, %cst_6 {dimension_numbers = #tpu.dot_dimension_numbers<[1], [0], [0], [1], [0, 0, 1, 1], [], []>} : vector<64x64xf32>, vector<64x256xf32>, vector<64x256xf32> -> vector<64x256xf32>
    %c448 = arith.constant 448 : index
    %c0_7 = arith.constant 0 : index
    %15 = vector.load %arg2[%c448, %c0_7] : memref<456x256xf32, #tpu.memory_space<vmem>>, vector<1x256xf32>
    %16 = vector.broadcast %15 : vector<1x256xf32> to vector<64x256xf32>
    %17 = arith.addf %14, %16 : vector<64x256xf32>
    %c0_8 = arith.constant 0 : index
    %c0_9 = arith.constant 0 : index
    %18 = vector.load %arg5[%c0_8, %c0_9] : memref<64x256xf32, #tpu.memory_space<vmem>>, vector<64x256xf32>
    tpu.vector_store %arg5[%c0_8, %c0_9], %17 {strides = array<i32>} : memref<64x256xf32, #tpu.memory_space<vmem>>, vector<64x256xf32>,
    %c449 = arith.constant 449 : index
    %c0_10 = arith.constant 0 : index
    %19 = vector.load %arg2[%c449, %c0_10] : memref<456x256xf32, #tpu.memory_space<vmem>>, vector<1x256xf32>
    %cst_11 = arith.constant 0.000000e+00 : f32
    %20 = vector.broadcast %cst_11 : f32 to vector<8x64xf32>
    %cst_12 = arith.constant 0.000000e+00 : f32
    %21 = vector.broadcast %cst_12 : f32 to vector<8x128xf32>
    %c0_13 = arith.constant 0 : index
    %c0_14 = arith.constant 0 : index
    %22 = vector.load %arg3[%c0_13, %c0_14] : memref<128x512xf32, #tpu.memory_space<vmem>>, vector<128x512xf32>
    %cst_15 = arith.constant dense<0.000000e+00> : vector<8x512xf32>
    %23 = tpu.matmul %21, %22, %cst_15 {dimension_numbers = #tpu.dot_dimension_numbers<[1], [0], [0], [1], [0, 0, 1, 1], [], []>} : vector<8x128xf32>, vector<128x512xf32>, vector<8x512xf32> -> vector<8x512xf32>
    %c0_16 = arith.constant 0 : index
    %c0_17 = arith.constant 0 : index
    %24 = vector.load %arg5[%c0_16, %c0_17] : memref<64x256xf32, #tpu.memory_space<vmem>>, vector<8x256xf32>
    %25 = vector.extract_strided_slice %23 {offsets = [0, 0], sizes = [8, 256], strides = [1, 1]} : vector<8x512xf32> to vector<8x256xf32>
    %26 = arith.addf %24, %25 : vector<8x256xf32>
    %27 = arith.mulf %26, %8 : vector<8x256xf32>
    %28 = math.tanh %27 : vector<8x256xf32>
    %29 = arith.mulf %28, %8 : vector<8x256xf32>
    %30 = arith.addf %29, %11 : vector<8x256xf32>
    %31 = vector.extract_strided_slice %30 {offsets = [0, 0], sizes = [8, 64], strides = [1, 1]} : vector<8x256xf32> to vector<8x64xf32>
    %32 = vector.extract_strided_slice %30 {offsets = [0, 64], sizes = [8, 64], strides = [1, 1]} : vector<8x256xf32> to vector<8x64xf32>
    %33 = vector.extract_strided_slice %30 {offsets = [0, 128], sizes = [8, 64], strides = [1, 1]} : vector<8x256xf32> to vector<8x64xf32>
    %34 = vector.extract_strided_slice %30 {offsets = [0, 192], sizes = [8, 64], strides = [1, 1]} : vector<8x256xf32> to vector<8x64xf32>
    %35 = arith.mulf %32, %20 : vector<8x64xf32>
    %36 = arith.mulf %31, %33 : vector<8x64xf32>
    %37 = arith.addf %35, %36 : vector<8x64xf32>
    %38 = math.tanh %37 : vector<8x64xf32>
    %39 = arith.mulf %34, %38 : vector<8x64xf32>
    %c64 = arith.constant 64 : index
    %c0_18 = arith.constant 0 : index
    %40 = vector.load %arg2[%c64, %c0_18] : memref<456x256xf32, #tpu.memory_space<vmem>>, vector<64x256xf32>
    %cst_19 = arith.constant dense<0.000000e+00> : vector<8x256xf32>
    %41 = tpu.matmul %39, %40, %cst_19 {dimension_numbers = #tpu.dot_dimension_numbers<[1], [0], [0], [1], [0, 0, 1, 1], [], []>} : vector<8x64xf32>, vector<64x256xf32>, vector<8x256xf32> -> vector<8x256xf32>
    %42 = vector.extract_strided_slice %23 {offsets = [0, 256], sizes = [8, 256], strides = [1, 1]} : vector<8x512xf32> to vector<8x256xf32>
    %43 = arith.addf %41, %42 : vector<8x256xf32>
    %44 = vector.broadcast %19 : vector<1x256xf32> to vector<8x256xf32>
    %45 = arith.addf %43, %44 : vector<8x256xf32>
    %46 = arith.mulf %45, %8 : vector<8x256xf32>
    %47 = math.tanh %46 : vector<8x256xf32>
    %48 = arith.mulf %47, %8 : vector<8x256xf32>
    %49 = arith.addf %48, %11 : vector<8x256xf32>
    %50 = vector.extract_strided_slice %49 {offsets = [0, 0], sizes = [8, 64], strides = [1, 1]} : vector<8x256xf32> to vector<8x64xf32>
    %51 = vector.extract_strided_slice %49 {offsets = [0, 64], sizes = [8, 64], strides = [1, 1]} : vector<8x256xf32> to vector<8x64xf32>
    %52 = vector.extract_strided_slice %49 {offsets = [0, 128], sizes = [8, 64], strides = [1, 1]} : vector<8x256xf32> to vector<8x64xf32>
    %53 = vector.extract_strided_slice %49 {offsets = [0, 192], sizes = [8, 64], strides = [1, 1]} : vector<8x256xf32> to vector<8x64xf32>
    %54 = arith.mulf %51, %20 : vector<8x64xf32>
    %55 = arith.mulf %50, %52 : vector<8x64xf32>
    %56 = arith.addf %54, %55 : vector<8x64xf32>
    %57 = math.tanh %56 : vector<8x64xf32>
    %58 = arith.mulf %53, %57 : vector<8x64xf32>
    %59 = tpu.concatenate %39, %58 in 1 : vector<8x64xf32>, vector<8x64xf32> -> vector<8x128xf32>
    %c0_20 = arith.constant 0 : index
    %c0_21 = arith.constant 0 : index
    %60 = vector.load %arg3[%c0_20, %c0_21] : memref<128x512xf32, #tpu.memory_space<vmem>>, vector<128x512xf32>
    %cst_22 = arith.constant dense<0.000000e+00> : vector<8x512xf32>
    %61 = tpu.matmul %59, %60, %cst_22 {dimension_numbers = #tpu.dot_dimension_numbers<[1], [0], [0], [1], [0, 0, 1, 1], [], []>} : vector<8x128xf32>, vector<128x512xf32>, vector<8x512xf32> -> vector<8x512xf32>
    %c8 = arith.constant 8 : index
    %c0_23 = arith.constant 0 : index
    %62 = vector.load %arg5[%c8, %c0_23] : memref<64x256xf32, #tpu.memory_space<vmem>>, vector<8x256xf32>
    %63 = vector.extract_strided_slice %61 {offsets = [0, 0], sizes = [8, 256], strides = [1, 1]} : vector<8x512xf32> to vector<8x256xf32>
    %64 = arith.addf %62, %63 : vector<8x256xf32>
    %65 = arith.mulf %64, %8 : vector<8x256xf32>
    %66 = math.tanh %65 : vector<8x256xf32>
    %67 = arith.mulf %66, %8 : vector<8x256xf32>
    %68 = arith.addf %67, %11 : vector<8x256xf32>
    %69 = vector.extract_strided_slice %68 {offsets = [0, 0], sizes = [8, 64], strides = [1, 1]} : vector<8x256xf32> to vector<8x64xf32>
    %70 = vector.extract_strided_slice %68 {offsets = [0, 64], sizes = [8, 64], strides = [1, 1]} : vector<8x256xf32> to vector<8x64xf32>
    %71 = vector.extract_strided_slice %68 {offsets = [0, 128], sizes = [8, 64], strides = [1, 1]} : vector<8x256xf32> to vector<8x64xf32>
    %72 = vector.extract_strided_slice %68 {offsets = [0, 192], sizes = [8, 64], strides = [1, 1]} : vector<8x256xf32> to vector<8x64xf32>
    %73 = arith.mulf %70, %37 : vector<8x64xf32>
    %74 = arith.mulf %69, %71 : vector<8x64xf32>
    %75 = arith.addf %73, %74 : vector<8x64xf32>
    %76 = math.tanh %75 : vector<8x64xf32>
    %77 = arith.mulf %72, %76 : vector<8x64xf32>
    %c64_24 = arith.constant 64 : index
    %c0_25 = arith.constant 0 : index
    %78 = vector.load %arg2[%c64_24, %c0_25] : memref<456x256xf32, #tpu.memory_space<vmem>>, vector<64x256xf32>
    %cst_26 = arith.constant dense<0.000000e+00> : vector<8x256xf32>
    %79 = tpu.matmul %77, %78, %cst_26 {dimension_numbers = #tpu.dot_dimension_numbers<[1], [0], [0], [1], [0, 0, 1, 1], [], []>} : vector<8x64xf32>, vector<64x256xf32>, vector<8x256xf32> -> vector<8x256xf32>
    %80 = vector.extract_strided_slice %61 {offsets = [0, 256], sizes = [8, 256], strides = [1, 1]} : vector<8x512xf32> to vector<8x256xf32>
    %81 = arith.addf %79, %80 : vector<8x256xf32>
    %82 = vector.broadcast %19 : vector<1x256xf32> to vector<8x256xf32>
    %83 = arith.addf %81, %82 : vector<8x256xf32>
    %84 = arith.mulf %83, %8 : vector<8x256xf32>
    %85 = math.tanh %84 : vector<8x256xf32>
    %86 = arith.mulf %85, %8 : vector<8x256xf32>
    %87 = arith.addf %86, %11 : vector<8x256xf32>
    %88 = vector.extract_strided_slice %87 {offsets = [0, 0], sizes = [8, 64], strides = [1, 1]} : vector<8x256xf32> to vector<8x64xf32>
    %89 = vector.extract_strided_slice %87 {offsets = [0, 64], sizes = [8, 64], strides = [1, 1]} : vector<8x256xf32> to vector<8x64xf32>
    %90 = vector.extract_strided_slice %87 {offsets = [0, 128], sizes = [8, 64], strides = [1, 1]} : vector<8x256xf32> to vector<8x64xf32>
    %91 = vector.extract_strided_slice %87 {offsets = [0, 192], sizes = [8, 64], strides = [1, 1]} : vector<8x256xf32> to vector<8x64xf32>
    %92 = arith.mulf %89, %56 : vector<8x64xf32>
    %93 = arith.mulf %88, %90 : vector<8x64xf32>
    %94 = arith.addf %92, %93 : vector<8x64xf32>
    %95 = math.tanh %94 : vector<8x64xf32>
    %96 = arith.mulf %91, %95 : vector<8x64xf32>
    %97 = tpu.concatenate %77, %96 in 1 : vector<8x64xf32>, vector<8x64xf32> -> vector<8x128xf32>
    %c0_27 = arith.constant 0 : index
    %c0_28 = arith.constant 0 : index
    %98 = vector.load %arg3[%c0_27, %c0_28] : memref<128x512xf32, #tpu.memory_space<vmem>>, vector<128x512xf32>
    %cst_29 = arith.constant dense<0.000000e+00> : vector<8x512xf32>
    %99 = tpu.matmul %97, %98, %cst_29 {dimension_numbers = #tpu.dot_dimension_numbers<[1], [0], [0], [1], [0, 0, 1, 1], [], []>} : vector<8x128xf32>, vector<128x512xf32>, vector<8x512xf32> -> vector<8x512xf32>
    %c16 = arith.constant 16 : index
    %c0_30 = arith.constant 0 : index
    %100 = vector.load %arg5[%c16, %c0_30] : memref<64x256xf32, #tpu.memory_space<vmem>>, vector<8x256xf32>
    %101 = vector.extract_strided_slice %99 {offsets = [0, 0], sizes = [8, 256], strides = [1, 1]} : vector<8x512xf32> to vector<8x256xf32>
    %102 = arith.addf %100, %101 : vector<8x256xf32>
    %103 = arith.mulf %102, %8 : vector<8x256xf32>
    %104 = math.tanh %103 : vector<8x256xf32>
    %105 = arith.mulf %104, %8 : vector<8x256xf32>
    %106 = arith.addf %105, %11 : vector<8x256xf32>
    %107 = vector.extract_strided_slice %106 {offsets = [0, 0], sizes = [8, 64], strides = [1, 1]} : vector<8x256xf32> to vector<8x64xf32>
    %108 = vector.extract_strided_slice %106 {offsets = [0, 64], sizes = [8, 64], strides = [1, 1]} : vector<8x256xf32> to vector<8x64xf32>
    %109 = vector.extract_strided_slice %106 {offsets = [0, 128], sizes = [8, 64], strides = [1, 1]} : vector<8x256xf32> to vector<8x64xf32>
    %110 = vector.extract_strided_slice %106 {offsets = [0, 192], sizes = [8, 64], strides = [1, 1]} : vector<8x256xf32> to vector<8x64xf32>
    %111 = arith.mulf %108, %75 : vector<8x64xf32>
    %112 = arith.mulf %107, %109 : vector<8x64xf32>
    %113 = arith.addf %111, %112 : vector<8x64xf32>
    %114 = math.tanh %113 : vector<8x64xf32>
    %115 = arith.mulf %110, %114 : vector<8x64xf32>
    %c64_31 = arith.constant 64 : index
    %c0_32 = arith.constant 0 : index
    %116 = vector.load %arg2[%c64_31, %c0_32] : memref<456x256xf32, #tpu.memory_space<vmem>>, vector<64x256xf32>
    %cst_33 = arith.constant dense<0.000000e+00> : vector<8x256xf32>
    %117 = tpu.matmul %115, %116, %cst_33 {dimension_numbers = #tpu.dot_dimension_numbers<[1], [0], [0], [1], [0, 0, 1, 1], [], []>} : vector<8x64xf32>, vector<64x256xf32>, vector<8x256xf32> -> vector<8x256xf32>
    %118 = vector.extract_strided_slice %99 {offsets = [0, 256], sizes = [8, 256], strides = [1, 1]} : vector<8x512xf32> to vector<8x256xf32>
    %119 = arith.addf %117, %118 : vector<8x256xf32>
    %120 = vector.broadcast %19 : vector<1x256xf32> to vector<8x256xf32>
    %121 = arith.addf %119, %120 : vector<8x256xf32>
    %122 = arith.mulf %121, %8 : vector<8x256xf32>
    %123 = math.tanh %122 : vector<8x256xf32>
    %124 = arith.mulf %123, %8 : vector<8x256xf32>
    %125 = arith.addf %124, %11 : vector<8x256xf32>
    %126 = vector.extract_strided_slice %125 {offsets = [0, 0], sizes = [8, 64], strides = [1, 1]} : vector<8x256xf32> to vector<8x64xf32>
    %127 = vector.extract_strided_slice %125 {offsets = [0, 64], sizes = [8, 64], strides = [1, 1]} : vector<8x256xf32> to vector<8x64xf32>
    %128 = vector.extract_strided_slice %125 {offsets = [0, 128], sizes = [8, 64], strides = [1, 1]} : vector<8x256xf32> to vector<8x64xf32>
    %129 = vector.extract_strided_slice %125 {offsets = [0, 192], sizes = [8, 64], strides = [1, 1]} : vector<8x256xf32> to vector<8x64xf32>
    %130 = arith.mulf %127, %94 : vector<8x64xf32>
    %131 = arith.mulf %126, %128 : vector<8x64xf32>
    %132 = arith.addf %130, %131 : vector<8x64xf32>
    %133 = math.tanh %132 : vector<8x64xf32>
    %134 = arith.mulf %129, %133 : vector<8x64xf32>
    %135 = tpu.concatenate %115, %134 in 1 : vector<8x64xf32>, vector<8x64xf32> -> vector<8x128xf32>
    %c0_34 = arith.constant 0 : index
    %c0_35 = arith.constant 0 : index
    %136 = vector.load %arg3[%c0_34, %c0_35] : memref<128x512xf32, #tpu.memory_space<vmem>>, vector<128x512xf32>
    %cst_36 = arith.constant dense<0.000000e+00> : vector<8x512xf32>
    %137 = tpu.matmul %135, %136, %cst_36 {dimension_numbers = #tpu.dot_dimension_numbers<[1], [0], [0], [1], [0, 0, 1, 1], [], []>} : vector<8x128xf32>, vector<128x512xf32>, vector<8x512xf32> -> vector<8x512xf32>
    %c24 = arith.constant 24 : index
    %c0_37 = arith.constant 0 : index
    %138 = vector.load %arg5[%c24, %c0_37] : memref<64x256xf32, #tpu.memory_space<vmem>>, vector<8x256xf32>
    %139 = vector.extract_strided_slice %137 {offsets = [0, 0], sizes = [8, 256], strides = [1, 1]} : vector<8x512xf32> to vector<8x256xf32>
    %140 = arith.addf %138, %139 : vector<8x256xf32>
    %141 = arith.mulf %140, %8 : vector<8x256xf32>
    %142 = math.tanh %141 : vector<8x256xf32>
    %143 = arith.mulf %142, %8 : vector<8x256xf32>
    %144 = arith.addf %143, %11 : vector<8x256xf32>
    %145 = vector.extract_strided_slice %144 {offsets = [0, 0], sizes = [8, 64], strides = [1, 1]} : vector<8x256xf32> to vector<8x64xf32>
    %146 = vector.extract_strided_slice %144 {offsets = [0, 64], sizes = [8, 64], strides = [1, 1]} : vector<8x256xf32> to vector<8x64xf32>
    %147 = vector.extract_strided_slice %144 {offsets = [0, 128], sizes = [8, 64], strides = [1, 1]} : vector<8x256xf32> to vector<8x64xf32>
    %148 = vector.extract_strided_slice %144 {offsets = [0, 192], sizes = [8, 64], strides = [1, 1]} : vector<8x256xf32> to vector<8x64xf32>
    %149 = arith.mulf %146, %113 : vector<8x64xf32>
    %150 = arith.mulf %145, %147 : vector<8x64xf32>
    %151 = arith.addf %149, %150 : vector<8x64xf32>
    %152 = math.tanh %151 : vector<8x64xf32>
    %153 = arith.mulf %148, %152 : vector<8x64xf32>
    %c64_38 = arith.constant 64 : index
    %c0_39 = arith.constant 0 : index
    %154 = vector.load %arg2[%c64_38, %c0_39] : memref<456x256xf32, #tpu.memory_space<vmem>>, vector<64x256xf32>
    %cst_40 = arith.constant dense<0.000000e+00> : vector<8x256xf32>
    %155 = tpu.matmul %153, %154, %cst_40 {dimension_numbers = #tpu.dot_dimension_numbers<[1], [0], [0], [1], [0, 0, 1, 1], [], []>} : vector<8x64xf32>, vector<64x256xf32>, vector<8x256xf32> -> vector<8x256xf32>
    %156 = vector.extract_strided_slice %137 {offsets = [0, 256], sizes = [8, 256], strides = [1, 1]} : vector<8x512xf32> to vector<8x256xf32>
    %157 = arith.addf %155, %156 : vector<8x256xf32>
    %158 = vector.broadcast %19 : vector<1x256xf32> to vector<8x256xf32>
    %159 = arith.addf %157, %158 : vector<8x256xf32>
    %160 = arith.mulf %159, %8 : vector<8x256xf32>
    %161 = math.tanh %160 : vector<8x256xf32>
    %162 = arith.mulf %161, %8 : vector<8x256xf32>
    %163 = arith.addf %162, %11 : vector<8x256xf32>
    %164 = vector.extract_strided_slice %163 {offsets = [0, 0], sizes = [8, 64], strides = [1, 1]} : vector<8x256xf32> to vector<8x64xf32>
    %165 = vector.extract_strided_slice %163 {offsets = [0, 64], sizes = [8, 64], strides = [1, 1]} : vector<8x256xf32> to vector<8x64xf32>
    %166 = vector.extract_strided_slice %163 {offsets = [0, 128], sizes = [8, 64], strides = [1, 1]} : vector<8x256xf32> to vector<8x64xf32>
    %167 = vector.extract_strided_slice %163 {offsets = [0, 192], sizes = [8, 64], strides = [1, 1]} : vector<8x256xf32> to vector<8x64xf32>
    %168 = arith.mulf %165, %132 : vector<8x64xf32>
    %169 = arith.mulf %164, %166 : vector<8x64xf32>
    %170 = arith.addf %168, %169 : vector<8x64xf32>
    %171 = math.tanh %170 : vector<8x64xf32>
    %172 = arith.mulf %167, %171 : vector<8x64xf32>
    %173 = tpu.concatenate %153, %172 in 1 : vector<8x64xf32>, vector<8x64xf32> -> vector<8x128xf32>
    %c0_41 = arith.constant 0 : index
    %c0_42 = arith.constant 0 : index
    %174 = vector.load %arg3[%c0_41, %c0_42] : memref<128x512xf32, #tpu.memory_space<vmem>>, vector<128x512xf32>
    %cst_43 = arith.constant dense<0.000000e+00> : vector<8x512xf32>
    %175 = tpu.matmul %173, %174, %cst_43 {dimension_numbers = #tpu.dot_dimension_numbers<[1], [0], [0], [1], [0, 0, 1, 1], [], []>} : vector<8x128xf32>, vector<128x512xf32>, vector<8x512xf32> -> vector<8x512xf32>
    %c32 = arith.constant 32 : index
    %c0_44 = arith.constant 0 : index
    %176 = vector.load %arg5[%c32, %c0_44] : memref<64x256xf32, #tpu.memory_space<vmem>>, vector<8x256xf32>
    %177 = vector.extract_strided_slice %175 {offsets = [0, 0], sizes = [8, 256], strides = [1, 1]} : vector<8x512xf32> to vector<8x256xf32>
    %178 = arith.addf %176, %177 : vector<8x256xf32>
    %179 = arith.mulf %178, %8 : vector<8x256xf32>
    %180 = math.tanh %179 : vector<8x256xf32>
    %181 = arith.mulf %180, %8 : vector<8x256xf32>
    %182 = arith.addf %181, %11 : vector<8x256xf32>
    %183 = vector.extract_strided_slice %182 {offsets = [0, 0], sizes = [8, 64], strides = [1, 1]} : vector<8x256xf32> to vector<8x64xf32>
    %184 = vector.extract_strided_slice %182 {offsets = [0, 64], sizes = [8, 64], strides = [1, 1]} : vector<8x256xf32> to vector<8x64xf32>
    %185 = vector.extract_strided_slice %182 {offsets = [0, 128], sizes = [8, 64], strides = [1, 1]} : vector<8x256xf32> to vector<8x64xf32>
    %186 = vector.extract_strided_slice %182 {offsets = [0, 192], sizes = [8, 64], strides = [1, 1]} : vector<8x256xf32> to vector<8x64xf32>
    %187 = arith.mulf %184, %151 : vector<8x64xf32>
    %188 = arith.mulf %183, %185 : vector<8x64xf32>
    %189 = arith.addf %187, %188 : vector<8x64xf32>
    %190 = math.tanh %189 : vector<8x64xf32>
    %191 = arith.mulf %186, %190 : vector<8x64xf32>
    %c64_45 = arith.constant 64 : index
    %c0_46 = arith.constant 0 : index
    %192 = vector.load %arg2[%c64_45, %c0_46] : memref<456x256xf32, #tpu.memory_space<vmem>>, vector<64x256xf32>
    %cst_47 = arith.constant dense<0.000000e+00> : vector<8x256xf32>
    %193 = tpu.matmul %191, %192, %cst_47 {dimension_numbers = #tpu.dot_dimension_numbers<[1], [0], [0], [1], [0, 0, 1, 1], [], []>} : vector<8x64xf32>, vector<64x256xf32>, vector<8x256xf32> -> vector<8x256xf32>
    %194 = vector.extract_strided_slice %175 {offsets = [0, 256], sizes = [8, 256], strides = [1, 1]} : vector<8x512xf32> to vector<8x256xf32>
    %195 = arith.addf %193, %194 : vector<8x256xf32>
    %196 = vector.broadcast %19 : vector<1x256xf32> to vector<8x256xf32>
    %197 = arith.addf %195, %196 : vector<8x256xf32>
    %198 = arith.mulf %197, %8 : vector<8x256xf32>
    %199 = math.tanh %198 : vector<8x256xf32>
    %200 = arith.mulf %199, %8 : vector<8x256xf32>
    %201 = arith.addf %200, %11 : vector<8x256xf32>
    %202 = vector.extract_strided_slice %201 {offsets = [0, 0], sizes = [8, 64], strides = [1, 1]} : vector<8x256xf32> to vector<8x64xf32>
    %203 = vector.extract_strided_slice %201 {offsets = [0, 64], sizes = [8, 64], strides = [1, 1]} : vector<8x256xf32> to vector<8x64xf32>
    %204 = vector.extract_strided_slice %201 {offsets = [0, 128], sizes = [8, 64], strides = [1, 1]} : vector<8x256xf32> to vector<8x64xf32>
    %205 = vector.extract_strided_slice %201 {offsets = [0, 192], sizes = [8, 64], strides = [1, 1]} : vector<8x256xf32> to vector<8x64xf32>
    %206 = arith.mulf %203, %170 : vector<8x64xf32>
    %207 = arith.mulf %202, %204 : vector<8x64xf32>
    %208 = arith.addf %206, %207 : vector<8x64xf32>
    %209 = math.tanh %208 : vector<8x64xf32>
    %210 = arith.mulf %205, %209 : vector<8x64xf32>
    %211 = tpu.concatenate %191, %210 in 1 : vector<8x64xf32>, vector<8x64xf32> -> vector<8x128xf32>
    %c0_48 = arith.constant 0 : index
    %c0_49 = arith.constant 0 : index
    %212 = vector.load %arg3[%c0_48, %c0_49] : memref<128x512xf32, #tpu.memory_space<vmem>>, vector<128x512xf32>
    %cst_50 = arith.constant dense<0.000000e+00> : vector<8x512xf32>
    %213 = tpu.matmul %211, %212, %cst_50 {dimension_numbers = #tpu.dot_dimension_numbers<[1], [0], [0], [1], [0, 0, 1, 1], [], []>} : vector<8x128xf32>, vector<128x512xf32>, vector<8x512xf32> -> vector<8x512xf32>
    %c40 = arith.constant 40 : index
    %c0_51 = arith.constant 0 : index
    %214 = vector.load %arg5[%c40, %c0_51] : memref<64x256xf32, #tpu.memory_space<vmem>>, vector<8x256xf32>
    %215 = vector.extract_strided_slice %213 {offsets = [0, 0], sizes = [8, 256], strides = [1, 1]} : vector<8x512xf32> to vector<8x256xf32>
    %216 = arith.addf %214, %215 : vector<8x256xf32>
    %217 = arith.mulf %216, %8 : vector<8x256xf32>
    %218 = math.tanh %217 : vector<8x256xf32>
    %219 = arith.mulf %218, %8 : vector<8x256xf32>
    %220 = arith.addf %219, %11 : vector<8x256xf32>
    %221 = vector.extract_strided_slice %220 {offsets = [0, 0], sizes = [8, 64], strides = [1, 1]} : vector<8x256xf32> to vector<8x64xf32>
    %222 = vector.extract_strided_slice %220 {offsets = [0, 64], sizes = [8, 64], strides = [1, 1]} : vector<8x256xf32> to vector<8x64xf32>
    %223 = vector.extract_strided_slice %220 {offsets = [0, 128], sizes = [8, 64], strides = [1, 1]} : vector<8x256xf32> to vector<8x64xf32>
    %224 = vector.extract_strided_slice %220 {offsets = [0, 192], sizes = [8, 64], strides = [1, 1]} : vector<8x256xf32> to vector<8x64xf32>
    %225 = arith.mulf %222, %189 : vector<8x64xf32>
    %226 = arith.mulf %221, %223 : vector<8x64xf32>
    %227 = arith.addf %225, %226 : vector<8x64xf32>
    %228 = math.tanh %227 : vector<8x64xf32>
    %229 = arith.mulf %224, %228 : vector<8x64xf32>
    %c64_52 = arith.constant 64 : index
    %c0_53 = arith.constant 0 : index
    %230 = vector.load %arg2[%c64_52, %c0_53] : memref<456x256xf32, #tpu.memory_space<vmem>>, vector<64x256xf32>
    %cst_54 = arith.constant dense<0.000000e+00> : vector<8x256xf32>
    %231 = tpu.matmul %229, %230, %cst_54 {dimension_numbers = #tpu.dot_dimension_numbers<[1], [0], [0], [1], [0, 0, 1, 1], [], []>} : vector<8x64xf32>, vector<64x256xf32>, vector<8x256xf32> -> vector<8x256xf32>
    %232 = vector.extract_strided_slice %213 {offsets = [0, 256], sizes = [8, 256], strides = [1, 1]} : vector<8x512xf32> to vector<8x256xf32>
    %233 = arith.addf %231, %232 : vector<8x256xf32>
    %234 = vector.broadcast %19 : vector<1x256xf32> to vector<8x256xf32>
    %235 = arith.addf %233, %234 : vector<8x256xf32>
    %236 = arith.mulf %235, %8 : vector<8x256xf32>
    %237 = math.tanh %236 : vector<8x256xf32>
    %238 = arith.mulf %237, %8 : vector<8x256xf32>
    %239 = arith.addf %238, %11 : vector<8x256xf32>
    %240 = vector.extract_strided_slice %239 {offsets = [0, 0], sizes = [8, 64], strides = [1, 1]} : vector<8x256xf32> to vector<8x64xf32>
    %241 = vector.extract_strided_slice %239 {offsets = [0, 64], sizes = [8, 64], strides = [1, 1]} : vector<8x256xf32> to vector<8x64xf32>
    %242 = vector.extract_strided_slice %239 {offsets = [0, 128], sizes = [8, 64], strides = [1, 1]} : vector<8x256xf32> to vector<8x64xf32>
    %243 = vector.extract_strided_slice %239 {offsets = [0, 192], sizes = [8, 64], strides = [1, 1]} : vector<8x256xf32> to vector<8x64xf32>
    %244 = arith.mulf %241, %208 : vector<8x64xf32>
    %245 = arith.mulf %240, %242 : vector<8x64xf32>
    %246 = arith.addf %244, %245 : vector<8x64xf32>
    %247 = math.tanh %246 : vector<8x64xf32>
    %248 = arith.mulf %243, %247 : vector<8x64xf32>
    %249 = tpu.concatenate %229, %248 in 1 : vector<8x64xf32>, vector<8x64xf32> -> vector<8x128xf32>
    %c0_55 = arith.constant 0 : index
    %c0_56 = arith.constant 0 : index
    %250 = vector.load %arg3[%c0_55, %c0_56] : memref<128x512xf32, #tpu.memory_space<vmem>>, vector<128x512xf32>
    %cst_57 = arith.constant dense<0.000000e+00> : vector<8x512xf32>
    %251 = tpu.matmul %249, %250, %cst_57 {dimension_numbers = #tpu.dot_dimension_numbers<[1], [0], [0], [1], [0, 0, 1, 1], [], []>} : vector<8x128xf32>, vector<128x512xf32>, vector<8x512xf32> -> vector<8x512xf32>
    %c48 = arith.constant 48 : index
    %c0_58 = arith.constant 0 : index
    %252 = vector.load %arg5[%c48, %c0_58] : memref<64x256xf32, #tpu.memory_space<vmem>>, vector<8x256xf32>
    %253 = vector.extract_strided_slice %251 {offsets = [0, 0], sizes = [8, 256], strides = [1, 1]} : vector<8x512xf32> to vector<8x256xf32>
    %254 = arith.addf %252, %253 : vector<8x256xf32>
    %255 = arith.mulf %254, %8 : vector<8x256xf32>
    %256 = math.tanh %255 : vector<8x256xf32>
    %257 = arith.mulf %256, %8 : vector<8x256xf32>
    %258 = arith.addf %257, %11 : vector<8x256xf32>
    %259 = vector.extract_strided_slice %258 {offsets = [0, 0], sizes = [8, 64], strides = [1, 1]} : vector<8x256xf32> to vector<8x64xf32>
    %260 = vector.extract_strided_slice %258 {offsets = [0, 64], sizes = [8, 64], strides = [1, 1]} : vector<8x256xf32> to vector<8x64xf32>
    %261 = vector.extract_strided_slice %258 {offsets = [0, 128], sizes = [8, 64], strides = [1, 1]} : vector<8x256xf32> to vector<8x64xf32>
    %262 = vector.extract_strided_slice %258 {offsets = [0, 192], sizes = [8, 64], strides = [1, 1]} : vector<8x256xf32> to vector<8x64xf32>
    %263 = arith.mulf %260, %227 : vector<8x64xf32>
    %264 = arith.mulf %259, %261 : vector<8x64xf32>
    %265 = arith.addf %263, %264 : vector<8x64xf32>
    %266 = math.tanh %265 : vector<8x64xf32>
    %267 = arith.mulf %262, %266 : vector<8x64xf32>
    %c64_59 = arith.constant 64 : index
    %c0_60 = arith.constant 0 : index
    %268 = vector.load %arg2[%c64_59, %c0_60] : memref<456x256xf32, #tpu.memory_space<vmem>>, vector<64x256xf32>
    %cst_61 = arith.constant dense<0.000000e+00> : vector<8x256xf32>
    %269 = tpu.matmul %267, %268, %cst_61 {dimension_numbers = #tpu.dot_dimension_numbers<[1], [0], [0], [1], [0, 0, 1, 1], [], []>} : vector<8x64xf32>, vector<64x256xf32>, vector<8x256xf32> -> vector<8x256xf32>
    %270 = vector.extract_strided_slice %251 {offsets = [0, 256], sizes = [8, 256], strides = [1, 1]} : vector<8x512xf32> to vector<8x256xf32>
    %271 = arith.addf %269, %270 : vector<8x256xf32>
    %272 = vector.broadcast %19 : vector<1x256xf32> to vector<8x256xf32>
    %273 = arith.addf %271, %272 : vector<8x256xf32>
    %274 = arith.mulf %273, %8 : vector<8x256xf32>
    %275 = math.tanh %274 : vector<8x256xf32>
    %276 = arith.mulf %275, %8 : vector<8x256xf32>
    %277 = arith.addf %276, %11 : vector<8x256xf32>
    %278 = vector.extract_strided_slice %277 {offsets = [0, 0], sizes = [8, 64], strides = [1, 1]} : vector<8x256xf32> to vector<8x64xf32>
    %279 = vector.extract_strided_slice %277 {offsets = [0, 64], sizes = [8, 64], strides = [1, 1]} : vector<8x256xf32> to vector<8x64xf32>
    %280 = vector.extract_strided_slice %277 {offsets = [0, 128], sizes = [8, 64], strides = [1, 1]} : vector<8x256xf32> to vector<8x64xf32>
    %281 = vector.extract_strided_slice %277 {offsets = [0, 192], sizes = [8, 64], strides = [1, 1]} : vector<8x256xf32> to vector<8x64xf32>
    %282 = arith.mulf %279, %246 : vector<8x64xf32>
    %283 = arith.mulf %278, %280 : vector<8x64xf32>
    %284 = arith.addf %282, %283 : vector<8x64xf32>
    %285 = math.tanh %284 : vector<8x64xf32>
    %286 = arith.mulf %281, %285 : vector<8x64xf32>
    %287 = tpu.concatenate %267, %286 in 1 : vector<8x64xf32>, vector<8x64xf32> -> vector<8x128xf32>
    %c0_62 = arith.constant 0 : index
    %c0_63 = arith.constant 0 : index
    %288 = vector.load %arg3[%c0_62, %c0_63] : memref<128x512xf32, #tpu.memory_space<vmem>>, vector<128x512xf32>
    %cst_64 = arith.constant dense<0.000000e+00> : vector<8x512xf32>
    %289 = tpu.matmul %287, %288, %cst_64 {dimension_numbers = #tpu.dot_dimension_numbers<[1], [0], [0], [1], [0, 0, 1, 1], [], []>} : vector<8x128xf32>, vector<128x512xf32>, vector<8x512xf32> -> vector<8x512xf32>
    %c56 = arith.constant 56 : index
    %c0_65 = arith.constant 0 : index
    %290 = vector.load %arg5[%c56, %c0_65] : memref<64x256xf32, #tpu.memory_space<vmem>>, vector<8x256xf32>
    %291 = vector.extract_strided_slice %289 {offsets = [0, 0], sizes = [8, 256], strides = [1, 1]} : vector<8x512xf32> to vector<8x256xf32>
    %292 = arith.addf %290, %291 : vector<8x256xf32>
    %293 = arith.mulf %292, %8 : vector<8x256xf32>
    %294 = math.tanh %293 : vector<8x256xf32>
    %295 = arith.mulf %294, %8 : vector<8x256xf32>
    %296 = arith.addf %295, %11 : vector<8x256xf32>
    %297 = vector.extract_strided_slice %296 {offsets = [0, 0], sizes = [8, 64], strides = [1, 1]} : vector<8x256xf32> to vector<8x64xf32>
    %298 = vector.extract_strided_slice %296 {offsets = [0, 64], sizes = [8, 64], strides = [1, 1]} : vector<8x256xf32> to vector<8x64xf32>
    %299 = vector.extract_strided_slice %296 {offsets = [0, 128], sizes = [8, 64], strides = [1, 1]} : vector<8x256xf32> to vector<8x64xf32>
    %300 = vector.extract_strided_slice %296 {offsets = [0, 192], sizes = [8, 64], strides = [1, 1]} : vector<8x256xf32> to vector<8x64xf32>
    %301 = arith.mulf %298, %265 : vector<8x64xf32>
    %302 = arith.mulf %297, %299 : vector<8x64xf32>
    %303 = arith.addf %301, %302 : vector<8x64xf32>
    %304 = math.tanh %303 : vector<8x64xf32>
    %305 = arith.mulf %300, %304 : vector<8x64xf32>
    %c64_66 = arith.constant 64 : index
    %c0_67 = arith.constant 0 : index
    %306 = vector.load %arg2[%c64_66, %c0_67] : memref<456x256xf32, #tpu.memory_space<vmem>>, vector<64x256xf32>
    %cst_68 = arith.constant dense<0.000000e+00> : vector<8x256xf32>
    %307 = tpu.matmul %305, %306, %cst_68 {dimension_numbers = #tpu.dot_dimension_numbers<[1], [0], [0], [1], [0, 0, 1, 1], [], []>} : vector<8x64xf32>, vector<64x256xf32>, vector<8x256xf32> -> vector<8x256xf32>
    %308 = vector.extract_strided_slice %289 {offsets = [0, 256], sizes = [8, 256], strides = [1, 1]} : vector<8x512xf32> to vector<8x256xf32>
    %309 = arith.addf %307, %308 : vector<8x256xf32>
    %310 = vector.broadcast %19 : vector<1x256xf32> to vector<8x256xf32>
    %311 = arith.addf %309, %310 : vector<8x256xf32>
    %312 = arith.mulf %311, %8 : vector<8x256xf32>
    %313 = math.tanh %312 : vector<8x256xf32>
    %314 = arith.mulf %313, %8 : vector<8x256xf32>
    %315 = arith.addf %314, %11 : vector<8x256xf32>
    %316 = vector.extract_strided_slice %315 {offsets = [0, 0], sizes = [8, 64], strides = [1, 1]} : vector<8x256xf32> to vector<8x64xf32>
    %317 = vector.extract_strided_slice %315 {offsets = [0, 64], sizes = [8, 64], strides = [1, 1]} : vector<8x256xf32> to vector<8x64xf32>
    %318 = vector.extract_strided_slice %315 {offsets = [0, 128], sizes = [8, 64], strides = [1, 1]} : vector<8x256xf32> to vector<8x64xf32>
    %319 = vector.extract_strided_slice %315 {offsets = [0, 192], sizes = [8, 64], strides = [1, 1]} : vector<8x256xf32> to vector<8x64xf32>
    %320 = arith.mulf %317, %284 : vector<8x64xf32>
    %321 = arith.mulf %316, %318 : vector<8x64xf32>
    %322 = arith.addf %320, %321 : vector<8x64xf32>
    %323 = math.tanh %322 : vector<8x64xf32>
    %324 = arith.mulf %319, %323 : vector<8x64xf32>
    %325 = tpu.iota {dimensions = array<i32: 1>} : vector<8x64xi32>
    %c32_i32 = arith.constant 32 : i32
    %326 = vector.broadcast %c32_i32 : i32 to vector<8x64xi32>
    %327 = arith.cmpi slt, %325, %326 : vector<8x64xi32>
    %328 = arith.select %327, %324, %248 : vector<8x64xi1>, vector<8x64xf32>
    %cst_69 = arith.constant 0.000000e+00 : f32
    %329 = vector.broadcast %cst_69 : f32 to vector<8x64xf32>
    %330 = arith.maximumf %328, %329 : vector<8x64xf32>
    %c128 = arith.constant 128 : index
    %c0_70 = arith.constant 0 : index
    %331 = vector.load %arg2[%c128, %c0_70] : memref<456x256xf32, #tpu.memory_space<vmem>>, vector<64x256xf32>
    %cst_71 = arith.constant dense<0.000000e+00> : vector<8x256xf32>
    %332 = tpu.matmul %330, %331, %cst_71 {dimension_numbers = #tpu.dot_dimension_numbers<[1], [0], [0], [1], [0, 0, 1, 1], [], []>} : vector<8x64xf32>, vector<64x256xf32>, vector<8x256xf32> -> vector<8x256xf32>
    %c450 = arith.constant 450 : index
    %c0_72 = arith.constant 0 : index
    %333 = vector.load %arg2[%c450, %c0_72] : memref<456x256xf32, #tpu.memory_space<vmem>>, vector<1x256xf32>
    %334 = vector.broadcast %333 : vector<1x256xf32> to vector<8x256xf32>
    %335 = arith.addf %332, %334 : vector<8x256xf32>
    %c128_i32_73 = arith.constant 128 : i32
    %336 = vector.broadcast %c128_i32_73 : i32 to vector<8x256xi32>
    %337 = arith.cmpi sge, %0, %336 : vector<8x256xi32>
    %cst_74 = arith.constant 0.000000e+00 : f32
    %338 = vector.broadcast %cst_74 : f32 to vector<8x256xf32>
    %339 = arith.maximumf %335, %338 : vector<8x256xf32>
    %340 = arith.select %337, %339, %335 : vector<8x256xi1>, vector<8x256xf32>
    %c192 = arith.constant 192 : index
    %c0_75 = arith.constant 0 : index
    %341 = vector.load %arg2[%c192, %c0_75] : memref<456x256xf32, #tpu.memory_space<vmem>>, vector<256x256xf32>
    %cst_76 = arith.constant dense<0.000000e+00> : vector<8x256xf32>
    %342 = tpu.matmul %340, %341, %cst_76 {dimension_numbers = #tpu.dot_dimension_numbers<[1], [0], [0], [1], [0, 0, 1, 1], [], []>} : vector<8x256xf32>, vector<256x256xf32>, vector<8x256xf32> -> vector<8x256xf32>
    %c451 = arith.constant 451 : index
    %c0_77 = arith.constant 0 : index
    %343 = vector.load %arg2[%c451, %c0_77] : memref<456x256xf32, #tpu.memory_space<vmem>>, vector<1x256xf32>
    %344 = vector.broadcast %343 : vector<1x256xf32> to vector<8x256xf32>
    %345 = arith.addf %342, %344 : vector<8x256xf32>
    %c128_i32_78 = arith.constant 128 : i32
    %346 = vector.broadcast %c128_i32_78 : i32 to vector<8x256xi32>
    %347 = arith.cmpi slt, %0, %346 : vector<8x256xi32>
    %cst_79 = arith.constant 0.000000e+00 : f32
    %348 = vector.broadcast %cst_79 : f32 to vector<8x256xf32>
    %349 = arith.maximumf %345, %348 : vector<8x256xf32>
    %350 = arith.select %347, %349, %345 : vector<8x256xi1>, vector<8x256xf32>
    %c0_80 = arith.constant 0 : index
    %c0_81 = arith.constant 0 : index
    %351 = vector.load %arg4[%c0_80, %c0_81] : memref<8x256xf32, #tpu.memory_space<vmem>>, vector<8x256xf32>
    tpu.vector_store %arg4[%c0_80, %c0_81], %350 {strides = array<i32>} : memref<8x256xf32, #tpu.memory_space<vmem>>, vector<8x256xf32>,
    return
  }
  func.func @transform_0(%arg0: i32) -> (i32, i32) {
    %c0_i32 = arith.constant 0 : i32
    %c0_i32_0 = arith.constant 0 : i32
    %c0_i32_1 = arith.constant 0 : i32
    return %c0_i32, %c0_i32_0 : i32, i32
  }
  func.func @transform_1(%arg0: i32) -> (i32, i32) {
    %c0_i32 = arith.constant 0 : i32
    %c0_i32_0 = arith.constant 0 : i32
    %c0_i32_1 = arith.constant 0 : i32
    return %c0_i32, %c0_i32_0 : i32, i32
  }
  func.func @transform_2(%arg0: i32) -> (i32, i32) {
    %c0_i32 = arith.constant 0 : i32
    %c0_i32_0 = arith.constant 0 : i32
    %c0_i32_1 = arith.constant 0 : i32
    return %c0_i32, %c0_i32_0 : i32, i32
  }
  func.func @transform_3(%arg0: i32) -> (i32, i32) {
    %c0_i32 = arith.constant 0 : i32
    %c0_i32_0 = arith.constant 0 : i32
    %c0_i32_1 = arith.constant 0 : i32
    return %c0_i32, %c0_i32_0 : i32, i32
  }
}

</mosaic_0001>

<llo_original>
// kernel: netz_forward.1
$region0: #{netz_forward.1}
  #allocation0 [shape = 'u32[]', space=smem, size = 0x4, offset = 0x4, fixed_abs, tag = 'smem constant byte address 0x4 - core index']
  #allocation1 [shape = 'u32[144,128]{1,0:T(1,128)}', space=vmem, size = 0x12000, scoped, tag = 'internal scratch']
  #allocation2 [shape = 'f32[64,256]{1,0:T(8,128)}', space=vmem, size = 0x10000, scoped, tag = 'scratch operand']
  %s0 = inlined_call_operand.vmem [shape: f32[64,64], index: 0, kind: input, shape index: {}]
  %s1 = inlined_call_operand.vmem [shape: f32[456,256], index: 1, kind: input, shape index: {}]
  %s2 = inlined_call_operand.hbm [shape: f32[128,512], index: 2, kind: input, shape index: {}]
  %s3 = inlined_call_operand.vmem [shape: f32[8,256], index: 3, kind: output, shape index: {}]
  %s4 = sld [smem:[#allocation0]]
  $region26: #{netz_forward.1} parent=0
    _
  %s6 = ssub.s32 1, %s4
  %s7 = scalar_select 0, %s6, %s4
  $region1: #{netz_forward.1} parent=0
    #allocation3 [shape = 'u8[262144]{0}', space=vmem, size = 0x40000, scoped, tag = 'input window, operand 2, single buffered']
    #allocation4 [shape = 's32[1]{0}', space=sflag, size = 0x4, scoped, tag = 'scoped memory for netz_forward.1']
    %8 = vsyncpa [#allocation4], 0
    // Predicated region
    $region2: #{netz_forward.1} parent=1 // pred_check
      _
    $region3: #{netz_forward.1} parent=1 // pred_check_branch
      %10 = sbr.rel (0) target = $region5
    $region4: #{netz_forward.1} parent=1 // pred_region
      _
    $region5: #{netz_forward.1} parent=1 // pred_fallthru
      _
    // Predicated region
    $region6: #{netz_forward.1} parent=1 // pred_check
      _
    $region7: #{netz_forward.1} parent=1 // pred_check_branch
      %12 = sbr.rel (0) target = $region9
    $region8: #{netz_forward.1} parent=1 // pred_region
      _
    $region9: #{netz_forward.1} parent=1 // pred_fallthru
      _
    // Predicated region
    $region10: #{netz_forward.1} parent=1 // pred_check
      _
    $region11: #{netz_forward.1} parent=1 // pred_check_branch
      %14 = sbr.rel (0) target = $region13
    $region12: #{netz_forward.1} parent=1 // pred_region
      %s16 = ssub.s32 8192, 8192
      %17 = vsyncadd [#allocation4], %s16
      %s18 = sshll.u32 [#allocation3], 4
      %s19 = int_to_ptr.vmem [resolvable:$true] %s18
      %24 = dma.hbm_to_vmem [thread:$0]  %s2, 8192, %s19, [#allocation4], 512, 512, 32
    $region13: #{netz_forward.1} parent=1 // pred_fallthru
      _
    // Predicated region
    $region14: #{netz_forward.1} parent=1 // pred_check
      _
    $region15: #{netz_forward.1} parent=1 // pred_check_branch
      %26 = sbr.rel (0) target = $region17
    $region16: #{netz_forward.1} parent=1 // pred_region
      %27 = dma.done [#allocation4], 8192
    $region17: #{netz_forward.1} parent=1 // pred_fallthru
      _
    %v28 = vlaneseq
    %v29 = vand.u32 %v28, 127
    %v30 = vadd.s32 %v29, 128
    %vm31 = vcmp.ge.s32.totalorder %v29, 128
    %vm32 = vcmp.ge.s32.totalorder %v30, 128
    %vm33 = vcmp.lt.s32.totalorder %v29, 192
    %vm34 = vcmp.lt.s32.totalorder %v30, 192
    %vm35 = vmand %vm31, %vm33
    %vm36 = vmand %vm32, %vm34
    %v37 = vsel %vm35, 1.0, 0.5
    %v38 = vsel %vm36, 1.0, 0.5
    %v39 = vsel %vm35, 0.0, 0.5
    %v40 = vsel %vm36, 0.0, 0.5
    %v41 = vld [vmem:[%s0] sm:$0xff]
    %v42 = vld [vmem:[%s0 + $0x8] sm:$0xff]
    %v43 = vld [vmem:[%s0 + $0x10] sm:$0xff]
    %v44 = vld [vmem:[%s0 + $0x18] sm:$0xff]
    %v45 = vld [vmem:[%s0 + $0x20] sm:$0xff]
    %v46 = vld [vmem:[%s0 + $0x28] sm:$0xff]
    %v47 = vld [vmem:[%s0 + $0x30] sm:$0xff]
    %v48 = vld [vmem:[%s0 + $0x38] sm:$0xff]
    %v49 = vld [vmem:[%s1] sm:$0xff]
    %v50 = vld [vmem:[%s1 + $0x8] sm:$0xff]
    %v51 = vld [vmem:[%s1 + $0x10] sm:$0xff]
    %v52 = vld [vmem:[%s1 + $0x18] sm:$0xff]
    %v53 = vld [vmem:[%s1 + $0x20] sm:$0xff]
    %v54 = vld [vmem:[%s1 + $0x28] sm:$0xff]
    %v55 = vld [vmem:[%s1 + $0x30] sm:$0xff]
    %v56 = vld [vmem:[%s1 + $0x38] sm:$0xff]
    %v57 = vld [vmem:[%s1 + $0x40] sm:$0xff]
    %v58 = vld [vmem:[%s1 + $0x48] sm:$0xff]
    %v59 = vld [vmem:[%s1 + $0x50] sm:$0xff]
    %v60 = vld [vmem:[%s1 + $0x58] sm:$0xff]
    %v61 = vld [vmem:[%s1 + $0x60] sm:$0xff]
    %v62 = vld [vmem:[%s1 + $0x68] sm:$0xff]
    %v63 = vld [vmem:[%s1 + $0x70] sm:$0xff]
    %v64 = vld [vmem:[%s1 + $0x78] sm:$0xff]
    %s65 = scalar_lea.vmem %s1, 896
    %v66 = vld [vmem:[%s65] ss:$8 sm:$0x3]
    %v68 = vlaneseq
    %v69 = vshrl.u32 %v68, 7
    %v70 = vsub.s32 0, %v69
    %v71 = vrot.slane %v66, %v70
    %v72 = vlaneseq
    %v73 = vshrl.u32 %v72, 7
    %v74 = vsub.s32 1, %v73
    %v75 = vrot.slane %v66, %v74
    %vm78 = vcmask 523264
    %v80 = vsel %vm78, %v41, 0
    %v83 = vsel %vm78, %v42, 0
    %v86 = vsel %vm78, %v43, 0
    %v89 = vsel %vm78, %v44, 0
    %v92 = vsel %vm78, %v45, 0
    %v95 = vsel %vm78, %v46, 0
    %v98 = vsel %vm78, %v47, 0
    %v101 = vsel %vm78, %v48, 0
    %103 = vmatprep.subr.mxu0 0.0
    %104 = vmatpush1.msra.mxu0 0.0
    %105 = vmatprep.subr.mxu0 0.0
    %106 = vmatpush1.msra.mxu0 0.0
    %107 = vmatprep.subr.mxu0 0.0
    %108 = vmatpush1.msra.mxu0 0.0
    %109 = vmatprep.subr.mxu0 0.0
    %110 = vmatpush1.msra.mxu0 0.0
    %111 = vmatprep.subr.mxu0 0.0
    %112 = vmatpush1.msra.mxu0 0.0
    %113 = vmatprep.subr.mxu0 0.0
    %114 = vmatpush1.msra.mxu0 0.0
    %115 = vmatprep.subr.mxu0 0.0
    %116 = vmatpush1.msra.mxu0 0.0
    %117 = vmatprep.subr.mxu0 0.0
    %118 = vmatpush1.msra.mxu0 0.0
    %119 = vmatprep.subr.mxu0 %v64
    %120 = vmatpush1.msra.mxu0 %v63
    %121 = vmatprep.subr.mxu0 %v62
    %122 = vmatpush1.msra.mxu0 %v61
    %123 = vmatprep.subr.mxu0 %v60
    %124 = vmatpush1.msra.mxu0 %v59
    %125 = vmatprep.subr.mxu0 %v58
    %126 = vmatpush1.msra.mxu0 %v57
    %127 = vmatprep.subr.mxu0 %v56
    %128 = vmatpush1.msra.mxu0 %v55
    %129 = vmatprep.subr.mxu0 %v54
    %130 = vmatpush1.msra.mxu0 %v53
    %131 = vmatprep.subr.mxu0 %v52
    %132 = vmatpush1.msra.mxu0 %v51
    %133 = vmatprep.subr.mxu0 %v50
    %134 = vmatpush1.msra.mxu0 %v49
    %135 = vmatprep.subr.mxu0 0.0
    %136 = vmatpush2.msra.mxu0 0.0
    %137 = vmatprep.subr.mxu0 0.0
    %138 = vmatpush2.msra.mxu0 0.0
    %139 = vmatprep.subr.mxu0 0.0
    %140 = vmatpush2.msra.mxu0 0.0
    %141 = vmatprep.subr.mxu0 0.0
    %142 = vmatpush2.msra.mxu0 0.0
    %143 = vmatprep.subr.mxu0 0.0
    %144 = vmatpush2.msra.mxu0 0.0
    %145 = vmatprep.subr.mxu0 0.0
    %146 = vmatpush2.msra.mxu0 0.0
    %147 = vmatprep.subr.mxu0 0.0
    %148 = vmatpush2.msra.mxu0 0.0
    %149 = vmatprep.subr.mxu0 0.0
    %150 = vmatpush2.msra.mxu0 0.0
    %151 = vmatprep.subr.mxu0 0.0
    %152 = vmatpush2.msra.mxu0 0.0
    %153 = vmatprep.subr.mxu0 0.0
    %154 = vmatpush2.msra.mxu0 0.0
    %155 = vmatprep.subr.mxu0 0.0
    %156 = vmatpush2.msra.mxu0 0.0
    %157 = vmatprep.subr.mxu0 0.0
    %158 = vmatpush2.msra.mxu0 0.0
    %159 = vmatprep.subr.mxu0 0.0
    %160 = vmatpush2.msra.mxu0 0.0
    %161 = vmatprep.subr.mxu0 0.0
    %162 = vmatpush2.msra.mxu0 0.0
    %163 = vmatprep.subr.mxu0 0.0
    %164 = vmatpush2.msra.mxu0 0.0
    %165 = vmatprep.subr.mxu0 0.0
    %166 = vmatpush2.msra.mxu0 0.0
    %167 = vmatprep.mubr.f32.mxu0 0.0
    %168 = vmatmul.mubr.f32.gmra.mxu0 %v80
    %v169 = vpop.f32.mrf.mxu0
    %v170 = vadd.f32 %v71, %v169
    %v171 = vpop.f32.mrf.mxu0
    %v172 = vadd.f32 %v75, %v171
    %173 = vmatprep.mubr.f32.mxu0 0.0
    %174 = vmatmul.mubr.f32.gmra.mxu0 %v83
    %v175 = vpop.f32.mrf.mxu0
    %v176 = vadd.f32 %v71, %v175
    %v177 = vpop.f32.mrf.mxu0
    %v178 = vadd.f32 %v75, %v177
    %179 = vmatprep.mubr.f32.mxu0 0.0
    %180 = vmatmul.mubr.f32.gmra.mxu0 %v86
    %v181 = vpop.f32.mrf.mxu0
    %v182 = vadd.f32 %v71, %v181
    %v183 = vpop.f32.mrf.mxu0
    %v184 = vadd.f32 %v75, %v183
    %185 = vmatprep.mubr.f32.mxu0 0.0
    %186 = vmatmul.mubr.f32.gmra.mxu0 %v89
    %v187 = vpop.f32.mrf.mxu0
    %v188 = vadd.f32 %v71, %v187
    %v189 = vpop.f32.mrf.mxu0
    %v190 = vadd.f32 %v75, %v189
    %191 = vmatprep.mubr.f32.mxu0 0.0
    %192 = vmatmul.mubr.f32.gmra.mxu0 %v92
    %v193 = vpop.f32.mrf.mxu0
    %v194 = vadd.f32 %v71, %v193
    %v195 = vpop.f32.mrf.mxu0
    %v196 = vadd.f32 %v75, %v195
    %197 = vmatprep.mubr.f32.mxu0 0.0
    %198 = vmatmul.mubr.f32.gmra.mxu0 %v95
    %v199 = vpop.f32.mrf.mxu0
    %v200 = vadd.f32 %v71, %v199
    %v201 = vpop.f32.mrf.mxu0
    %v202 = vadd.f32 %v75, %v201
    %203 = vmatprep.mubr.f32.mxu0 0.0
    %204 = vmatmul.mubr.f32.gmra.mxu0 %v98
    %v205 = vpop.f32.mrf.mxu0
    %v206 = vadd.f32 %v71, %v205
    %v207 = vpop.f32.mrf.mxu0
    %v208 = vadd.f32 %v75, %v207
    %209 = vmatprep.mubr.f32.mxu0 0.0
    %210 = vmatmul.mubr.f32.gmra.mxu0 %v101
    %v211 = vpop.f32.mrf.mxu0
    %v212 = vadd.f32 %v71, %v211
    %v213 = vpop.f32.mrf.mxu0
    %v214 = vadd.f32 %v75, %v213
    %215 = vdwg.mxu0
    %216 = vst [vmem:[#allocation2] sm:$0xff] %v170
    %217 = vst [vmem:[#allocation2 + $0x8] sm:$0xff] %v172
    %218 = vst [vmem:[#allocation2 + $0x10] sm:$0xff] %v176
    %219 = vst [vmem:[#allocation2 + $0x18] sm:$0xff] %v178
    %220 = vst [vmem:[#allocation2 + $0x20] sm:$0xff] %v182
    %221 = vst [vmem:[#allocation2 + $0x28] sm:$0xff] %v184
    %222 = vst [vmem:[#allocation2 + $0x30] sm:$0xff] %v188
    %223 = vst [vmem:[#allocation2 + $0x38] sm:$0xff] %v190
    %224 = vst [vmem:[#allocation2 + $0x40] sm:$0xff] %v194
    %225 = vst [vmem:[#allocation2 + $0x48] sm:$0xff] %v196
    %226 = vst [vmem:[#allocation2 + $0x50] sm:$0xff] %v200
    %227 = vst [vmem:[#allocation2 + $0x58] sm:$0xff] %v202
    %228 = vst [vmem:[#allocation2 + $0x60] sm:$0xff] %v206
    %229 = vst [vmem:[#allocation2 + $0x68] sm:$0xff] %v208
    %230 = vst [vmem:[#allocation2 + $0x70] sm:$0xff] %v212
    %231 = vst [vmem:[#allocation2 + $0x78] sm:$0xff] %v214
    %s232 = scalar_lea.vmem %s1, 897
    %v233 = vld [vmem:[%s232] ss:$8 sm:$0x3]
    %v234 = vld [vmem:[#allocation3] sm:$0xff]
    %v235 = vld [vmem:[#allocation3 + $0x8] sm:$0xff]
    %v236 = vld [vmem:[#allocation3 + $0x10] sm:$0xff]
    %v237 = vld [vmem:[#allocation3 + $0x18] sm:$0xff]
    %v238 = vld [vmem:[#allocation3 + $0x20] sm:$0xff]
    %v239 = vld [vmem:[#allocation3 + $0x28] sm:$0xff]
    %v240 = vld [vmem:[#allocation3 + $0x30] sm:$0xff]
    %v241 = vld [vmem:[#allocation3 + $0x38] sm:$0xff]
    %v242 = vld [vmem:[#allocation3 + $0x40] sm:$0xff]
    %v243 = vld [vmem:[#allocation3 + $0x48] sm:$0xff]
    %v244 = vld [vmem:[#allocation3 + $0x50] sm:$0xff]
    %v245 = vld [vmem:[#allocation3 + $0x58] sm:$0xff]
    %v246 = vld [vmem:[#allocation3 + $0x60] sm:$0xff]
    %v247 = vld [vmem:[#allocation3 + $0x68] sm:$0xff]
    %v248 = vld [vmem:[#allocation3 + $0x70] sm:$0xff]
    %v249 = vld [vmem:[#allocation3 + $0x78] sm:$0xff]
    %v250 = vld [vmem:[#allocation3 + $0x80] sm:$0xff]
    %v251 = vld [vmem:[#allocation3 + $0x88] sm:$0xff]
    %v252 = vld [vmem:[#allocation3 + $0x90] sm:$0xff]
    %v253 = vld [vmem:[#allocation3 + $0x98] sm:$0xff]
    %v254 = vld [vmem:[#allocation3 + $0xa0] sm:$0xff]
    %v255 = vld [vmem:[#allocation3 + $0xa8] sm:$0xff]
    %v256 = vld [vmem:[#allocation3 + $0xb0] sm:$0xff]
    %v257 = vld [vmem:[#allocation3 + $0xb8] sm:$0xff]
    %v258 = vld [vmem:[#allocation3 + $0xc0] sm:$0xff]
    %v259 = vld [vmem:[#allocation3 + $0xc8] sm:$0xff]
    %v260 = vld [vmem:[#allocation3 + $0xd0] sm:$0xff]
    %v261 = vld [vmem:[#allocation3 + $0xd8] sm:$0xff]
    %v262 = vld [vmem:[#allocation3 + $0xe0] sm:$0xff]
    %v263 = vld [vmem:[#allocation3 + $0xe8] sm:$0xff]
    %v264 = vld [vmem:[#allocation3 + $0xf0] sm:$0xff]
    %v265 = vld [vmem:[#allocation3 + $0xf8] sm:$0xff]
    %v266 = vld [vmem:[#allocation3 + $0x100] sm:$0xff]
    %v267 = vld [vmem:[#allocation3 + $0x108] sm:$0xff]
    %v268 = vld [vmem:[#allocation3 + $0x110] sm:$0xff]
    %v269 = vld [vmem:[#allocation3 + $0x118] sm:$0xff]
    %v270 = vld [vmem:[#allocation3 + $0x120] sm:$0xff]
    %v271 = vld [vmem:[#allocation3 + $0x128] sm:$0xff]
    %v272 = vld [vmem:[#allocation3 + $0x130] sm:$0xff]
    %v273 = vld [vmem:[#allocation3 + $0x138] sm:$0xff]
    %v274 = vld [vmem:[#allocation3 + $0x140] sm:$0xff]
    %v275 = vld [vmem:[#allocation3 + $0x148] sm:$0xff]
    %v276 = vld [vmem:[#allocation3 + $0x150] sm:$0xff]
    %v277 = vld [vmem:[#allocation3 + $0x158] sm:$0xff]
    %v278 = vld [vmem:[#allocation3 + $0x160] sm:$0xff]
    %v279 = vld [vmem:[#allocation3 + $0x168] sm:$0xff]
    %v280 = vld [vmem:[#allocation3 + $0x170] sm:$0xff]
    %v281 = vld [vmem:[#allocation3 + $0x178] sm:$0xff]
    %v282 = vld [vmem:[#allocation3 + $0x180] sm:$0xff]
    %v283 = vld [vmem:[#allocation3 + $0x188] sm:$0xff]
    %v284 = vld [vmem:[#allocation3 + $0x190] sm:$0xff]
    %v285 = vld [vmem:[#allocation3 + $0x198] sm:$0xff]
    %v286 = vld [vmem:[#allocation3 + $0x1a0] sm:$0xff]
    %v287 = vld [vmem:[#allocation3 + $0x1a8] sm:$0xff]
    %v288 = vld [vmem:[#allocation3 + $0x1b0] sm:$0xff]
    %v289 = vld [vmem:[#allocation3 + $0x1b8] sm:$0xff]
    %v290 = vld [vmem:[#allocation3 + $0x1c0] sm:$0xff]
    %v291 = vld [vmem:[#allocation3 + $0x1c8] sm:$0xff]
    %v292 = vld [vmem:[#allocation3 + $0x1d0] sm:$0xff]
    %v293 = vld [vmem:[#allocation3 + $0x1d8] sm:$0xff]
    %v294 = vld [vmem:[#allocation3 + $0x1e0] sm:$0xff]
    %v295 = vld [vmem:[#allocation3 + $0x1e8] sm:$0xff]
    %v296 = vld [vmem:[#allocation3 + $0x1f0] sm:$0xff]
    %v297 = vld [vmem:[#allocation3 + $0x1f8] sm:$0xff]
    %298 = vmatprep.subr.mxu0 %v295
    %299 = vmatpush1.msra.mxu0 %v294
    %300 = vmatprep.subr.mxu0 %v291
    %301 = vmatpush1.msra.mxu0 %v290
    %302 = vmatprep.subr.mxu0 %v287
    %303 = vmatpush1.msra.mxu0 %v286
    %304 = vmatprep.subr.mxu0 %v283
    %305 = vmatpush1.msra.mxu0 %v282
    %306 = vmatprep.subr.mxu0 %v279
    %307 = vmatpush1.msra.mxu0 %v278
    %308 = vmatprep.subr.mxu0 %v275
    %309 = vmatpush1.msra.mxu0 %v274
    %310 = vmatprep.subr.mxu0 %v271
    %311 = vmatpush1.msra.mxu0 %v270
    %312 = vmatprep.subr.mxu0 %v267
    %313 = vmatpush1.msra.mxu0 %v266
    %314 = vmatprep.subr.mxu0 %v263
    %315 = vmatpush1.msra.mxu0 %v262
    %316 = vmatprep.subr.mxu0 %v259
    %317 = vmatpush1.msra.mxu0 %v258
    %318 = vmatprep.subr.mxu0 %v255
    %319 = vmatpush1.msra.mxu0 %v254
    %320 = vmatprep.subr.mxu0 %v251
    %321 = vmatpush1.msra.mxu0 %v250
    %322 = vmatprep.subr.mxu0 %v247
    %323 = vmatpush1.msra.mxu0 %v246
    %324 = vmatprep.subr.mxu0 %v243
    %325 = vmatpush1.msra.mxu0 %v242
    %326 = vmatprep.subr.mxu0 %v239
    %327 = vmatpush1.msra.mxu0 %v238
    %328 = vmatprep.subr.mxu0 %v235
    %329 = vmatpush1.msra.mxu0 %v234
    %330 = vmatprep.subr.mxu0 0.0
    %331 = vmatpush2.msra.mxu0 0.0
    %332 = vmatprep.subr.mxu0 0.0
    %333 = vmatpush2.msra.mxu0 0.0
    %334 = vmatprep.subr.mxu0 0.0
    %335 = vmatpush2.msra.mxu0 0.0
    %336 = vmatprep.subr.mxu0 0.0
    %337 = vmatpush2.msra.mxu0 0.0
    %338 = vmatprep.subr.mxu0 0.0
    %339 = vmatpush2.msra.mxu0 0.0
    %340 = vmatprep.subr.mxu0 0.0
    %341 = vmatpush2.msra.mxu0 0.0
    %342 = vmatprep.subr.mxu0 0.0
    %343 = vmatpush2.msra.mxu0 0.0
    %344 = vmatprep.subr.mxu0 0.0
    %345 = vmatpush2.msra.mxu0 0.0
    %346 = vmatprep.subr.mxu0 0.0
    %347 = vmatpush2.msra.mxu0 0.0
    %348 = vmatprep.subr.mxu0 0.0
    %349 = vmatpush2.msra.mxu0 0.0
    %350 = vmatprep.subr.mxu0 0.0
    %351 = vmatpush2.msra.mxu0 0.0
    %352 = vmatprep.subr.mxu0 0.0
    %353 = vmatpush2.msra.mxu0 0.0
    %354 = vmatprep.subr.mxu0 0.0
    %355 = vmatpush2.msra.mxu0 0.0
    %356 = vmatprep.subr.mxu0 0.0
    %357 = vmatpush2.msra.mxu0 0.0
    %358 = vmatprep.subr.mxu0 0.0
    %359 = vmatpush2.msra.mxu0 0.0
    %360 = vmatprep.subr.mxu0 0.0
    %361 = vmatpush2.msra.mxu0 0.0
    %362 = vmatprep.mubr.f32.mxu0 0.0
    %363 = vmatmul.mubr.f32.gmra.mxu0 0.0
    %v364 = vpop.f32.mrf.mxu0
    %v365 = vadd.f32 0.0, %v364
    %v366 = vpop.f32.mrf.mxu0
    %v367 = vadd.f32 0.0, %v366
    %368 = vdwg.mxu0
    %369 = vmatprep.subr.mxu0 %v297
    %370 = vmatpush1.msra.mxu0 %v296
    %371 = vmatprep.subr.mxu0 %v293
    %372 = vmatpush1.msra.mxu0 %v292
    %373 = vmatprep.subr.mxu0 %v289
    %374 = vmatpush1.msra.mxu0 %v288
    %375 = vmatprep.subr.mxu0 %v285
    %376 = vmatpush1.msra.mxu0 %v284
    %377 = vmatprep.subr.mxu0 %v281
    %378 = vmatpush1.msra.mxu0 %v280
    %379 = vmatprep.subr.mxu0 %v277
    %380 = vmatpush1.msra.mxu0 %v276
    %381 = vmatprep.subr.mxu0 %v273
    %382 = vmatpush1.msra.mxu0 %v272
    %383 = vmatprep.subr.mxu0 %v269
    %384 = vmatpush1.msra.mxu0 %v268
    %385 = vmatprep.subr.mxu0 %v265
    %386 = vmatpush1.msra.mxu0 %v264
    %387 = vmatprep.subr.mxu0 %v261
    %388 = vmatpush1.msra.mxu0 %v260
    %389 = vmatprep.subr.mxu0 %v257
    %390 = vmatpush1.msra.mxu0 %v256
    %391 = vmatprep.subr.mxu0 %v253
    %392 = vmatpush1.msra.mxu0 %v252
    %393 = vmatprep.subr.mxu0 %v249
    %394 = vmatpush1.msra.mxu0 %v248
    %395 = vmatprep.subr.mxu0 %v245
    %396 = vmatpush1.msra.mxu0 %v244
    %397 = vmatprep.subr.mxu0 %v241
    %398 = vmatpush1.msra.mxu0 %v240
    %399 = vmatprep.subr.mxu0 %v237
    %400 = vmatpush1.msra.mxu0 %v236
    %401 = vmatprep.subr.mxu0 0.0
    %402 = vmatpush2.msra.mxu0 0.0
    %403 = vmatprep.subr.mxu0 0.0
    %404 = vmatpush2.msra.mxu0 0.0
    %405 = vmatprep.subr.mxu0 0.0
    %406 = vmatpush2.msra.mxu0 0.0
    %407 = vmatprep.subr.mxu0 0.0
    %408 = vmatpush2.msra.mxu0 0.0
    %409 = vmatprep.subr.mxu0 0.0
    %410 = vmatpush2.msra.mxu0 0.0
    %411 = vmatprep.subr.mxu0 0.0
    %412 = vmatpush2.msra.mxu0 0.0
    %413 = vmatprep.subr.mxu0 0.0
    %414 = vmatpush2.msra.mxu0 0.0
    %415 = vmatprep.subr.mxu0 0.0
    %416 = vmatpush2.msra.mxu0 0.0
    %417 = vmatprep.subr.mxu0 0.0
    %418 = vmatpush2.msra.mxu0 0.0
    %419 = vmatprep.subr.mxu0 0.0
    %420 = vmatpush2.msra.mxu0 0.0
    %421 = vmatprep.subr.mxu0 0.0
    %422 = vmatpush2.msra.mxu0 0.0
    %423 = vmatprep.subr.mxu0 0.0
    %424 = vmatpush2.msra.mxu0 0.0
    %425 = vmatprep.subr.mxu0 0.0
    %426 = vmatpush2.msra.mxu0 0.0
    %427 = vmatprep.subr.mxu0 0.0
    %428 = vmatpush2.msra.mxu0 0.0
    %429 = vmatprep.subr.mxu0 0.0
    %430 = vmatpush2.msra.mxu0 0.0
    %431 = vmatprep.subr.mxu0 0.0
    %432 = vmatpush2.msra.mxu0 0.0
    %433 = vmatprep.mubr.f32.mxu0 0.0
    %434 = vmatmul.mubr.f32.gmra.mxu0 0.0
    %v435 = vpop.f32.mrf.mxu0
    %v436 = vadd.f32 0.0, %v435
    %v437 = vpop.f32.mrf.mxu0
    %v438 = vadd.f32 0.0, %v437
    %439 = vdwg.mxu0
    %v440 = vld [vmem:[#allocation2] sm:$0xff]
    %v441 = vld [vmem:[#allocation2 + $0x8] sm:$0xff]
    %v442 = vadd.f32 %v440, %v365
    %v443 = vadd.f32 %v441, %v367
    %v444 = vmul.f32 %v442, %v37
    %v445 = vmul.f32 %v443, %v38
    %v446 = vtanh.pop %v444
    %v447 = vtanh.pop %v445
    %v448 = vmul.f32 %v446, %v37
    %v449 = vmul.f32 %v447, %v38
    %v450 = vadd.f32 %v448, %v39
    %v451 = vadd.f32 %v449, %v40
    %v452 = vmul.f32 %v450, 0.0
    %v453 = vmul.f32 %v450, %v451
    %455 = vrot.lane.b32.xlu0 %v453, 64
    %v456 = vpop.permute.xlu0 %455
    %v458 = vadd.f32 %v452, %v456
    %v459 = vtanh.pop %v458
    %v460 = vmul.f32 %v451, %v459
    %v461 = vld [vmem:[%s1 + $0x80] sm:$0xff]
    %v462 = vld [vmem:[%s1 + $0x88] sm:$0xff]
    %v463 = vld [vmem:[%s1 + $0x90] sm:$0xff]
    %v464 = vld [vmem:[%s1 + $0x98] sm:$0xff]
    %v465 = vld [vmem:[%s1 + $0xa0] sm:$0xff]
    %v466 = vld [vmem:[%s1 + $0xa8] sm:$0xff]
    %v467 = vld [vmem:[%s1 + $0xb0] sm:$0xff]
    %v468 = vld [vmem:[%s1 + $0xb8] sm:$0xff]
    %v469 = vld [vmem:[%s1 + $0xc0] sm:$0xff]
    %v470 = vld [vmem:[%s1 + $0xc8] sm:$0xff]
    %v471 = vld [vmem:[%s1 + $0xd0] sm:$0xff]
    %v472 = vld [vmem:[%s1 + $0xd8] sm:$0xff]
    %v473 = vld [vmem:[%s1 + $0xe0] sm:$0xff]
    %v474 = vld [vmem:[%s1 + $0xe8] sm:$0xff]
    %v475 = vld [vmem:[%s1 + $0xf0] sm:$0xff]
    %v476 = vld [vmem:[%s1 + $0xf8] sm:$0xff]
    %478 = vrot.lane.b32.xlu0 %v460, 64
    %v479 = vpop.permute.xlu0 %478
    %v480 = vsel %vm78, %v479, 0
    %482 = vmatprep.subr.mxu0 0.0
    %483 = vmatpush1.msra.mxu0 0.0
    %484 = vmatprep.subr.mxu0 0.0
    %485 = vmatpush1.msra.mxu0 0.0
    %486 = vmatprep.subr.mxu0 0.0
    %487 = vmatpush1.msra.mxu0 0.0
    %488 = vmatprep.subr.mxu0 0.0
    %489 = vmatpush1.msra.mxu0 0.0
    %490 = vmatprep.subr.mxu0 0.0
    %491 = vmatpush1.msra.mxu0 0.0
    %492 = vmatprep.subr.mxu0 0.0
    %493 = vmatpush1.msra.mxu0 0.0
    %494 = vmatprep.subr.mxu0 0.0
    %495 = vmatpush1.msra.mxu0 0.0
    %496 = vmatprep.subr.mxu0 0.0
    %497 = vmatpush1.msra.mxu0 0.0
    %498 = vmatprep.subr.mxu0 %v476
    %499 = vmatpush1.msra.mxu0 %v475
    %500 = vmatprep.subr.mxu0 %v474
    %501 = vmatpush1.msra.mxu0 %v473
    %502 = vmatprep.subr.mxu0 %v472
    %503 = vmatpush1.msra.mxu0 %v471
    %504 = vmatprep.subr.mxu0 %v470
    %505 = vmatpush1.msra.mxu0 %v469
    %506 = vmatprep.subr.mxu0 %v468
    %507 = vmatpush1.msra.mxu0 %v467
    %508 = vmatprep.subr.mxu0 %v466
    %509 = vmatpush1.msra.mxu0 %v465
    %510 = vmatprep.subr.mxu0 %v464
    %511 = vmatpush1.msra.mxu0 %v463
    %512 = vmatprep.subr.mxu0 %v462
    %513 = vmatpush1.msra.mxu0 %v461
    %514 = vmatprep.subr.mxu0 0.0
    %515 = vmatpush2.msra.mxu0 0.0
    %516 = vmatprep.subr.mxu0 0.0
    %517 = vmatpush2.msra.mxu0 0.0
    %518 = vmatprep.subr.mxu0 0.0
    %519 = vmatpush2.msra.mxu0 0.0
    %520 = vmatprep.subr.mxu0 0.0
    %521 = vmatpush2.msra.mxu0 0.0
    %522 = vmatprep.subr.mxu0 0.0
    %523 = vmatpush2.msra.mxu0 0.0
    %524 = vmatprep.subr.mxu0 0.0
    %525 = vmatpush2.msra.mxu0 0.0
    %526 = vmatprep.subr.mxu0 0.0
    %527 = vmatpush2.msra.mxu0 0.0
    %528 = vmatprep.subr.mxu0 0.0
    %529 = vmatpush2.msra.mxu0 0.0
    %530 = vmatprep.subr.mxu0 0.0
    %531 = vmatpush2.msra.mxu0 0.0
    %532 = vmatprep.subr.mxu0 0.0
    %533 = vmatpush2.msra.mxu0 0.0
    %534 = vmatprep.subr.mxu0 0.0
    %535 = vmatpush2.msra.mxu0 0.0
    %536 = vmatprep.subr.mxu0 0.0
    %537 = vmatpush2.msra.mxu0 0.0
    %538 = vmatprep.subr.mxu0 0.0
    %539 = vmatpush2.msra.mxu0 0.0
    %540 = vmatprep.subr.mxu0 0.0
    %541 = vmatpush2.msra.mxu0 0.0
    %542 = vmatprep.subr.mxu0 0.0
    %543 = vmatpush2.msra.mxu0 0.0
    %544 = vmatprep.subr.mxu0 0.0
    %545 = vmatpush2.msra.mxu0 0.0
    %546 = vmatprep.mubr.f32.mxu0 0.0
    %547 = vmatmul.mubr.f32.gmra.mxu0 %v480
    %v548 = vpop.f32.mrf.mxu0
    %v549 = vadd.f32 %v436, %v548
    %v550 = vpop.f32.mrf.mxu0
    %v551 = vadd.f32 %v438, %v550
    %552 = vdwg.mxu0
    %v554 = vlaneseq
    %v555 = vshrl.u32 %v554, 7
    %v556 = vsub.s32 0, %v555
    %v557 = vrot.slane %v233, %v556
    %v558 = vlaneseq
    %v559 = vshrl.u32 %v558, 7
    %v560 = vsub.s32 1, %v559
    %v561 = vrot.slane %v233, %v560
    %v564 = vadd.f32 %v549, %v557
    %v565 = vadd.f32 %v551, %v561
    %v566 = vmul.f32 %v564, %v37
    %v567 = vmul.f32 %v565, %v38
    %v568 = vtanh.pop %v566
    %v569 = vtanh.pop %v567
    %v570 = vmul.f32 %v568, %v37
    %v571 = vmul.f32 %v569, %v38
    %v572 = vadd.f32 %v570, %v39
    %v573 = vadd.f32 %v571, %v40
    %v574 = vmul.f32 %v572, 0.0
    %v575 = vmul.f32 %v572, %v573
    %577 = vrot.lane.b32.xlu0 %v575, 64
    %v578 = vpop.permute.xlu0 %577
    %v580 = vadd.f32 %v574, %v578
    %v581 = vtanh.pop %v580
    %v582 = vmul.f32 %v573, %v581
    %v584 = vsel %vm78, %v479, %v582
    %585 = vmatprep.subr.mxu0 %v295
    %586 = vmatpush1.msra.mxu0 %v294
    %587 = vmatprep.subr.mxu0 %v291
    %588 = vmatpush1.msra.mxu0 %v290
    %589 = vmatprep.subr.mxu0 %v287
    %590 = vmatpush1.msra.mxu0 %v286
    %591 = vmatprep.subr.mxu0 %v283
    %592 = vmatpush1.msra.mxu0 %v282
    %593 = vmatprep.subr.mxu0 %v279
    %594 = vmatpush1.msra.mxu0 %v278
    %595 = vmatprep.subr.mxu0 %v275
    %596 = vmatpush1.msra.mxu0 %v274
    %597 = vmatprep.subr.mxu0 %v271
    %598 = vmatpush1.msra.mxu0 %v270
    %599 = vmatprep.subr.mxu0 %v267
    %600 = vmatpush1.msra.mxu0 %v266
    %601 = vmatprep.subr.mxu0 %v263
    %602 = vmatpush1.msra.mxu0 %v262
    %603 = vmatprep.subr.mxu0 %v259
    %604 = vmatpush1.msra.mxu0 %v258
    %605 = vmatprep.subr.mxu0 %v255
    %606 = vmatpush1.msra.mxu0 %v254
    %607 = vmatprep.subr.mxu0 %v251
    %608 = vmatpush1.msra.mxu0 %v250
    %609 = vmatprep.subr.mxu0 %v247
    %610 = vmatpush1.msra.mxu0 %v246
    %611 = vmatprep.subr.mxu0 %v243
    %612 = vmatpush1.msra.mxu0 %v242
    %613 = vmatprep.subr.mxu0 %v239
    %614 = vmatpush1.msra.mxu0 %v238
    %615 = vmatprep.subr.mxu0 %v235
    %616 = vmatpush1.msra.mxu0 %v234
    %617 = vmatprep.subr.mxu0 0.0
    %618 = vmatpush2.msra.mxu0 0.0
    %619 = vmatprep.subr.mxu0 0.0
    %620 = vmatpush2.msra.mxu0 0.0
    %621 = vmatprep.subr.mxu0 0.0
    %622 = vmatpush2.msra.mxu0 0.0
    %623 = vmatprep.subr.mxu0 0.0
    %624 = vmatpush2.msra.mxu0 0.0
    %625 = vmatprep.subr.mxu0 0.0
    %626 = vmatpush2.msra.mxu0 0.0
    %627 = vmatprep.subr.mxu0 0.0
    %628 = vmatpush2.msra.mxu0 0.0
    %629 = vmatprep.subr.mxu0 0.0
    %630 = vmatpush2.msra.mxu0 0.0
    %631 = vmatprep.subr.mxu0 0.0
    %632 = vmatpush2.msra.mxu0 0.0
    %633 = vmatprep.subr.mxu0 0.0
    %634 = vmatpush2.msra.mxu0 0.0
    %635 = vmatprep.subr.mxu0 0.0
    %636 = vmatpush2.msra.mxu0 0.0
    %637 = vmatprep.subr.mxu0 0.0
    %638 = vmatpush2.msra.mxu0 0.0
    %639 = vmatprep.subr.mxu0 0.0
    %640 = vmatpush2.msra.mxu0 0.0
    %641 = vmatprep.subr.mxu0 0.0
    %642 = vmatpush2.msra.mxu0 0.0
    %643 = vmatprep.subr.mxu0 0.0
    %644 = vmatpush2.msra.mxu0 0.0
    %645 = vmatprep.subr.mxu0 0.0
    %646 = vmatpush2.msra.mxu0 0.0
    %647 = vmatprep.subr.mxu0 0.0
    %648 = vmatpush2.msra.mxu0 0.0
    %649 = vmatprep.mubr.f32.mxu0 0.0
    %650 = vmatmul.mubr.f32.gmra.mxu0 %v584
    %v651 = vpop.f32.mrf.mxu0
    %v652 = vadd.f32 0.0, %v651
    %v653 = vpop.f32.mrf.mxu0
    %v654 = vadd.f32 0.0, %v653
    %655 = vdwg.mxu0
    %656 = vmatprep.subr.mxu0 %v297
    %657 = vmatpush1.msra.mxu0 %v296
    %658 = vmatprep.subr.mxu0 %v293
    %659 = vmatpush1.msra.mxu0 %v292
    %660 = vmatprep.subr.mxu0 %v289
    %661 = vmatpush1.msra.mxu0 %v288
    %662 = vmatprep.subr.mxu0 %v285
    %663 = vmatpush1.msra.mxu0 %v284
    %664 = vmatprep.subr.mxu0 %v281
    %665 = vmatpush1.msra.mxu0 %v280
    %666 = vmatprep.subr.mxu0 %v277
    %667 = vmatpush1.msra.mxu0 %v276
    %668 = vmatprep.subr.mxu0 %v273
    %669 = vmatpush1.msra.mxu0 %v272
    %670 = vmatprep.subr.mxu0 %v269
    %671 = vmatpush1.msra.mxu0 %v268
    %672 = vmatprep.subr.mxu0 %v265
    %673 = vmatpush1.msra.mxu0 %v264
    %674 = vmatprep.subr.mxu0 %v261
    %675 = vmatpush1.msra.mxu0 %v260
    %676 = vmatprep.subr.mxu0 %v257
    %677 = vmatpush1.msra.mxu0 %v256
    %678 = vmatprep.subr.mxu0 %v253
    %679 = vmatpush1.msra.mxu0 %v252
    %680 = vmatprep.subr.mxu0 %v249
    %681 = vmatpush1.msra.mxu0 %v248
    %682 = vmatprep.subr.mxu0 %v245
    %683 = vmatpush1.msra.mxu0 %v244
    %684 = vmatprep.subr.mxu0 %v241
    %685 = vmatpush1.msra.mxu0 %v240
    %686 = vmatprep.subr.mxu0 %v237
    %687 = vmatpush1.msra.mxu0 %v236
    %688 = vmatprep.subr.mxu0 0.0
    %689 = vmatpush2.msra.mxu0 0.0
    %690 = vmatprep.subr.mxu0 0.0
    %691 = vmatpush2.msra.mxu0 0.0
    %692 = vmatprep.subr.mxu0 0.0
    %693 = vmatpush2.msra.mxu0 0.0
    %694 = vmatprep.subr.mxu0 0.0
    %695 = vmatpush2.msra.mxu0 0.0
    %696 = vmatprep.subr.mxu0 0.0
    %697 = vmatpush2.msra.mxu0 0.0
    %698 = vmatprep.subr.mxu0 0.0
    %699 = vmatpush2.msra.mxu0 0.0
    %700 = vmatprep.subr.mxu0 0.0
    %701 = vmatpush2.msra.mxu0 0.0
    %702 = vmatprep.subr.mxu0 0.0
    %703 = vmatpush2.msra.mxu0 0.0
    %704 = vmatprep.subr.mxu0 0.0
    %705 = vmatpush2.msra.mxu0 0.0
    %706 = vmatprep.subr.mxu0 0.0
    %707 = vmatpush2.msra.mxu0 0.0
    %708 = vmatprep.subr.mxu0 0.0
    %709 = vmatpush2.msra.mxu0 0.0
    %710 = vmatprep.subr.mxu0 0.0
    %711 = vmatpush2.msra.mxu0 0.0
    %712 = vmatprep.subr.mxu0 0.0
    %713 = vmatpush2.msra.mxu0 0.0
    %714 = vmatprep.subr.mxu0 0.0
    %715 = vmatpush2.msra.mxu0 0.0
    %716 = vmatprep.subr.mxu0 0.0
    %717 = vmatpush2.msra.mxu0 0.0
    %718 = vmatprep.subr.mxu0 0.0
    %719 = vmatpush2.msra.mxu0 0.0
    %720 = vmatprep.mubr.f32.mxu0 0.0
    %721 = vmatmul.mubr.f32.gmra.mxu0 %v584
    %v722 = vpop.f32.mrf.mxu0
    %v723 = vadd.f32 0.0, %v722
    %v724 = vpop.f32.mrf.mxu0
    %v725 = vadd.f32 0.0, %v724
    %726 = vdwg.mxu0
    %v727 = vld [vmem:[#allocation2 + $0x10] sm:$0xff]
    %v728 = vld [vmem:[#allocation2 + $0x18] sm:$0xff]
    %v729 = vadd.f32 %v727, %v652
    %v730 = vadd.f32 %v728, %v654
    %v731 = vmul.f32 %v729, %v37
    %v732 = vmul.f32 %v730, %v38
    %v733 = vtanh.pop %v731
    %v734 = vtanh.pop %v732
    %v735 = vmul.f32 %v733, %v37
    %v736 = vmul.f32 %v734, %v38
    %v737 = vadd.f32 %v735, %v39
    %v738 = vadd.f32 %v736, %v40
    %v739 = vmul.f32 %v737, %v458
    %v740 = vmul.f32 %v737, %v738
    %742 = vrot.lane.b32.xlu0 %v740, 64
    %v743 = vpop.permute.xlu0 %742
    %v745 = vadd.f32 %v739, %v743
    %v746 = vtanh.pop %v745
    %v747 = vmul.f32 %v738, %v746
    %749 = vrot.lane.b32.xlu0 %v747, 64
    %v750 = vpop.permute.xlu0 %749
    %v751 = vsel %vm78, %v750, 0
    %753 = vmatprep.subr.mxu0 0.0
    %754 = vmatpush1.msra.mxu0 0.0
    %755 = vmatprep.subr.mxu0 0.0
    %756 = vmatpush1.msra.mxu0 0.0
    %757 = vmatprep.subr.mxu0 0.0
    %758 = vmatpush1.msra.mxu0 0.0
    %759 = vmatprep.subr.mxu0 0.0
    %760 = vmatpush1.msra.mxu0 0.0
    %761 = vmatprep.subr.mxu0 0.0
    %762 = vmatpush1.msra.mxu0 0.0
    %763 = vmatprep.subr.mxu0 0.0
    %764 = vmatpush1.msra.mxu0 0.0
    %765 = vmatprep.subr.mxu0 0.0
    %766 = vmatpush1.msra.mxu0 0.0
    %767 = vmatprep.subr.mxu0 0.0
    %768 = vmatpush1.msra.mxu0 0.0
    %769 = vmatprep.subr.mxu0 %v476
    %770 = vmatpush1.msra.mxu0 %v475
    %771 = vmatprep.subr.mxu0 %v474
    %772 = vmatpush1.msra.mxu0 %v473
    %773 = vmatprep.subr.mxu0 %v472
    %774 = vmatpush1.msra.mxu0 %v471
    %775 = vmatprep.subr.mxu0 %v470
    %776 = vmatpush1.msra.mxu0 %v469
    %777 = vmatprep.subr.mxu0 %v468
    %778 = vmatpush1.msra.mxu0 %v467
    %779 = vmatprep.subr.mxu0 %v466
    %780 = vmatpush1.msra.mxu0 %v465
    %781 = vmatprep.subr.mxu0 %v464
    %782 = vmatpush1.msra.mxu0 %v463
    %783 = vmatprep.subr.mxu0 %v462
    %784 = vmatpush1.msra.mxu0 %v461
    %785 = vmatprep.subr.mxu0 0.0
    %786 = vmatpush2.msra.mxu0 0.0
    %787 = vmatprep.subr.mxu0 0.0
    %788 = vmatpush2.msra.mxu0 0.0
    %789 = vmatprep.subr.mxu0 0.0
    %790 = vmatpush2.msra.mxu0 0.0
    %791 = vmatprep.subr.mxu0 0.0
    %792 = vmatpush2.msra.mxu0 0.0
    %793 = vmatprep.subr.mxu0 0.0
    %794 = vmatpush2.msra.mxu0 0.0
    %795 = vmatprep.subr.mxu0 0.0
    %796 = vmatpush2.msra.mxu0 0.0
    %797 = vmatprep.subr.mxu0 0.0
    %798 = vmatpush2.msra.mxu0 0.0
    %799 = vmatprep.subr.mxu0 0.0
    %800 = vmatpush2.msra.mxu0 0.0
    %801 = vmatprep.subr.mxu0 0.0
    %802 = vmatpush2.msra.mxu0 0.0
    %803 = vmatprep.subr.mxu0 0.0
    %804 = vmatpush2.msra.mxu0 0.0
    %805 = vmatprep.subr.mxu0 0.0
    %806 = vmatpush2.msra.mxu0 0.0
    %807 = vmatprep.subr.mxu0 0.0
    %808 = vmatpush2.msra.mxu0 0.0
    %809 = vmatprep.subr.mxu0 0.0
    %810 = vmatpush2.msra.mxu0 0.0
    %811 = vmatprep.subr.mxu0 0.0
    %812 = vmatpush2.msra.mxu0 0.0
    %813 = vmatprep.subr.mxu0 0.0
    %814 = vmatpush2.msra.mxu0 0.0
    %815 = vmatprep.subr.mxu0 0.0
    %816 = vmatpush2.msra.mxu0 0.0
    %817 = vmatprep.mubr.f32.mxu0 0.0
    %818 = vmatmul.mubr.f32.gmra.mxu0 %v751
    %v819 = vpop.f32.mrf.mxu0
    %v820 = vadd.f32 %v723, %v819
    %v821 = vpop.f32.mrf.mxu0
    %v822 = vadd.f32 %v725, %v821
    %823 = vdwg.mxu0
    %v824 = vadd.f32 %v820, %v557
    %v825 = vadd.f32 %v822, %v561
    %v826 = vmul.f32 %v824, %v37
    %v827 = vmul.f32 %v825, %v38
    %v828 = vtanh.pop %v826
    %v829 = vtanh.pop %v827
    %v830 = vmul.f32 %v828, %v37
    %v831 = vmul.f32 %v829, %v38
    %v832 = vadd.f32 %v830, %v39
    %v833 = vadd.f32 %v831, %v40
    %v834 = vmul.f32 %v832, %v580
    %v835 = vmul.f32 %v832, %v833
    %837 = vrot.lane.b32.xlu0 %v835, 64
    %v838 = vpop.permute.xlu0 %837
    %v840 = vadd.f32 %v834, %v838
    %v841 = vtanh.pop %v840
    %v842 = vmul.f32 %v833, %v841
    %v844 = vsel %vm78, %v750, %v842
    %845 = vmatprep.subr.mxu0 %v295
    %846 = vmatpush1.msra.mxu0 %v294
    %847 = vmatprep.subr.mxu0 %v291
    %848 = vmatpush1.msra.mxu0 %v290
    %849 = vmatprep.subr.mxu0 %v287
    %850 = vmatpush1.msra.mxu0 %v286
    %851 = vmatprep.subr.mxu0 %v283
    %852 = vmatpush1.msra.mxu0 %v282
    %853 = vmatprep.subr.mxu0 %v279
    %854 = vmatpush1.msra.mxu0 %v278
    %855 = vmatprep.subr.mxu0 %v275
    %856 = vmatpush1.msra.mxu0 %v274
    %857 = vmatprep.subr.mxu0 %v271
    %858 = vmatpush1.msra.mxu0 %v270
    %859 = vmatprep.subr.mxu0 %v267
    %860 = vmatpush1.msra.mxu0 %v266
    %861 = vmatprep.subr.mxu0 %v263
    %862 = vmatpush1.msra.mxu0 %v262
    %863 = vmatprep.subr.mxu0 %v259
    %864 = vmatpush1.msra.mxu0 %v258
    %865 = vmatprep.subr.mxu0 %v255
    %866 = vmatpush1.msra.mxu0 %v254
    %867 = vmatprep.subr.mxu0 %v251
    %868 = vmatpush1.msra.mxu0 %v250
    %869 = vmatprep.subr.mxu0 %v247
    %870 = vmatpush1.msra.mxu0 %v246
    %871 = vmatprep.subr.mxu0 %v243
    %872 = vmatpush1.msra.mxu0 %v242
    %873 = vmatprep.subr.mxu0 %v239
    %874 = vmatpush1.msra.mxu0 %v238
    %875 = vmatprep.subr.mxu0 %v235
    %876 = vmatpush1.msra.mxu0 %v234
    %877 = vmatprep.subr.mxu0 0.0
    %878 = vmatpush2.msra.mxu0 0.0
    %879 = vmatprep.subr.mxu0 0.0
    %880 = vmatpush2.msra.mxu0 0.0
    %881 = vmatprep.subr.mxu0 0.0
    %882 = vmatpush2.msra.mxu0 0.0
    %883 = vmatprep.subr.mxu0 0.0
    %884 = vmatpush2.msra.mxu0 0.0
    %885 = vmatprep.subr.mxu0 0.0
    %886 = vmatpush2.msra.mxu0 0.0
    %887 = vmatprep.subr.mxu0 0.0
    %888 = vmatpush2.msra.mxu0 0.0
    %889 = vmatprep.subr.mxu0 0.0
    %890 = vmatpush2.msra.mxu0 0.0
    %891 = vmatprep.subr.mxu0 0.0
    %892 = vmatpush2.msra.mxu0 0.0
    %893 = vmatprep.subr.mxu0 0.0
    %894 = vmatpush2.msra.mxu0 0.0
    %895 = vmatprep.subr.mxu0 0.0
    %896 = vmatpush2.msra.mxu0 0.0
    %897 = vmatprep.subr.mxu0 0.0
    %898 = vmatpush2.msra.mxu0 0.0
    %899 = vmatprep.subr.mxu0 0.0
    %900 = vmatpush2.msra.mxu0 0.0
    %901 = vmatprep.subr.mxu0 0.0
    %902 = vmatpush2.msra.mxu0 0.0
    %903 = vmatprep.subr.mxu0 0.0
    %904 = vmatpush2.msra.mxu0 0.0
    %905 = vmatprep.subr.mxu0 0.0
    %906 = vmatpush2.msra.mxu0 0.0
    %907 = vmatprep.subr.mxu0 0.0
    %908 = vmatpush2.msra.mxu0 0.0
    %909 = vmatprep.mubr.f32.mxu0 0.0
    %910 = vmatmul.mubr.f32.gmra.mxu0 %v844
    %v911 = vpop.f32.mrf.mxu0
    %v912 = vadd.f32 0.0, %v911
    %v913 = vpop.f32.mrf.mxu0
    %v914 = vadd.f32 0.0, %v913
    %915 = vdwg.mxu0
    %916 = vmatprep.subr.mxu0 %v297
    %917 = vmatpush1.msra.mxu0 %v296
    %918 = vmatprep.subr.mxu0 %v293
    %919 = vmatpush1.msra.mxu0 %v292
    %920 = vmatprep.subr.mxu0 %v289
    %921 = vmatpush1.msra.mxu0 %v288
    %922 = vmatprep.subr.mxu0 %v285
    %923 = vmatpush1.msra.mxu0 %v284
    %924 = vmatprep.subr.mxu0 %v281
    %925 = vmatpush1.msra.mxu0 %v280
    %926 = vmatprep.subr.mxu0 %v277
    %927 = vmatpush1.msra.mxu0 %v276
    %928 = vmatprep.subr.mxu0 %v273
    %929 = vmatpush1.msra.mxu0 %v272
    %930 = vmatprep.subr.mxu0 %v269
    %931 = vmatpush1.msra.mxu0 %v268
    %932 = vmatprep.subr.mxu0 %v265
    %933 = vmatpush1.msra.mxu0 %v264
    %934 = vmatprep.subr.mxu0 %v261
    %935 = vmatpush1.msra.mxu0 %v260
    %936 = vmatprep.subr.mxu0 %v257
    %937 = vmatpush1.msra.mxu0 %v256
    %938 = vmatprep.subr.mxu0 %v253
    %939 = vmatpush1.msra.mxu0 %v252
    %940 = vmatprep.subr.mxu0 %v249
    %941 = vmatpush1.msra.mxu0 %v248
    %942 = vmatprep.subr.mxu0 %v245
    %943 = vmatpush1.msra.mxu0 %v244
    %944 = vmatprep.subr.mxu0 %v241
    %945 = vmatpush1.msra.mxu0 %v240
    %946 = vmatprep.subr.mxu0 %v237
    %947 = vmatpush1.msra.mxu0 %v236
    %948 = vmatprep.subr.mxu0 0.0
    %949 = vmatpush2.msra.mxu0 0.0
    %950 = vmatprep.subr.mxu0 0.0
    %951 = vmatpush2.msra.mxu0 0.0
    %952 = vmatprep.subr.mxu0 0.0
    %953 = vmatpush2.msra.mxu0 0.0
    %954 = vmatprep.subr.mxu0 0.0
    %955 = vmatpush2.msra.mxu0 0.0
    %956 = vmatprep.subr.mxu0 0.0
    %957 = vmatpush2.msra.mxu0 0.0
    %958 = vmatprep.subr.mxu0 0.0
    %959 = vmatpush2.msra.mxu0 0.0
    %960 = vmatprep.subr.mxu0 0.0
    %961 = vmatpush2.msra.mxu0 0.0
    %962 = vmatprep.subr.mxu0 0.0
    %963 = vmatpush2.msra.mxu0 0.0
    %964 = vmatprep.subr.mxu0 0.0
    %965 = vmatpush2.msra.mxu0 0.0
    %966 = vmatprep.subr.mxu0 0.0
    %967 = vmatpush2.msra.mxu0 0.0
    %968 = vmatprep.subr.mxu0 0.0
    %969 = vmatpush2.msra.mxu0 0.0
    %970 = vmatprep.subr.mxu0 0.0
    %971 = vmatpush2.msra.mxu0 0.0
    %972 = vmatprep.subr.mxu0 0.0
    %973 = vmatpush2.msra.mxu0 0.0
    %974 = vmatprep.subr.mxu0 0.0
    %975 = vmatpush2.msra.mxu0 0.0
    %976 = vmatprep.subr.mxu0 0.0
    %977 = vmatpush2.msra.mxu0 0.0
    %978 = vmatprep.subr.mxu0 0.0
    %979 = vmatpush2.msra.mxu0 0.0
    %980 = vmatprep.mubr.f32.mxu0 0.0
    %981 = vmatmul.mubr.f32.gmra.mxu0 %v844
    %v982 = vpop.f32.mrf.mxu0
    %v983 = vadd.f32 0.0, %v982
    %v984 = vpop.f32.mrf.mxu0
    %v985 = vadd.f32 0.0, %v984
    %986 = vdwg.mxu0
    %v987 = vld [vmem:[#allocation2 + $0x20] sm:$0xff]
    %v988 = vld [vmem:[#allocation2 + $0x28] sm:$0xff]
    %v989 = vadd.f32 %v987, %v912
    %v990 = vadd.f32 %v988, %v914
    %v991 = vmul.f32 %v989, %v37
    %v992 = vmul.f32 %v990, %v38
    %v993 = vtanh.pop %v991
    %v994 = vtanh.pop %v992
    %v995 = vmul.f32 %v993, %v37
    %v996 = vmul.f32 %v994, %v38
    %v997 = vadd.f32 %v995, %v39
    %v998 = vadd.f32 %v996, %v40
    %v999 = vmul.f32 %v997, %v745
    %v1000 = vmul.f32 %v997, %v998
    %1002 = vrot.lane.b32.xlu0 %v1000, 64
    %v1003 = vpop.permute.xlu0 %1002
    %v1005 = vadd.f32 %v999, %v1003
    %v1006 = vtanh.pop %v1005
    %v1007 = vmul.f32 %v998, %v1006
    %1009 = vrot.lane.b32.xlu0 %v1007, 64
    %v1010 = vpop.permute.xlu0 %1009
    %v1011 = vsel %vm78, %v1010, 0
    %1013 = vmatprep.subr.mxu0 0.0
    %1014 = vmatpush1.msra.mxu0 0.0
    %1015 = vmatprep.subr.mxu0 0.0
    %1016 = vmatpush1.msra.mxu0 0.0
    %1017 = vmatprep.subr.mxu0 0.0
    %1018 = vmatpush1.msra.mxu0 0.0
    %1019 = vmatprep.subr.mxu0 0.0
    %1020 = vmatpush1.msra.mxu0 0.0
    %1021 = vmatprep.subr.mxu0 0.0
    %1022 = vmatpush1.msra.mxu0 0.0
    %1023 = vmatprep.subr.mxu0 0.0
    %1024 = vmatpush1.msra.mxu0 0.0
    %1025 = vmatprep.subr.mxu0 0.0
    %1026 = vmatpush1.msra.mxu0 0.0
    %1027 = vmatprep.subr.mxu0 0.0
    %1028 = vmatpush1.msra.mxu0 0.0
    %1029 = vmatprep.subr.mxu0 %v476
    %1030 = vmatpush1.msra.mxu0 %v475
    %1031 = vmatprep.subr.mxu0 %v474
    %1032 = vmatpush1.msra.mxu0 %v473
    %1033 = vmatprep.subr.mxu0 %v472
    %1034 = vmatpush1.msra.mxu0 %v471
    %1035 = vmatprep.subr.mxu0 %v470
    %1036 = vmatpush1.msra.mxu0 %v469
    %1037 = vmatprep.subr.mxu0 %v468
    %1038 = vmatpush1.msra.mxu0 %v467
    %1039 = vmatprep.subr.mxu0 %v466
    %1040 = vmatpush1.msra.mxu0 %v465
    %1041 = vmatprep.subr.mxu0 %v464
    %1042 = vmatpush1.msra.mxu0 %v463
    %1043 = vmatprep.subr.mxu0 %v462
    %1044 = vmatpush1.msra.mxu0 %v461
    %1045 = vmatprep.subr.mxu0 0.0
    %1046 = vmatpush2.msra.mxu0 0.0
    %1047 = vmatprep.subr.mxu0 0.0
    %1048 = vmatpush2.msra.mxu0 0.0
    %1049 = vmatprep.subr.mxu0 0.0
    %1050 = vmatpush2.msra.mxu0 0.0
    %1051 = vmatprep.subr.mxu0 0.0
    %1052 = vmatpush2.msra.mxu0 0.0
    %1053 = vmatprep.subr.mxu0 0.0
    %1054 = vmatpush2.msra.mxu0 0.0
    %1055 = vmatprep.subr.mxu0 0.0
    %1056 = vmatpush2.msra.mxu0 0.0
    %1057 = vmatprep.subr.mxu0 0.0
    %1058 = vmatpush2.msra.mxu0 0.0
    %1059 = vmatprep.subr.mxu0 0.0
    %1060 = vmatpush2.msra.mxu0 0.0
    %1061 = vmatprep.subr.mxu0 0.0
    %1062 = vmatpush2.msra.mxu0 0.0
    %1063 = vmatprep.subr.mxu0 0.0
    %1064 = vmatpush2.msra.mxu0 0.0
    %1065 = vmatprep.subr.mxu0 0.0
    %1066 = vmatpush2.msra.mxu0 0.0
    %1067 = vmatprep.subr.mxu0 0.0
    %1068 = vmatpush2.msra.mxu0 0.0
    %1069 = vmatprep.subr.mxu0 0.0
    %1070 = vmatpush2.msra.mxu0 0.0
    %1071 = vmatprep.subr.mxu0 0.0
    %1072 = vmatpush2.msra.mxu0 0.0
    %1073 = vmatprep.subr.mxu0 0.0
    %1074 = vmatpush2.msra.mxu0 0.0
    %1075 = vmatprep.subr.mxu0 0.0
    %1076 = vmatpush2.msra.mxu0 0.0
    %1077 = vmatprep.mubr.f32.mxu0 0.0
    %1078 = vmatmul.mubr.f32.gmra.mxu0 %v1011
    %v1079 = vpop.f32.mrf.mxu0
    %v1080 = vadd.f32 %v983, %v1079
    %v1081 = vpop.f32.mrf.mxu0
    %v1082 = vadd.f32 %v985, %v1081
    %1083 = vdwg.mxu0
    %v1084 = vadd.f32 %v1080, %v557
    %v1085 = vadd.f32 %v1082, %v561
    %v1086 = vmul.f32 %v1084, %v37
    %v1087 = vmul.f32 %v1085, %v38
    %v1088 = vtanh.pop %v1086
    %v1089 = vtanh.pop %v1087
    %v1090 = vmul.f32 %v1088, %v37
    %v1091 = vmul.f32 %v1089, %v38
    %v1092 = vadd.f32 %v1090, %v39
    %v1093 = vadd.f32 %v1091, %v40
    %v1094 = vmul.f32 %v1092, %v840
    %v1095 = vmul.f32 %v1092, %v1093
    %1097 = vrot.lane.b32.xlu0 %v1095, 64
    %v1098 = vpop.permute.xlu0 %1097
    %v1100 = vadd.f32 %v1094, %v1098
    %v1101 = vtanh.pop %v1100
    %v1102 = vmul.f32 %v1093, %v1101
    %v1104 = vsel %vm78, %v1010, %v1102
    %1105 = vmatprep.subr.mxu0 %v295
    %1106 = vmatpush1.msra.mxu0 %v294
    %1107 = vmatprep.subr.mxu0 %v291
    %1108 = vmatpush1.msra.mxu0 %v290
    %1109 = vmatprep.subr.mxu0 %v287
    %1110 = vmatpush1.msra.mxu0 %v286
    %1111 = vmatprep.subr.mxu0 %v283
    %1112 = vmatpush1.msra.mxu0 %v282
    %1113 = vmatprep.subr.mxu0 %v279
    %1114 = vmatpush1.msra.mxu0 %v278
    %1115 = vmatprep.subr.mxu0 %v275
    %1116 = vmatpush1.msra.mxu0 %v274
    %1117 = vmatprep.subr.mxu0 %v271
    %1118 = vmatpush1.msra.mxu0 %v270
    %1119 = vmatprep.subr.mxu0 %v267
    %1120 = vmatpush1.msra.mxu0 %v266
    %1121 = vmatprep.subr.mxu0 %v263
    %1122 = vmatpush1.msra.mxu0 %v262
    %1123 = vmatprep.subr.mxu0 %v259
    %1124 = vmatpush1.msra.mxu0 %v258
    %1125 = vmatprep.subr.mxu0 %v255
    %1126 = vmatpush1.msra.mxu0 %v254
    %1127 = vmatprep.subr.mxu0 %v251
    %1128 = vmatpush1.msra.mxu0 %v250
    %1129 = vmatprep.subr.mxu0 %v247
    %1130 = vmatpush1.msra.mxu0 %v246
    %1131 = vmatprep.subr.mxu0 %v243
    %1132 = vmatpush1.msra.mxu0 %v242
    %1133 = vmatprep.subr.mxu0 %v239
    %1134 = vmatpush1.msra.mxu0 %v238
    %1135 = vmatprep.subr.mxu0 %v235
    %1136 = vmatpush1.msra.mxu0 %v234
    %1137 = vmatprep.subr.mxu0 0.0
    %1138 = vmatpush2.msra.mxu0 0.0
    %1139 = vmatprep.subr.mxu0 0.0
    %1140 = vmatpush2.msra.mxu0 0.0
    %1141 = vmatprep.subr.mxu0 0.0
    %1142 = vmatpush2.msra.mxu0 0.0
    %1143 = vmatprep.subr.mxu0 0.0
    %1144 = vmatpush2.msra.mxu0 0.0
    %1145 = vmatprep.subr.mxu0 0.0
    %1146 = vmatpush2.msra.mxu0 0.0
    %1147 = vmatprep.subr.mxu0 0.0
    %1148 = vmatpush2.msra.mxu0 0.0
    %1149 = vmatprep.subr.mxu0 0.0
    %1150 = vmatpush2.msra.mxu0 0.0
    %1151 = vmatprep.subr.mxu0 0.0
    %1152 = vmatpush2.msra.mxu0 0.0
    %1153 = vmatprep.subr.mxu0 0.0
    %1154 = vmatpush2.msra.mxu0 0.0
    %1155 = vmatprep.subr.mxu0 0.0
    %1156 = vmatpush2.msra.mxu0 0.0
    %1157 = vmatprep.subr.mxu0 0.0
    %1158 = vmatpush2.msra.mxu0 0.0
    %1159 = vmatprep.subr.mxu0 0.0
    %1160 = vmatpush2.msra.mxu0 0.0
    %1161 = vmatprep.subr.mxu0 0.0
    %1162 = vmatpush2.msra.mxu0 0.0
    %1163 = vmatprep.subr.mxu0 0.0
    %1164 = vmatpush2.msra.mxu0 0.0
    %1165 = vmatprep.subr.mxu0 0.0
    %1166 = vmatpush2.msra.mxu0 0.0
    %1167 = vmatprep.subr.mxu0 0.0
    %1168 = vmatpush2.msra.mxu0 0.0
    %1169 = vmatprep.mubr.f32.mxu0 0.0
    %1170 = vmatmul.mubr.f32.gmra.mxu0 %v1104
    %v1171 = vpop.f32.mrf.mxu0
    %v1172 = vadd.f32 0.0, %v1171
    %v1173 = vpop.f32.mrf.mxu0
    %v1174 = vadd.f32 0.0, %v1173
    %1175 = vdwg.mxu0
    %1176 = vmatprep.subr.mxu0 %v297
    %1177 = vmatpush1.msra.mxu0 %v296
    %1178 = vmatprep.subr.mxu0 %v293
    %1179 = vmatpush1.msra.mxu0 %v292
    %1180 = vmatprep.subr.mxu0 %v289
    %1181 = vmatpush1.msra.mxu0 %v288
    %1182 = vmatprep.subr.mxu0 %v285
    %1183 = vmatpush1.msra.mxu0 %v284
    %1184 = vmatprep.subr.mxu0 %v281
    %1185 = vmatpush1.msra.mxu0 %v280
    %1186 = vmatprep.subr.mxu0 %v277
    %1187 = vmatpush1.msra.mxu0 %v276
    %1188 = vmatprep.subr.mxu0 %v273
    %1189 = vmatpush1.msra.mxu0 %v272
    %1190 = vmatprep.subr.mxu0 %v269
    %1191 = vmatpush1.msra.mxu0 %v268
    %1192 = vmatprep.subr.mxu0 %v265
    %1193 = vmatpush1.msra.mxu0 %v264
    %1194 = vmatprep.subr.mxu0 %v261
    %1195 = vmatpush1.msra.mxu0 %v260
    %1196 = vmatprep.subr.mxu0 %v257
    %1197 = vmatpush1.msra.mxu0 %v256
    %1198 = vmatprep.subr.mxu0 %v253
    %1199 = vmatpush1.msra.mxu0 %v252
    %1200 = vmatprep.subr.mxu0 %v249
    %1201 = vmatpush1.msra.mxu0 %v248
    %1202 = vmatprep.subr.mxu0 %v245
    %1203 = vmatpush1.msra.mxu0 %v244
    %1204 = vmatprep.subr.mxu0 %v241
    %1205 = vmatpush1.msra.mxu0 %v240
    %1206 = vmatprep.subr.mxu0 %v237
    %1207 = vmatpush1.msra.mxu0 %v236
    %1208 = vmatprep.subr.mxu0 0.0
    %1209 = vmatpush2.msra.mxu0 0.0
    %1210 = vmatprep.subr.mxu0 0.0
    %1211 = vmatpush2.msra.mxu0 0.0
    %1212 = vmatprep.subr.mxu0 0.0
    %1213 = vmatpush2.msra.mxu0 0.0
    %1214 = vmatprep.subr.mxu0 0.0
    %1215 = vmatpush2.msra.mxu0 0.0
    %1216 = vmatprep.subr.mxu0 0.0
    %1217 = vmatpush2.msra.mxu0 0.0
    %1218 = vmatprep.subr.mxu0 0.0
    %1219 = vmatpush2.msra.mxu0 0.0
    %1220 = vmatprep.subr.mxu0 0.0
    %1221 = vmatpush2.msra.mxu0 0.0
    %1222 = vmatprep.subr.mxu0 0.0
    %1223 = vmatpush2.msra.mxu0 0.0
    %1224 = vmatprep.subr.mxu0 0.0
    %1225 = vmatpush2.msra.mxu0 0.0
    %1226 = vmatprep.subr.mxu0 0.0
    %1227 = vmatpush2.msra.mxu0 0.0
    %1228 = vmatprep.subr.mxu0 0.0
    %1229 = vmatpush2.msra.mxu0 0.0
    %1230 = vmatprep.subr.mxu0 0.0
    %1231 = vmatpush2.msra.mxu0 0.0
    %1232 = vmatprep.subr.mxu0 0.0
    %1233 = vmatpush2.msra.mxu0 0.0
    %1234 = vmatprep.subr.mxu0 0.0
    %1235 = vmatpush2.msra.mxu0 0.0
    %1236 = vmatprep.subr.mxu0 0.0
    %1237 = vmatpush2.msra.mxu0 0.0
    %1238 = vmatprep.subr.mxu0 0.0
    %1239 = vmatpush2.msra.mxu0 0.0
    %1240 = vmatprep.mubr.f32.mxu0 0.0
    %1241 = vmatmul.mubr.f32.gmra.mxu0 %v1104
    %v1242 = vpop.f32.mrf.mxu0
    %v1243 = vadd.f32 0.0, %v1242
    %v1244 = vpop.f32.mrf.mxu0
    %v1245 = vadd.f32 0.0, %v1244
    %1246 = vdwg.mxu0
    %v1247 = vld [vmem:[#allocation2 + $0x30] sm:$0xff]
    %v1248 = vld [vmem:[#allocation2 + $0x38] sm:$0xff]
    %v1249 = vadd.f32 %v1247, %v1172
    %v1250 = vadd.f32 %v1248, %v1174
    %v1251 = vmul.f32 %v1249, %v37
    %v1252 = vmul.f32 %v1250, %v38
    %v1253 = vtanh.pop %v1251
    %v1254 = vtanh.pop %v1252
    %v1255 = vmul.f32 %v1253, %v37
    %v1256 = vmul.f32 %v1254, %v38
    %v1257 = vadd.f32 %v1255, %v39
    %v1258 = vadd.f32 %v1256, %v40
    %v1259 = vmul.f32 %v1257, %v1005
    %v1260 = vmul.f32 %v1257, %v1258
    %1262 = vrot.lane.b32.xlu0 %v1260, 64
    %v1263 = vpop.permute.xlu0 %1262
    %v1265 = vadd.f32 %v1259, %v1263
    %v1266 = vtanh.pop %v1265
    %v1267 = vmul.f32 %v1258, %v1266
    %1269 = vrot.lane.b32.xlu0 %v1267, 64
    %v1270 = vpop.permute.xlu0 %1269
    %v1271 = vsel %vm78, %v1270, 0
    %1273 = vmatprep.subr.mxu0 0.0
    %1274 = vmatpush1.msra.mxu0 0.0
    %1275 = vmatprep.subr.mxu0 0.0
    %1276 = vmatpush1.msra.mxu0 0.0
    %1277 = vmatprep.subr.mxu0 0.0
    %1278 = vmatpush1.msra.mxu0 0.0
    %1279 = vmatprep.subr.mxu0 0.0
    %1280 = vmatpush1.msra.mxu0 0.0
    %1281 = vmatprep.subr.mxu0 0.0
    %1282 = vmatpush1.msra.mxu0 0.0
    %1283 = vmatprep.subr.mxu0 0.0
    %1284 = vmatpush1.msra.mxu0 0.0
    %1285 = vmatprep.subr.mxu0 0.0
    %1286 = vmatpush1.msra.mxu0 0.0
    %1287 = vmatprep.subr.mxu0 0.0
    %1288 = vmatpush1.msra.mxu0 0.0
    %1289 = vmatprep.subr.mxu0 %v476
    %1290 = vmatpush1.msra.mxu0 %v475
    %1291 = vmatprep.subr.mxu0 %v474
    %1292 = vmatpush1.msra.mxu0 %v473
    %1293 = vmatprep.subr.mxu0 %v472
    %1294 = vmatpush1.msra.mxu0 %v471
    %1295 = vmatprep.subr.mxu0 %v470
    %1296 = vmatpush1.msra.mxu0 %v469
    %1297 = vmatprep.subr.mxu0 %v468
    %1298 = vmatpush1.msra.mxu0 %v467
    %1299 = vmatprep.subr.mxu0 %v466
    %1300 = vmatpush1.msra.mxu0 %v465
    %1301 = vmatprep.subr.mxu0 %v464
    %1302 = vmatpush1.msra.mxu0 %v463
    %1303 = vmatprep.subr.mxu0 %v462
    %1304 = vmatpush1.msra.mxu0 %v461
    %1305 = vmatprep.subr.mxu0 0.0
    %1306 = vmatpush2.msra.mxu0 0.0
    %1307 = vmatprep.subr.mxu0 0.0
    %1308 = vmatpush2.msra.mxu0 0.0
    %1309 = vmatprep.subr.mxu0 0.0
    %1310 = vmatpush2.msra.mxu0 0.0
    %1311 = vmatprep.subr.mxu0 0.0
    %1312 = vmatpush2.msra.mxu0 0.0
    %1313 = vmatprep.subr.mxu0 0.0
    %1314 = vmatpush2.msra.mxu0 0.0
    %1315 = vmatprep.subr.mxu0 0.0
    %1316 = vmatpush2.msra.mxu0 0.0
    %1317 = vmatprep.subr.mxu0 0.0
    %1318 = vmatpush2.msra.mxu0 0.0
    %1319 = vmatprep.subr.mxu0 0.0
    %1320 = vmatpush2.msra.mxu0 0.0
    %1321 = vmatprep.subr.mxu0 0.0
    %1322 = vmatpush2.msra.mxu0 0.0
    %1323 = vmatprep.subr.mxu0 0.0
    %1324 = vmatpush2.msra.mxu0 0.0
    %1325 = vmatprep.subr.mxu0 0.0
    %1326 = vmatpush2.msra.mxu0 0.0
    %1327 = vmatprep.subr.mxu0 0.0
    %1328 = vmatpush2.msra.mxu0 0.0
    %1329 = vmatprep.subr.mxu0 0.0
    %1330 = vmatpush2.msra.mxu0 0.0
    %1331 = vmatprep.subr.mxu0 0.0
    %1332 = vmatpush2.msra.mxu0 0.0
    %1333 = vmatprep.subr.mxu0 0.0
    %1334 = vmatpush2.msra.mxu0 0.0
    %1335 = vmatprep.subr.mxu0 0.0
    %1336 = vmatpush2.msra.mxu0 0.0
    %1337 = vmatprep.mubr.f32.mxu0 0.0
    %1338 = vmatmul.mubr.f32.gmra.mxu0 %v1271
    %v1339 = vpop.f32.mrf.mxu0
    %v1340 = vadd.f32 %v1243, %v1339
    %v1341 = vpop.f32.mrf.mxu0
    %v1342 = vadd.f32 %v1245, %v1341
    %1343 = vdwg.mxu0
    %v1344 = vadd.f32 %v1340, %v557
    %v1345 = vadd.f32 %v1342, %v561
    %v1346 = vmul.f32 %v1344, %v37
    %v1347 = vmul.f32 %v1345, %v38
    %v1348 = vtanh.pop %v1346
    %v1349 = vtanh.pop %v1347
    %v1350 = vmul.f32 %v1348, %v37
    %v1351 = vmul.f32 %v1349, %v38
    %v1352 = vadd.f32 %v1350, %v39
    %v1353 = vadd.f32 %v1351, %v40
    %v1354 = vmul.f32 %v1352, %v1100
    %v1355 = vmul.f32 %v1352, %v1353
    %1357 = vrot.lane.b32.xlu0 %v1355, 64
    %v1358 = vpop.permute.xlu0 %1357
    %v1360 = vadd.f32 %v1354, %v1358
    %v1361 = vtanh.pop %v1360
    %v1362 = vmul.f32 %v1353, %v1361
    %v1364 = vsel %vm78, %v1270, %v1362
    %1365 = vmatprep.subr.mxu0 %v295
    %1366 = vmatpush1.msra.mxu0 %v294
    %1367 = vmatprep.subr.mxu0 %v291
    %1368 = vmatpush1.msra.mxu0 %v290
    %1369 = vmatprep.subr.mxu0 %v287
    %1370 = vmatpush1.msra.mxu0 %v286
    %1371 = vmatprep.subr.mxu0 %v283
    %1372 = vmatpush1.msra.mxu0 %v282
    %1373 = vmatprep.subr.mxu0 %v279
    %1374 = vmatpush1.msra.mxu0 %v278
    %1375 = vmatprep.subr.mxu0 %v275
    %1376 = vmatpush1.msra.mxu0 %v274
    %1377 = vmatprep.subr.mxu0 %v271
    %1378 = vmatpush1.msra.mxu0 %v270
    %1379 = vmatprep.subr.mxu0 %v267
    %1380 = vmatpush1.msra.mxu0 %v266
    %1381 = vmatprep.subr.mxu0 %v263
    %1382 = vmatpush1.msra.mxu0 %v262
    %1383 = vmatprep.subr.mxu0 %v259
    %1384 = vmatpush1.msra.mxu0 %v258
    %1385 = vmatprep.subr.mxu0 %v255
    %1386 = vmatpush1.msra.mxu0 %v254
    %1387 = vmatprep.subr.mxu0 %v251
    %1388 = vmatpush1.msra.mxu0 %v250
    %1389 = vmatprep.subr.mxu0 %v247
    %1390 = vmatpush1.msra.mxu0 %v246
    %1391 = vmatprep.subr.mxu0 %v243
    %1392 = vmatpush1.msra.mxu0 %v242
    %1393 = vmatprep.subr.mxu0 %v239
    %1394 = vmatpush1.msra.mxu0 %v238
    %1395 = vmatprep.subr.mxu0 %v235
    %1396 = vmatpush1.msra.mxu0 %v234
    %1397 = vmatprep.subr.mxu0 0.0
    %1398 = vmatpush2.msra.mxu0 0.0
    %1399 = vmatprep.subr.mxu0 0.0
    %1400 = vmatpush2.msra.mxu0 0.0
    %1401 = vmatprep.subr.mxu0 0.0
    %1402 = vmatpush2.msra.mxu0 0.0
    %1403 = vmatprep.subr.mxu0 0.0
    %1404 = vmatpush2.msra.mxu0 0.0
    %1405 = vmatprep.subr.mxu0 0.0
    %1406 = vmatpush2.msra.mxu0 0.0
    %1407 = vmatprep.subr.mxu0 0.0
    %1408 = vmatpush2.msra.mxu0 0.0
    %1409 = vmatprep.subr.mxu0 0.0
    %1410 = vmatpush2.msra.mxu0 0.0
    %1411 = vmatprep.subr.mxu0 0.0
    %1412 = vmatpush2.msra.mxu0 0.0
    %1413 = vmatprep.subr.mxu0 0.0
    %1414 = vmatpush2.msra.mxu0 0.0
    %1415 = vmatprep.subr.mxu0 0.0
    %1416 = vmatpush2.msra.mxu0 0.0
    %1417 = vmatprep.subr.mxu0 0.0
    %1418 = vmatpush2.msra.mxu0 0.0
    %1419 = vmatprep.subr.mxu0 0.0
    %1420 = vmatpush2.msra.mxu0 0.0
    %1421 = vmatprep.subr.mxu0 0.0
    %1422 = vmatpush2.msra.mxu0 0.0
    %1423 = vmatprep.subr.mxu0 0.0
    %1424 = vmatpush2.msra.mxu0 0.0
    %1425 = vmatprep.subr.mxu0 0.0
    %1426 = vmatpush2.msra.mxu0 0.0
    %1427 = vmatprep.subr.mxu0 0.0
    %1428 = vmatpush2.msra.mxu0 0.0
    %1429 = vmatprep.mubr.f32.mxu0 0.0
    %1430 = vmatmul.mubr.f32.gmra.mxu0 %v1364
    %v1431 = vpop.f32.mrf.mxu0
    %v1432 = vadd.f32 0.0, %v1431
    %v1433 = vpop.f32.mrf.mxu0
    %v1434 = vadd.f32 0.0, %v1433
    %1435 = vdwg.mxu0
    %1436 = vmatprep.subr.mxu0 %v297
    %1437 = vmatpush1.msra.mxu0 %v296
    %1438 = vmatprep.subr.mxu0 %v293
    %1439 = vmatpush1.msra.mxu0 %v292
    %1440 = vmatprep.subr.mxu0 %v289
    %1441 = vmatpush1.msra.mxu0 %v288
    %1442 = vmatprep.subr.mxu0 %v285
    %1443 = vmatpush1.msra.mxu0 %v284
    %1444 = vmatprep.subr.mxu0 %v281
    %1445 = vmatpush1.msra.mxu0 %v280
    %1446 = vmatprep.subr.mxu0 %v277
    %1447 = vmatpush1.msra.mxu0 %v276
    %1448 = vmatprep.subr.mxu0 %v273
    %1449 = vmatpush1.msra.mxu0 %v272
    %1450 = vmatprep.subr.mxu0 %v269
    %1451 = vmatpush1.msra.mxu0 %v268
    %1452 = vmatprep.subr.mxu0 %v265
    %1453 = vmatpush1.msra.mxu0 %v264
    %1454 = vmatprep.subr.mxu0 %v261
    %1455 = vmatpush1.msra.mxu0 %v260
    %1456 = vmatprep.subr.mxu0 %v257
    %1457 = vmatpush1.msra.mxu0 %v256
    %1458 = vmatprep.subr.mxu0 %v253
    %1459 = vmatpush1.msra.mxu0 %v252
    %1460 = vmatprep.subr.mxu0 %v249
    %1461 = vmatpush1.msra.mxu0 %v248
    %1462 = vmatprep.subr.mxu0 %v245
    %1463 = vmatpush1.msra.mxu0 %v244
    %1464 = vmatprep.subr.mxu0 %v241
    %1465 = vmatpush1.msra.mxu0 %v240
    %1466 = vmatprep.subr.mxu0 %v237
    %1467 = vmatpush1.msra.mxu0 %v236
    %1468 = vmatprep.subr.mxu0 0.0
    %1469 = vmatpush2.msra.mxu0 0.0
    %1470 = vmatprep.subr.mxu0 0.0
    %1471 = vmatpush2.msra.mxu0 0.0
    %1472 = vmatprep.subr.mxu0 0.0
    %1473 = vmatpush2.msra.mxu0 0.0
    %1474 = vmatprep.subr.mxu0 0.0
    %1475 = vmatpush2.msra.mxu0 0.0
    %1476 = vmatprep.subr.mxu0 0.0
    %1477 = vmatpush2.msra.mxu0 0.0
    %1478 = vmatprep.subr.mxu0 0.0
    %1479 = vmatpush2.msra.mxu0 0.0
    %1480 = vmatprep.subr.mxu0 0.0
    %1481 = vmatpush2.msra.mxu0 0.0
    %1482 = vmatprep.subr.mxu0 0.0
    %1483 = vmatpush2.msra.mxu0 0.0
    %1484 = vmatprep.subr.mxu0 0.0
    %1485 = vmatpush2.msra.mxu0 0.0
    %1486 = vmatprep.subr.mxu0 0.0
    %1487 = vmatpush2.msra.mxu0 0.0
    %1488 = vmatprep.subr.mxu0 0.0
    %1489 = vmatpush2.msra.mxu0 0.0
    %1490 = vmatprep.subr.mxu0 0.0
    %1491 = vmatpush2.msra.mxu0 0.0
    %1492 = vmatprep.subr.mxu0 0.0
    %1493 = vmatpush2.msra.mxu0 0.0
    %1494 = vmatprep.subr.mxu0 0.0
    %1495 = vmatpush2.msra.mxu0 0.0
    %1496 = vmatprep.subr.mxu0 0.0
    %1497 = vmatpush2.msra.mxu0 0.0
    %1498 = vmatprep.subr.mxu0 0.0
    %1499 = vmatpush2.msra.mxu0 0.0
    %1500 = vmatprep.mubr.f32.mxu0 0.0
    %1501 = vmatmul.mubr.f32.gmra.mxu0 %v1364
    %v1502 = vpop.f32.mrf.mxu0
    %v1503 = vadd.f32 0.0, %v1502
    %v1504 = vpop.f32.mrf.mxu0
    %v1505 = vadd.f32 0.0, %v1504
    %1506 = vdwg.mxu0
    %v1507 = vld [vmem:[#allocation2 + $0x40] sm:$0xff]
    %v1508 = vld [vmem:[#allocation2 + $0x48] sm:$0xff]
    %v1509 = vadd.f32 %v1507, %v1432
    %v1510 = vadd.f32 %v1508, %v1434
    %v1511 = vmul.f32 %v1509, %v37
    %v1512 = vmul.f32 %v1510, %v38
    %v1513 = vtanh.pop %v1511
    %v1514 = vtanh.pop %v1512
    %v1515 = vmul.f32 %v1513, %v37
    %v1516 = vmul.f32 %v1514, %v38
    %v1517 = vadd.f32 %v1515, %v39
    %v1518 = vadd.f32 %v1516, %v40
    %v1519 = vmul.f32 %v1517, %v1265
    %v1520 = vmul.f32 %v1517, %v1518
    %1522 = vrot.lane.b32.xlu0 %v1520, 64
    %v1523 = vpop.permute.xlu0 %1522
    %v1525 = vadd.f32 %v1519, %v1523
    %v1526 = vtanh.pop %v1525
    %v1527 = vmul.f32 %v1518, %v1526
    %1529 = vrot.lane.b32.xlu0 %v1527, 64
    %v1530 = vpop.permute.xlu0 %1529
    %v1531 = vsel %vm78, %v1530, 0
    %1533 = vmatprep.subr.mxu0 0.0
    %1534 = vmatpush1.msra.mxu0 0.0
    %1535 = vmatprep.subr.mxu0 0.0
    %1536 = vmatpush1.msra.mxu0 0.0
    %1537 = vmatprep.subr.mxu0 0.0
    %1538 = vmatpush1.msra.mxu0 0.0
    %1539 = vmatprep.subr.mxu0 0.0
    %1540 = vmatpush1.msra.mxu0 0.0
    %1541 = vmatprep.subr.mxu0 0.0
    %1542 = vmatpush1.msra.mxu0 0.0
    %1543 = vmatprep.subr.mxu0 0.0
    %1544 = vmatpush1.msra.mxu0 0.0
    %1545 = vmatprep.subr.mxu0 0.0
    %1546 = vmatpush1.msra.mxu0 0.0
    %1547 = vmatprep.subr.mxu0 0.0
    %1548 = vmatpush1.msra.mxu0 0.0
    %1549 = vmatprep.subr.mxu0 %v476
    %1550 = vmatpush1.msra.mxu0 %v475
    %1551 = vmatprep.subr.mxu0 %v474
    %1552 = vmatpush1.msra.mxu0 %v473
    %1553 = vmatprep.subr.mxu0 %v472
    %1554 = vmatpush1.msra.mxu0 %v471
    %1555 = vmatprep.subr.mxu0 %v470
    %1556 = vmatpush1.msra.mxu0 %v469
    %1557 = vmatprep.subr.mxu0 %v468
    %1558 = vmatpush1.msra.mxu0 %v467
    %1559 = vmatprep.subr.mxu0 %v466
    %1560 = vmatpush1.msra.mxu0 %v465
    %1561 = vmatprep.subr.mxu0 %v464
    %1562 = vmatpush1.msra.mxu0 %v463
    %1563 = vmatprep.subr.mxu0 %v462
    %1564 = vmatpush1.msra.mxu0 %v461
    %1565 = vmatprep.subr.mxu0 0.0
    %1566 = vmatpush2.msra.mxu0 0.0
    %1567 = vmatprep.subr.mxu0 0.0
    %1568 = vmatpush2.msra.mxu0 0.0
    %1569 = vmatprep.subr.mxu0 0.0
    %1570 = vmatpush2.msra.mxu0 0.0
    %1571 = vmatprep.subr.mxu0 0.0
    %1572 = vmatpush2.msra.mxu0 0.0
    %1573 = vmatprep.subr.mxu0 0.0
    %1574 = vmatpush2.msra.mxu0 0.0
    %1575 = vmatprep.subr.mxu0 0.0
    %1576 = vmatpush2.msra.mxu0 0.0
    %1577 = vmatprep.subr.mxu0 0.0
    %1578 = vmatpush2.msra.mxu0 0.0
    %1579 = vmatprep.subr.mxu0 0.0
    %1580 = vmatpush2.msra.mxu0 0.0
    %1581 = vmatprep.subr.mxu0 0.0
    %1582 = vmatpush2.msra.mxu0 0.0
    %1583 = vmatprep.subr.mxu0 0.0
    %1584 = vmatpush2.msra.mxu0 0.0
    %1585 = vmatprep.subr.mxu0 0.0
    %1586 = vmatpush2.msra.mxu0 0.0
    %1587 = vmatprep.subr.mxu0 0.0
    %1588 = vmatpush2.msra.mxu0 0.0
    %1589 = vmatprep.subr.mxu0 0.0
    %1590 = vmatpush2.msra.mxu0 0.0
    %1591 = vmatprep.subr.mxu0 0.0
    %1592 = vmatpush2.msra.mxu0 0.0
    %1593 = vmatprep.subr.mxu0 0.0
    %1594 = vmatpush2.msra.mxu0 0.0
    %1595 = vmatprep.subr.mxu0 0.0
    %1596 = vmatpush2.msra.mxu0 0.0
    %1597 = vmatprep.mubr.f32.mxu0 0.0
    %1598 = vmatmul.mubr.f32.gmra.mxu0 %v1531
    %v1599 = vpop.f32.mrf.mxu0
    %v1600 = vadd.f32 %v1503, %v1599
    %v1601 = vpop.f32.mrf.mxu0
    %v1602 = vadd.f32 %v1505, %v1601
    %1603 = vdwg.mxu0
    %v1604 = vadd.f32 %v1600, %v557
    %v1605 = vadd.f32 %v1602, %v561
    %v1606 = vmul.f32 %v1604, %v37
    %v1607 = vmul.f32 %v1605, %v38
    %v1608 = vtanh.pop %v1606
    %v1609 = vtanh.pop %v1607
    %v1610 = vmul.f32 %v1608, %v37
    %v1611 = vmul.f32 %v1609, %v38
    %v1612 = vadd.f32 %v1610, %v39
    %v1613 = vadd.f32 %v1611, %v40
    %v1614 = vmul.f32 %v1612, %v1360
    %v1615 = vmul.f32 %v1612, %v1613
    %1617 = vrot.lane.b32.xlu0 %v1615, 64
    %v1618 = vpop.permute.xlu0 %1617
    %v1620 = vadd.f32 %v1614, %v1618
    %v1621 = vtanh.pop %v1620
    %v1622 = vmul.f32 %v1613, %v1621
    %v1624 = vsel %vm78, %v1530, %v1622
    %1625 = vmatprep.subr.mxu0 %v295
    %1626 = vmatpush1.msra.mxu0 %v294
    %1627 = vmatprep.subr.mxu0 %v291
    %1628 = vmatpush1.msra.mxu0 %v290
    %1629 = vmatprep.subr.mxu0 %v287
    %1630 = vmatpush1.msra.mxu0 %v286
    %1631 = vmatprep.subr.mxu0 %v283
    %1632 = vmatpush1.msra.mxu0 %v282
    %1633 = vmatprep.subr.mxu0 %v279
    %1634 = vmatpush1.msra.mxu0 %v278
    %1635 = vmatprep.subr.mxu0 %v275
    %1636 = vmatpush1.msra.mxu0 %v274
    %1637 = vmatprep.subr.mxu0 %v271
    %1638 = vmatpush1.msra.mxu0 %v270
    %1639 = vmatprep.subr.mxu0 %v267
    %1640 = vmatpush1.msra.mxu0 %v266
    %1641 = vmatprep.subr.mxu0 %v263
    %1642 = vmatpush1.msra.mxu0 %v262
    %1643 = vmatprep.subr.mxu0 %v259
    %1644 = vmatpush1.msra.mxu0 %v258
    %1645 = vmatprep.subr.mxu0 %v255
    %1646 = vmatpush1.msra.mxu0 %v254
    %1647 = vmatprep.subr.mxu0 %v251
    %1648 = vmatpush1.msra.mxu0 %v250
    %1649 = vmatprep.subr.mxu0 %v247
    %1650 = vmatpush1.msra.mxu0 %v246
    %1651 = vmatprep.subr.mxu0 %v243
    %1652 = vmatpush1.msra.mxu0 %v242
    %1653 = vmatprep.subr.mxu0 %v239
    %1654 = vmatpush1.msra.mxu0 %v238
    %1655 = vmatprep.subr.mxu0 %v235
    %1656 = vmatpush1.msra.mxu0 %v234
    %1657 = vmatprep.subr.mxu0 0.0
    %1658 = vmatpush2.msra.mxu0 0.0
    %1659 = vmatprep.subr.mxu0 0.0
    %1660 = vmatpush2.msra.mxu0 0.0
    %1661 = vmatprep.subr.mxu0 0.0
    %1662 = vmatpush2.msra.mxu0 0.0
    %1663 = vmatprep.subr.mxu0 0.0
    %1664 = vmatpush2.msra.mxu0 0.0
    %1665 = vmatprep.subr.mxu0 0.0
    %1666 = vmatpush2.msra.mxu0 0.0
    %1667 = vmatprep.subr.mxu0 0.0
    %1668 = vmatpush2.msra.mxu0 0.0
    %1669 = vmatprep.subr.mxu0 0.0
    %1670 = vmatpush2.msra.mxu0 0.0
    %1671 = vmatprep.subr.mxu0 0.0
    %1672 = vmatpush2.msra.mxu0 0.0
    %1673 = vmatprep.subr.mxu0 0.0
    %1674 = vmatpush2.msra.mxu0 0.0
    %1675 = vmatprep.subr.mxu0 0.0
    %1676 = vmatpush2.msra.mxu0 0.0
    %1677 = vmatprep.subr.mxu0 0.0
    %1678 = vmatpush2.msra.mxu0 0.0
    %1679 = vmatprep.subr.mxu0 0.0
    %1680 = vmatpush2.msra.mxu0 0.0
    %1681 = vmatprep.subr.mxu0 0.0
    %1682 = vmatpush2.msra.mxu0 0.0
    %1683 = vmatprep.subr.mxu0 0.0
    %1684 = vmatpush2.msra.mxu0 0.0
    %1685 = vmatprep.subr.mxu0 0.0
    %1686 = vmatpush2.msra.mxu0 0.0
    %1687 = vmatprep.subr.mxu0 0.0
    %1688 = vmatpush2.msra.mxu0 0.0
    %1689 = vmatprep.mubr.f32.mxu0 0.0
    %1690 = vmatmul.mubr.f32.gmra.mxu0 %v1624
    %v1691 = vpop.f32.mrf.mxu0
    %v1692 = vadd.f32 0.0, %v1691
    %v1693 = vpop.f32.mrf.mxu0
    %v1694 = vadd.f32 0.0, %v1693
    %1695 = vdwg.mxu0
    %1696 = vmatprep.subr.mxu0 %v297
    %1697 = vmatpush1.msra.mxu0 %v296
    %1698 = vmatprep.subr.mxu0 %v293
    %1699 = vmatpush1.msra.mxu0 %v292
    %1700 = vmatprep.subr.mxu0 %v289
    %1701 = vmatpush1.msra.mxu0 %v288
    %1702 = vmatprep.subr.mxu0 %v285
    %1703 = vmatpush1.msra.mxu0 %v284
    %1704 = vmatprep.subr.mxu0 %v281
    %1705 = vmatpush1.msra.mxu0 %v280
    %1706 = vmatprep.subr.mxu0 %v277
    %1707 = vmatpush1.msra.mxu0 %v276
    %1708 = vmatprep.subr.mxu0 %v273
    %1709 = vmatpush1.msra.mxu0 %v272
    %1710 = vmatprep.subr.mxu0 %v269
    %1711 = vmatpush1.msra.mxu0 %v268
    %1712 = vmatprep.subr.mxu0 %v265
    %1713 = vmatpush1.msra.mxu0 %v264
    %1714 = vmatprep.subr.mxu0 %v261
    %1715 = vmatpush1.msra.mxu0 %v260
    %1716 = vmatprep.subr.mxu0 %v257
    %1717 = vmatpush1.msra.mxu0 %v256
    %1718 = vmatprep.subr.mxu0 %v253
    %1719 = vmatpush1.msra.mxu0 %v252
    %1720 = vmatprep.subr.mxu0 %v249
    %1721 = vmatpush1.msra.mxu0 %v248
    %1722 = vmatprep.subr.mxu0 %v245
    %1723 = vmatpush1.msra.mxu0 %v244
    %1724 = vmatprep.subr.mxu0 %v241
    %1725 = vmatpush1.msra.mxu0 %v240
    %1726 = vmatprep.subr.mxu0 %v237
    %1727 = vmatpush1.msra.mxu0 %v236
    %1728 = vmatprep.subr.mxu0 0.0
    %1729 = vmatpush2.msra.mxu0 0.0
    %1730 = vmatprep.subr.mxu0 0.0
    %1731 = vmatpush2.msra.mxu0 0.0
    %1732 = vmatprep.subr.mxu0 0.0
    %1733 = vmatpush2.msra.mxu0 0.0
    %1734 = vmatprep.subr.mxu0 0.0
    %1735 = vmatpush2.msra.mxu0 0.0
    %1736 = vmatprep.subr.mxu0 0.0
    %1737 = vmatpush2.msra.mxu0 0.0
    %1738 = vmatprep.subr.mxu0 0.0
    %1739 = vmatpush2.msra.mxu0 0.0
    %1740 = vmatprep.subr.mxu0 0.0
    %1741 = vmatpush2.msra.mxu0 0.0
    %1742 = vmatprep.subr.mxu0 0.0
    %1743 = vmatpush2.msra.mxu0 0.0
    %1744 = vmatprep.subr.mxu0 0.0
    %1745 = vmatpush2.msra.mxu0 0.0
    %1746 = vmatprep.subr.mxu0 0.0
    %1747 = vmatpush2.msra.mxu0 0.0
    %1748 = vmatprep.subr.mxu0 0.0
    %1749 = vmatpush2.msra.mxu0 0.0
    %1750 = vmatprep.subr.mxu0 0.0
    %1751 = vmatpush2.msra.mxu0 0.0
    %1752 = vmatprep.subr.mxu0 0.0
    %1753 = vmatpush2.msra.mxu0 0.0
    %1754 = vmatprep.subr.mxu0 0.0
    %1755 = vmatpush2.msra.mxu0 0.0
    %1756 = vmatprep.subr.mxu0 0.0
    %1757 = vmatpush2.msra.mxu0 0.0
    %1758 = vmatprep.subr.mxu0 0.0
    %1759 = vmatpush2.msra.mxu0 0.0
    %1760 = vmatprep.mubr.f32.mxu0 0.0
    %1761 = vmatmul.mubr.f32.gmra.mxu0 %v1624
    %v1762 = vpop.f32.mrf.mxu0
    %v1763 = vadd.f32 0.0, %v1762
    %v1764 = vpop.f32.mrf.mxu0
    %v1765 = vadd.f32 0.0, %v1764
    %1766 = vdwg.mxu0
    %v1767 = vld [vmem:[#allocation2 + $0x50] sm:$0xff]
    %v1768 = vld [vmem:[#allocation2 + $0x58] sm:$0xff]
    %v1769 = vadd.f32 %v1767, %v1692
    %v1770 = vadd.f32 %v1768, %v1694
    %v1771 = vmul.f32 %v1769, %v37
    %v1772 = vmul.f32 %v1770, %v38
    %v1773 = vtanh.pop %v1771
    %v1774 = vtanh.pop %v1772
    %v1775 = vmul.f32 %v1773, %v37
    %v1776 = vmul.f32 %v1774, %v38
    %v1777 = vadd.f32 %v1775, %v39
    %v1778 = vadd.f32 %v1776, %v40
    %v1779 = vmul.f32 %v1777, %v1525
    %v1780 = vmul.f32 %v1777, %v1778
    %1782 = vrot.lane.b32.xlu0 %v1780, 64
    %v1783 = vpop.permute.xlu0 %1782
    %v1785 = vadd.f32 %v1779, %v1783
    %v1786 = vtanh.pop %v1785
    %v1787 = vmul.f32 %v1778, %v1786
    %1789 = vrot.lane.b32.xlu0 %v1787, 64
    %v1790 = vpop.permute.xlu0 %1789
    %v1791 = vsel %vm78, %v1790, 0
    %1793 = vmatprep.subr.mxu0 0.0
    %1794 = vmatpush1.msra.mxu0 0.0
    %1795 = vmatprep.subr.mxu0 0.0
    %1796 = vmatpush1.msra.mxu0 0.0
    %1797 = vmatprep.subr.mxu0 0.0
    %1798 = vmatpush1.msra.mxu0 0.0
    %1799 = vmatprep.subr.mxu0 0.0
    %1800 = vmatpush1.msra.mxu0 0.0
    %1801 = vmatprep.subr.mxu0 0.0
    %1802 = vmatpush1.msra.mxu0 0.0
    %1803 = vmatprep.subr.mxu0 0.0
    %1804 = vmatpush1.msra.mxu0 0.0
    %1805 = vmatprep.subr.mxu0 0.0
    %1806 = vmatpush1.msra.mxu0 0.0
    %1807 = vmatprep.subr.mxu0 0.0
    %1808 = vmatpush1.msra.mxu0 0.0
    %1809 = vmatprep.subr.mxu0 %v476
    %1810 = vmatpush1.msra.mxu0 %v475
    %1811 = vmatprep.subr.mxu0 %v474
    %1812 = vmatpush1.msra.mxu0 %v473
    %1813 = vmatprep.subr.mxu0 %v472
    %1814 = vmatpush1.msra.mxu0 %v471
    %1815 = vmatprep.subr.mxu0 %v470
    %1816 = vmatpush1.msra.mxu0 %v469
    %1817 = vmatprep.subr.mxu0 %v468
    %1818 = vmatpush1.msra.mxu0 %v467
    %1819 = vmatprep.subr.mxu0 %v466
    %1820 = vmatpush1.msra.mxu0 %v465
    %1821 = vmatprep.subr.mxu0 %v464
    %1822 = vmatpush1.msra.mxu0 %v463
    %1823 = vmatprep.subr.mxu0 %v462
    %1824 = vmatpush1.msra.mxu0 %v461
    %1825 = vmatprep.subr.mxu0 0.0
    %1826 = vmatpush2.msra.mxu0 0.0
    %1827 = vmatprep.subr.mxu0 0.0
    %1828 = vmatpush2.msra.mxu0 0.0
    %1829 = vmatprep.subr.mxu0 0.0
    %1830 = vmatpush2.msra.mxu0 0.0
    %1831 = vmatprep.subr.mxu0 0.0
    %1832 = vmatpush2.msra.mxu0 0.0
    %1833 = vmatprep.subr.mxu0 0.0
    %1834 = vmatpush2.msra.mxu0 0.0
    %1835 = vmatprep.subr.mxu0 0.0
    %1836 = vmatpush2.msra.mxu0 0.0
    %1837 = vmatprep.subr.mxu0 0.0
    %1838 = vmatpush2.msra.mxu0 0.0
    %1839 = vmatprep.subr.mxu0 0.0
    %1840 = vmatpush2.msra.mxu0 0.0
    %1841 = vmatprep.subr.mxu0 0.0
    %1842 = vmatpush2.msra.mxu0 0.0
    %1843 = vmatprep.subr.mxu0 0.0
    %1844 = vmatpush2.msra.mxu0 0.0
    %1845 = vmatprep.subr.mxu0 0.0
    %1846 = vmatpush2.msra.mxu0 0.0
    %1847 = vmatprep.subr.mxu0 0.0
    %1848 = vmatpush2.msra.mxu0 0.0
    %1849 = vmatprep.subr.mxu0 0.0
    %1850 = vmatpush2.msra.mxu0 0.0
    %1851 = vmatprep.subr.mxu0 0.0
    %1852 = vmatpush2.msra.mxu0 0.0
    %1853 = vmatprep.subr.mxu0 0.0
    %1854 = vmatpush2.msra.mxu0 0.0
    %1855 = vmatprep.subr.mxu0 0.0
    %1856 = vmatpush2.msra.mxu0 0.0
    %1857 = vmatprep.mubr.f32.mxu0 0.0
    %1858 = vmatmul.mubr.f32.gmra.mxu0 %v1791
    %v1859 = vpop.f32.mrf.mxu0
    %v1860 = vadd.f32 %v1763, %v1859
    %v1861 = vpop.f32.mrf.mxu0
    %v1862 = vadd.f32 %v1765, %v1861
    %1863 = vdwg.mxu0
    %v1864 = vadd.f32 %v1860, %v557
    %v1865 = vadd.f32 %v1862, %v561
    %v1866 = vmul.f32 %v1864, %v37
    %v1867 = vmul.f32 %v1865, %v38
    %v1868 = vtanh.pop %v1866
    %v1869 = vtanh.pop %v1867
    %v1870 = vmul.f32 %v1868, %v37
    %v1871 = vmul.f32 %v1869, %v38
    %v1872 = vadd.f32 %v1870, %v39
    %v1873 = vadd.f32 %v1871, %v40
    %v1874 = vmul.f32 %v1872, %v1620
    %v1875 = vmul.f32 %v1872, %v1873
    %1877 = vrot.lane.b32.xlu0 %v1875, 64
    %v1878 = vpop.permute.xlu0 %1877
    %v1880 = vadd.f32 %v1874, %v1878
    %v1881 = vtanh.pop %v1880
    %v1882 = vmul.f32 %v1873, %v1881
    %v1884 = vsel %vm78, %v1790, %v1882
    %1885 = vmatprep.subr.mxu0 %v295
    %1886 = vmatpush1.msra.mxu0 %v294
    %1887 = vmatprep.subr.mxu0 %v291
    %1888 = vmatpush1.msra.mxu0 %v290
    %1889 = vmatprep.subr.mxu0 %v287
    %1890 = vmatpush1.msra.mxu0 %v286
    %1891 = vmatprep.subr.mxu0 %v283
    %1892 = vmatpush1.msra.mxu0 %v282
    %1893 = vmatprep.subr.mxu0 %v279
    %1894 = vmatpush1.msra.mxu0 %v278
    %1895 = vmatprep.subr.mxu0 %v275
    %1896 = vmatpush1.msra.mxu0 %v274
    %1897 = vmatprep.subr.mxu0 %v271
    %1898 = vmatpush1.msra.mxu0 %v270
    %1899 = vmatprep.subr.mxu0 %v267
    %1900 = vmatpush1.msra.mxu0 %v266
    %1901 = vmatprep.subr.mxu0 %v263
    %1902 = vmatpush1.msra.mxu0 %v262
    %1903 = vmatprep.subr.mxu0 %v259
    %1904 = vmatpush1.msra.mxu0 %v258
    %1905 = vmatprep.subr.mxu0 %v255
    %1906 = vmatpush1.msra.mxu0 %v254
    %1907 = vmatprep.subr.mxu0 %v251
    %1908 = vmatpush1.msra.mxu0 %v250
    %1909 = vmatprep.subr.mxu0 %v247
    %1910 = vmatpush1.msra.mxu0 %v246
    %1911 = vmatprep.subr.mxu0 %v243
    %1912 = vmatpush1.msra.mxu0 %v242
    %1913 = vmatprep.subr.mxu0 %v239
    %1914 = vmatpush1.msra.mxu0 %v238
    %1915 = vmatprep.subr.mxu0 %v235
    %1916 = vmatpush1.msra.mxu0 %v234
    %1917 = vmatprep.subr.mxu0 0.0
    %1918 = vmatpush2.msra.mxu0 0.0
    %1919 = vmatprep.subr.mxu0 0.0
    %1920 = vmatpush2.msra.mxu0 0.0
    %1921 = vmatprep.subr.mxu0 0.0
    %1922 = vmatpush2.msra.mxu0 0.0
    %1923 = vmatprep.subr.mxu0 0.0
    %1924 = vmatpush2.msra.mxu0 0.0
    %1925 = vmatprep.subr.mxu0 0.0
    %1926 = vmatpush2.msra.mxu0 0.0
    %1927 = vmatprep.subr.mxu0 0.0
    %1928 = vmatpush2.msra.mxu0 0.0
    %1929 = vmatprep.subr.mxu0 0.0
    %1930 = vmatpush2.msra.mxu0 0.0
    %1931 = vmatprep.subr.mxu0 0.0
    %1932 = vmatpush2.msra.mxu0 0.0
    %1933 = vmatprep.subr.mxu0 0.0
    %1934 = vmatpush2.msra.mxu0 0.0
    %1935 = vmatprep.subr.mxu0 0.0
    %1936 = vmatpush2.msra.mxu0 0.0
    %1937 = vmatprep.subr.mxu0 0.0
    %1938 = vmatpush2.msra.mxu0 0.0
    %1939 = vmatprep.subr.mxu0 0.0
    %1940 = vmatpush2.msra.mxu0 0.0
    %1941 = vmatprep.subr.mxu0 0.0
    %1942 = vmatpush2.msra.mxu0 0.0
    %1943 = vmatprep.subr.mxu0 0.0
    %1944 = vmatpush2.msra.mxu0 0.0
    %1945 = vmatprep.subr.mxu0 0.0
    %1946 = vmatpush2.msra.mxu0 0.0
    %1947 = vmatprep.subr.mxu0 0.0
    %1948 = vmatpush2.msra.mxu0 0.0
    %1949 = vmatprep.mubr.f32.mxu0 0.0
    %1950 = vmatmul.mubr.f32.gmra.mxu0 %v1884
    %v1951 = vpop.f32.mrf.mxu0
    %v1952 = vadd.f32 0.0, %v1951
    %v1953 = vpop.f32.mrf.mxu0
    %v1954 = vadd.f32 0.0, %v1953
    %1955 = vdwg.mxu0
    %1956 = vmatprep.subr.mxu0 %v297
    %1957 = vmatpush1.msra.mxu0 %v296
    %1958 = vmatprep.subr.mxu0 %v293
    %1959 = vmatpush1.msra.mxu0 %v292
    %1960 = vmatprep.subr.mxu0 %v289
    %1961 = vmatpush1.msra.mxu0 %v288
    %1962 = vmatprep.subr.mxu0 %v285
    %1963 = vmatpush1.msra.mxu0 %v284
    %1964 = vmatprep.subr.mxu0 %v281
    %1965 = vmatpush1.msra.mxu0 %v280
    %1966 = vmatprep.subr.mxu0 %v277
    %1967 = vmatpush1.msra.mxu0 %v276
    %1968 = vmatprep.subr.mxu0 %v273
    %1969 = vmatpush1.msra.mxu0 %v272
    %1970 = vmatprep.subr.mxu0 %v269
    %1971 = vmatpush1.msra.mxu0 %v268
    %1972 = vmatprep.subr.mxu0 %v265
    %1973 = vmatpush1.msra.mxu0 %v264
    %1974 = vmatprep.subr.mxu0 %v261
    %1975 = vmatpush1.msra.mxu0 %v260
    %1976 = vmatprep.subr.mxu0 %v257
    %1977 = vmatpush1.msra.mxu0 %v256
    %1978 = vmatprep.subr.mxu0 %v253
    %1979 = vmatpush1.msra.mxu0 %v252
    %1980 = vmatprep.subr.mxu0 %v249
    %1981 = vmatpush1.msra.mxu0 %v248
    %1982 = vmatprep.subr.mxu0 %v245
    %1983 = vmatpush1.msra.mxu0 %v244
    %1984 = vmatprep.subr.mxu0 %v241
    %1985 = vmatpush1.msra.mxu0 %v240
    %1986 = vmatprep.subr.mxu0 %v237
    %1987 = vmatpush1.msra.mxu0 %v236
    %1988 = vmatprep.subr.mxu0 0.0
    %1989 = vmatpush2.msra.mxu0 0.0
    %1990 = vmatprep.subr.mxu0 0.0
    %1991 = vmatpush2.msra.mxu0 0.0
    %1992 = vmatprep.subr.mxu0 0.0
    %1993 = vmatpush2.msra.mxu0 0.0
    %1994 = vmatprep.subr.mxu0 0.0
    %1995 = vmatpush2.msra.mxu0 0.0
    %1996 = vmatprep.subr.mxu0 0.0
    %1997 = vmatpush2.msra.mxu0 0.0
    %1998 = vmatprep.subr.mxu0 0.0
    %1999 = vmatpush2.msra.mxu0 0.0
    %2000 = vmatprep.subr.mxu0 0.0
    %2001 = vmatpush2.msra.mxu0 0.0
    %2002 = vmatprep.subr.mxu0 0.0
    %2003 = vmatpush2.msra.mxu0 0.0
    %2004 = vmatprep.subr.mxu0 0.0
    %2005 = vmatpush2.msra.mxu0 0.0
    %2006 = vmatprep.subr.mxu0 0.0
    %2007 = vmatpush2.msra.mxu0 0.0
    %2008 = vmatprep.subr.mxu0 0.0
    %2009 = vmatpush2.msra.mxu0 0.0
    %2010 = vmatprep.subr.mxu0 0.0
    %2011 = vmatpush2.msra.mxu0 0.0
    %2012 = vmatprep.subr.mxu0 0.0
    %2013 = vmatpush2.msra.mxu0 0.0
    %2014 = vmatprep.subr.mxu0 0.0
    %2015 = vmatpush2.msra.mxu0 0.0
    %2016 = vmatprep.subr.mxu0 0.0
    %2017 = vmatpush2.msra.mxu0 0.0
    %2018 = vmatprep.subr.mxu0 0.0
    %2019 = vmatpush2.msra.mxu0 0.0
    %2020 = vmatprep.mubr.f32.mxu0 0.0
    %2021 = vmatmul.mubr.f32.gmra.mxu0 %v1884
    %v2022 = vpop.f32.mrf.mxu0
    %v2023 = vadd.f32 0.0, %v2022
    %v2024 = vpop.f32.mrf.mxu0
    %v2025 = vadd.f32 0.0, %v2024
    %2026 = vdwg.mxu0
    %v2027 = vld [vmem:[#allocation2 + $0x60] sm:$0xff]
    %v2028 = vld [vmem:[#allocation2 + $0x68] sm:$0xff]
    %v2029 = vadd.f32 %v2027, %v1952
    %v2030 = vadd.f32 %v2028, %v1954
    %v2031 = vmul.f32 %v2029, %v37
    %v2032 = vmul.f32 %v2030, %v38
    %v2033 = vtanh.pop %v2031
    %v2034 = vtanh.pop %v2032
    %v2035 = vmul.f32 %v2033, %v37
    %v2036 = vmul.f32 %v2034, %v38
    %v2037 = vadd.f32 %v2035, %v39
    %v2038 = vadd.f32 %v2036, %v40
    %v2039 = vmul.f32 %v2037, %v1785
    %v2040 = vmul.f32 %v2037, %v2038
    %2042 = vrot.lane.b32.xlu0 %v2040, 64
    %v2043 = vpop.permute.xlu0 %2042
    %v2045 = vadd.f32 %v2039, %v2043
    %v2046 = vtanh.pop %v2045
    %v2047 = vmul.f32 %v2038, %v2046
    %2049 = vrot.lane.b32.xlu0 %v2047, 64
    %v2050 = vpop.permute.xlu0 %2049
    %v2051 = vsel %vm78, %v2050, 0
    %2053 = vmatprep.subr.mxu0 0.0
    %2054 = vmatpush1.msra.mxu0 0.0
    %2055 = vmatprep.subr.mxu0 0.0
    %2056 = vmatpush1.msra.mxu0 0.0
    %2057 = vmatprep.subr.mxu0 0.0
    %2058 = vmatpush1.msra.mxu0 0.0
    %2059 = vmatprep.subr.mxu0 0.0
    %2060 = vmatpush1.msra.mxu0 0.0
    %2061 = vmatprep.subr.mxu0 0.0
    %2062 = vmatpush1.msra.mxu0 0.0
    %2063 = vmatprep.subr.mxu0 0.0
    %2064 = vmatpush1.msra.mxu0 0.0
    %2065 = vmatprep.subr.mxu0 0.0
    %2066 = vmatpush1.msra.mxu0 0.0
    %2067 = vmatprep.subr.mxu0 0.0
    %2068 = vmatpush1.msra.mxu0 0.0
    %2069 = vmatprep.subr.mxu0 %v476
    %2070 = vmatpush1.msra.mxu0 %v475
    %2071 = vmatprep.subr.mxu0 %v474
    %2072 = vmatpush1.msra.mxu0 %v473
    %2073 = vmatprep.subr.mxu0 %v472
    %2074 = vmatpush1.msra.mxu0 %v471
    %2075 = vmatprep.subr.mxu0 %v470
    %2076 = vmatpush1.msra.mxu0 %v469
    %2077 = vmatprep.subr.mxu0 %v468
    %2078 = vmatpush1.msra.mxu0 %v467
    %2079 = vmatprep.subr.mxu0 %v466
    %2080 = vmatpush1.msra.mxu0 %v465
    %2081 = vmatprep.subr.mxu0 %v464
    %2082 = vmatpush1.msra.mxu0 %v463
    %2083 = vmatprep.subr.mxu0 %v462
    %2084 = vmatpush1.msra.mxu0 %v461
    %2085 = vmatprep.subr.mxu0 0.0
    %2086 = vmatpush2.msra.mxu0 0.0
    %2087 = vmatprep.subr.mxu0 0.0
    %2088 = vmatpush2.msra.mxu0 0.0
    %2089 = vmatprep.subr.mxu0 0.0
    %2090 = vmatpush2.msra.mxu0 0.0
    %2091 = vmatprep.subr.mxu0 0.0
    %2092 = vmatpush2.msra.mxu0 0.0
    %2093 = vmatprep.subr.mxu0 0.0
    %2094 = vmatpush2.msra.mxu0 0.0
    %2095 = vmatprep.subr.mxu0 0.0
    %2096 = vmatpush2.msra.mxu0 0.0
    %2097 = vmatprep.subr.mxu0 0.0
    %2098 = vmatpush2.msra.mxu0 0.0
    %2099 = vmatprep.subr.mxu0 0.0
    %2100 = vmatpush2.msra.mxu0 0.0
    %2101 = vmatprep.subr.mxu0 0.0
    %2102 = vmatpush2.msra.mxu0 0.0
    %2103 = vmatprep.subr.mxu0 0.0
    %2104 = vmatpush2.msra.mxu0 0.0
    %2105 = vmatprep.subr.mxu0 0.0
    %2106 = vmatpush2.msra.mxu0 0.0
    %2107 = vmatprep.subr.mxu0 0.0
    %2108 = vmatpush2.msra.mxu0 0.0
    %2109 = vmatprep.subr.mxu0 0.0
    %2110 = vmatpush2.msra.mxu0 0.0
    %2111 = vmatprep.subr.mxu0 0.0
    %2112 = vmatpush2.msra.mxu0 0.0
    %2113 = vmatprep.subr.mxu0 0.0
    %2114 = vmatpush2.msra.mxu0 0.0
    %2115 = vmatprep.subr.mxu0 0.0
    %2116 = vmatpush2.msra.mxu0 0.0
    %2117 = vmatprep.mubr.f32.mxu0 0.0
    %2118 = vmatmul.mubr.f32.gmra.mxu0 %v2051
    %v2119 = vpop.f32.mrf.mxu0
    %v2120 = vadd.f32 %v2023, %v2119
    %v2121 = vpop.f32.mrf.mxu0
    %v2122 = vadd.f32 %v2025, %v2121
    %2123 = vdwg.mxu0
    %v2124 = vadd.f32 %v2120, %v557
    %v2125 = vadd.f32 %v2122, %v561
    %v2126 = vmul.f32 %v2124, %v37
    %v2127 = vmul.f32 %v2125, %v38
    %v2128 = vtanh.pop %v2126
    %v2129 = vtanh.pop %v2127
    %v2130 = vmul.f32 %v2128, %v37
    %v2131 = vmul.f32 %v2129, %v38
    %v2132 = vadd.f32 %v2130, %v39
    %v2133 = vadd.f32 %v2131, %v40
    %v2134 = vmul.f32 %v2132, %v1880
    %v2135 = vmul.f32 %v2132, %v2133
    %2137 = vrot.lane.b32.xlu0 %v2135, 64
    %v2138 = vpop.permute.xlu0 %2137
    %v2140 = vadd.f32 %v2134, %v2138
    %v2141 = vtanh.pop %v2140
    %v2142 = vmul.f32 %v2133, %v2141
    %v2144 = vsel %vm78, %v2050, %v2142
    %2145 = vmatprep.subr.mxu0 %v295
    %2146 = vmatpush1.msra.mxu0 %v294
    %2147 = vmatprep.subr.mxu0 %v291
    %2148 = vmatpush1.msra.mxu0 %v290
    %2149 = vmatprep.subr.mxu0 %v287
    %2150 = vmatpush1.msra.mxu0 %v286
    %2151 = vmatprep.subr.mxu0 %v283
    %2152 = vmatpush1.msra.mxu0 %v282
    %2153 = vmatprep.subr.mxu0 %v279
    %2154 = vmatpush1.msra.mxu0 %v278
    %2155 = vmatprep.subr.mxu0 %v275
    %2156 = vmatpush1.msra.mxu0 %v274
    %2157 = vmatprep.subr.mxu0 %v271
    %2158 = vmatpush1.msra.mxu0 %v270
    %2159 = vmatprep.subr.mxu0 %v267
    %2160 = vmatpush1.msra.mxu0 %v266
    %2161 = vmatprep.subr.mxu0 %v263
    %2162 = vmatpush1.msra.mxu0 %v262
    %2163 = vmatprep.subr.mxu0 %v259
    %2164 = vmatpush1.msra.mxu0 %v258
    %2165 = vmatprep.subr.mxu0 %v255
    %2166 = vmatpush1.msra.mxu0 %v254
    %2167 = vmatprep.subr.mxu0 %v251
    %2168 = vmatpush1.msra.mxu0 %v250
    %2169 = vmatprep.subr.mxu0 %v247
    %2170 = vmatpush1.msra.mxu0 %v246
    %2171 = vmatprep.subr.mxu0 %v243
    %2172 = vmatpush1.msra.mxu0 %v242
    %2173 = vmatprep.subr.mxu0 %v239
    %2174 = vmatpush1.msra.mxu0 %v238
    %2175 = vmatprep.subr.mxu0 %v235
    %2176 = vmatpush1.msra.mxu0 %v234
    %2177 = vmatprep.subr.mxu0 0.0
    %2178 = vmatpush2.msra.mxu0 0.0
    %2179 = vmatprep.subr.mxu0 0.0
    %2180 = vmatpush2.msra.mxu0 0.0
    %2181 = vmatprep.subr.mxu0 0.0
    %2182 = vmatpush2.msra.mxu0 0.0
    %2183 = vmatprep.subr.mxu0 0.0
    %2184 = vmatpush2.msra.mxu0 0.0
    %2185 = vmatprep.subr.mxu0 0.0
    %2186 = vmatpush2.msra.mxu0 0.0
    %2187 = vmatprep.subr.mxu0 0.0
    %2188 = vmatpush2.msra.mxu0 0.0
    %2189 = vmatprep.subr.mxu0 0.0
    %2190 = vmatpush2.msra.mxu0 0.0
    %2191 = vmatprep.subr.mxu0 0.0
    %2192 = vmatpush2.msra.mxu0 0.0
    %2193 = vmatprep.subr.mxu0 0.0
    %2194 = vmatpush2.msra.mxu0 0.0
    %2195 = vmatprep.subr.mxu0 0.0
    %2196 = vmatpush2.msra.mxu0 0.0
    %2197 = vmatprep.subr.mxu0 0.0
    %2198 = vmatpush2.msra.mxu0 0.0
    %2199 = vmatprep.subr.mxu0 0.0
    %2200 = vmatpush2.msra.mxu0 0.0
    %2201 = vmatprep.subr.mxu0 0.0
    %2202 = vmatpush2.msra.mxu0 0.0
    %2203 = vmatprep.subr.mxu0 0.0
    %2204 = vmatpush2.msra.mxu0 0.0
    %2205 = vmatprep.subr.mxu0 0.0
    %2206 = vmatpush2.msra.mxu0 0.0
    %2207 = vmatprep.subr.mxu0 0.0
    %2208 = vmatpush2.msra.mxu0 0.0
    %2209 = vmatprep.mubr.f32.mxu0 0.0
    %2210 = vmatmul.mubr.f32.gmra.mxu0 %v2144
    %v2211 = vpop.f32.mrf.mxu0
    %v2212 = vadd.f32 0.0, %v2211
    %v2213 = vpop.f32.mrf.mxu0
    %v2214 = vadd.f32 0.0, %v2213
    %2215 = vdwg.mxu0
    %2216 = vmatprep.subr.mxu0 %v297
    %2217 = vmatpush1.msra.mxu0 %v296
    %2218 = vmatprep.subr.mxu0 %v293
    %2219 = vmatpush1.msra.mxu0 %v292
    %2220 = vmatprep.subr.mxu0 %v289
    %2221 = vmatpush1.msra.mxu0 %v288
    %2222 = vmatprep.subr.mxu0 %v285
    %2223 = vmatpush1.msra.mxu0 %v284
    %2224 = vmatprep.subr.mxu0 %v281
    %2225 = vmatpush1.msra.mxu0 %v280
    %2226 = vmatprep.subr.mxu0 %v277
    %2227 = vmatpush1.msra.mxu0 %v276
    %2228 = vmatprep.subr.mxu0 %v273
    %2229 = vmatpush1.msra.mxu0 %v272
    %2230 = vmatprep.subr.mxu0 %v269
    %2231 = vmatpush1.msra.mxu0 %v268
    %2232 = vmatprep.subr.mxu0 %v265
    %2233 = vmatpush1.msra.mxu0 %v264
    %2234 = vmatprep.subr.mxu0 %v261
    %2235 = vmatpush1.msra.mxu0 %v260
    %2236 = vmatprep.subr.mxu0 %v257
    %2237 = vmatpush1.msra.mxu0 %v256
    %2238 = vmatprep.subr.mxu0 %v253
    %2239 = vmatpush1.msra.mxu0 %v252
    %2240 = vmatprep.subr.mxu0 %v249
    %2241 = vmatpush1.msra.mxu0 %v248
    %2242 = vmatprep.subr.mxu0 %v245
    %2243 = vmatpush1.msra.mxu0 %v244
    %2244 = vmatprep.subr.mxu0 %v241
    %2245 = vmatpush1.msra.mxu0 %v240
    %2246 = vmatprep.subr.mxu0 %v237
    %2247 = vmatpush1.msra.mxu0 %v236
    %2248 = vmatprep.subr.mxu0 0.0
    %2249 = vmatpush2.msra.mxu0 0.0
    %2250 = vmatprep.subr.mxu0 0.0
    %2251 = vmatpush2.msra.mxu0 0.0
    %2252 = vmatprep.subr.mxu0 0.0
    %2253 = vmatpush2.msra.mxu0 0.0
    %2254 = vmatprep.subr.mxu0 0.0
    %2255 = vmatpush2.msra.mxu0 0.0
    %2256 = vmatprep.subr.mxu0 0.0
    %2257 = vmatpush2.msra.mxu0 0.0
    %2258 = vmatprep.subr.mxu0 0.0
    %2259 = vmatpush2.msra.mxu0 0.0
    %2260 = vmatprep.subr.mxu0 0.0
    %2261 = vmatpush2.msra.mxu0 0.0
    %2262 = vmatprep.subr.mxu0 0.0
    %2263 = vmatpush2.msra.mxu0 0.0
    %2264 = vmatprep.subr.mxu0 0.0
    %2265 = vmatpush2.msra.mxu0 0.0
    %2266 = vmatprep.subr.mxu0 0.0
    %2267 = vmatpush2.msra.mxu0 0.0
    %2268 = vmatprep.subr.mxu0 0.0
    %2269 = vmatpush2.msra.mxu0 0.0
    %2270 = vmatprep.subr.mxu0 0.0
    %2271 = vmatpush2.msra.mxu0 0.0
    %2272 = vmatprep.subr.mxu0 0.0
    %2273 = vmatpush2.msra.mxu0 0.0
    %2274 = vmatprep.subr.mxu0 0.0
    %2275 = vmatpush2.msra.mxu0 0.0
    %2276 = vmatprep.subr.mxu0 0.0
    %2277 = vmatpush2.msra.mxu0 0.0
    %2278 = vmatprep.subr.mxu0 0.0
    %2279 = vmatpush2.msra.mxu0 0.0
    %2280 = vmatprep.mubr.f32.mxu0 0.0
    %2281 = vmatmul.mubr.f32.gmra.mxu0 %v2144
    %v2282 = vpop.f32.mrf.mxu0
    %v2283 = vadd.f32 0.0, %v2282
    %v2284 = vpop.f32.mrf.mxu0
    %v2285 = vadd.f32 0.0, %v2284
    %2286 = vdwg.mxu0
    %v2287 = vld [vmem:[#allocation2 + $0x70] sm:$0xff]
    %v2288 = vld [vmem:[#allocation2 + $0x78] sm:$0xff]
    %v2289 = vadd.f32 %v2287, %v2212
    %v2290 = vadd.f32 %v2288, %v2214
    %v2291 = vmul.f32 %v2289, %v37
    %v2292 = vmul.f32 %v2290, %v38
    %v2293 = vtanh.pop %v2291
    %v2294 = vtanh.pop %v2292
    %v2295 = vmul.f32 %v2293, %v37
    %v2296 = vmul.f32 %v2294, %v38
    %v2297 = vadd.f32 %v2295, %v39
    %v2298 = vadd.f32 %v2296, %v40
    %v2299 = vmul.f32 %v2297, %v2045
    %v2300 = vmul.f32 %v2297, %v2298
    %2302 = vrot.lane.b32.xlu0 %v2300, 64
    %v2303 = vpop.permute.xlu0 %2302
    %v2305 = vadd.f32 %v2299, %v2303
    %v2306 = vtanh.pop %v2305
    %v2307 = vmul.f32 %v2298, %v2306
    %2309 = vrot.lane.b32.xlu0 %v2307, 64
    %v2310 = vpop.permute.xlu0 %2309
    %v2311 = vsel %vm78, %v2310, 0
    %2313 = vmatprep.subr.mxu0 0.0
    %2314 = vmatpush1.msra.mxu0 0.0
    %2315 = vmatprep.subr.mxu0 0.0
    %2316 = vmatpush1.msra.mxu0 0.0
    %2317 = vmatprep.subr.mxu0 0.0
    %2318 = vmatpush1.msra.mxu0 0.0
    %2319 = vmatprep.subr.mxu0 0.0
    %2320 = vmatpush1.msra.mxu0 0.0
    %2321 = vmatprep.subr.mxu0 0.0
    %2322 = vmatpush1.msra.mxu0 0.0
    %2323 = vmatprep.subr.mxu0 0.0
    %2324 = vmatpush1.msra.mxu0 0.0
    %2325 = vmatprep.subr.mxu0 0.0
    %2326 = vmatpush1.msra.mxu0 0.0
    %2327 = vmatprep.subr.mxu0 0.0
    %2328 = vmatpush1.msra.mxu0 0.0
    %2329 = vmatprep.subr.mxu0 %v476
    %2330 = vmatpush1.msra.mxu0 %v475
    %2331 = vmatprep.subr.mxu0 %v474
    %2332 = vmatpush1.msra.mxu0 %v473
    %2333 = vmatprep.subr.mxu0 %v472
    %2334 = vmatpush1.msra.mxu0 %v471
    %2335 = vmatprep.subr.mxu0 %v470
    %2336 = vmatpush1.msra.mxu0 %v469
    %2337 = vmatprep.subr.mxu0 %v468
    %2338 = vmatpush1.msra.mxu0 %v467
    %2339 = vmatprep.subr.mxu0 %v466
    %2340 = vmatpush1.msra.mxu0 %v465
    %2341 = vmatprep.subr.mxu0 %v464
    %2342 = vmatpush1.msra.mxu0 %v463
    %2343 = vmatprep.subr.mxu0 %v462
    %2344 = vmatpush1.msra.mxu0 %v461
    %2345 = vmatprep.subr.mxu0 0.0
    %2346 = vmatpush2.msra.mxu0 0.0
    %2347 = vmatprep.subr.mxu0 0.0
    %2348 = vmatpush2.msra.mxu0 0.0
    %2349 = vmatprep.subr.mxu0 0.0
    %2350 = vmatpush2.msra.mxu0 0.0
    %2351 = vmatprep.subr.mxu0 0.0
    %2352 = vmatpush2.msra.mxu0 0.0
    %2353 = vmatprep.subr.mxu0 0.0
    %2354 = vmatpush2.msra.mxu0 0.0
    %2355 = vmatprep.subr.mxu0 0.0
    %2356 = vmatpush2.msra.mxu0 0.0
    %2357 = vmatprep.subr.mxu0 0.0
    %2358 = vmatpush2.msra.mxu0 0.0
    %2359 = vmatprep.subr.mxu0 0.0
    %2360 = vmatpush2.msra.mxu0 0.0
    %2361 = vmatprep.subr.mxu0 0.0
    %2362 = vmatpush2.msra.mxu0 0.0
    %2363 = vmatprep.subr.mxu0 0.0
    %2364 = vmatpush2.msra.mxu0 0.0
    %2365 = vmatprep.subr.mxu0 0.0
    %2366 = vmatpush2.msra.mxu0 0.0
    %2367 = vmatprep.subr.mxu0 0.0
    %2368 = vmatpush2.msra.mxu0 0.0
    %2369 = vmatprep.subr.mxu0 0.0
    %2370 = vmatpush2.msra.mxu0 0.0
    %2371 = vmatprep.subr.mxu0 0.0
    %2372 = vmatpush2.msra.mxu0 0.0
    %2373 = vmatprep.subr.mxu0 0.0
    %2374 = vmatpush2.msra.mxu0 0.0
    %2375 = vmatprep.subr.mxu0 0.0
    %2376 = vmatpush2.msra.mxu0 0.0
    %2377 = vmatprep.mubr.f32.mxu0 0.0
    %2378 = vmatmul.mubr.f32.gmra.mxu0 %v2311
    %v2379 = vpop.f32.mrf.mxu0
    %v2380 = vadd.f32 %v2283, %v2379
    %v2381 = vpop.f32.mrf.mxu0
    %v2382 = vadd.f32 %v2285, %v2381
    %2383 = vdwg.mxu0
    %v2384 = vadd.f32 %v2380, %v557
    %v2385 = vadd.f32 %v2382, %v561
    %v2386 = vmul.f32 %v2384, %v37
    %v2387 = vmul.f32 %v2385, %v38
    %v2388 = vtanh.pop %v2386
    %v2389 = vtanh.pop %v2387
    %v2390 = vmul.f32 %v2388, %v37
    %v2391 = vmul.f32 %v2389, %v38
    %v2392 = vadd.f32 %v2390, %v39
    %v2393 = vadd.f32 %v2391, %v40
    %v2394 = vmul.f32 %v2392, %v2140
    %v2395 = vmul.f32 %v2392, %v2393
    %2397 = vrot.lane.b32.xlu0 %v2395, 64
    %v2398 = vpop.permute.xlu0 %2397
    %v2400 = vadd.f32 %v2394, %v2398
    %v2401 = vtanh.pop %v2400
    %v2402 = vmul.f32 %v2393, %v2401
    %vm2403 = vcmp.lt.s32.totalorder %v29, 32
    %2405 = vrot.lane.b32.xlu0 %v2402, 64
    %v2406 = vpop.permute.xlu0 %2405
    %2409 = vrot.lane.b32.xlu0 %v1882, 64
    %v2410 = vpop.permute.xlu0 %2409
    %v2412 = vsel %vm2403, %v2406, %v2410
    %v2413 = vmax.f32 %v2412, 0.0
    %v2414 = vld [vmem:[%s1 + $0x100] sm:$0xff]
    %v2415 = vld [vmem:[%s1 + $0x108] sm:$0xff]
    %v2416 = vld [vmem:[%s1 + $0x110] sm:$0xff]
    %v2417 = vld [vmem:[%s1 + $0x118] sm:$0xff]
    %v2418 = vld [vmem:[%s1 + $0x120] sm:$0xff]
    %v2419 = vld [vmem:[%s1 + $0x128] sm:$0xff]
    %v2420 = vld [vmem:[%s1 + $0x130] sm:$0xff]
    %v2421 = vld [vmem:[%s1 + $0x138] sm:$0xff]
    %v2422 = vld [vmem:[%s1 + $0x140] sm:$0xff]
    %v2423 = vld [vmem:[%s1 + $0x148] sm:$0xff]
    %v2424 = vld [vmem:[%s1 + $0x150] sm:$0xff]
    %v2425 = vld [vmem:[%s1 + $0x158] sm:$0xff]
    %v2426 = vld [vmem:[%s1 + $0x160] sm:$0xff]
    %v2427 = vld [vmem:[%s1 + $0x168] sm:$0xff]
    %v2428 = vld [vmem:[%s1 + $0x170] sm:$0xff]
    %v2429 = vld [vmem:[%s1 + $0x178] sm:$0xff]
    %s2430 = scalar_lea.vmem %s1, 898
    %v2431 = vld [vmem:[%s2430] ss:$8 sm:$0x3]
    %v2433 = vlaneseq
    %v2434 = vshrl.u32 %v2433, 7
    %v2435 = vsub.s32 0, %v2434
    %v2436 = vrot.slane %v2431, %v2435
    %v2437 = vlaneseq
    %v2438 = vshrl.u32 %v2437, 7
    %v2439 = vsub.s32 1, %v2438
    %v2440 = vrot.slane %v2431, %v2439
    %v2444 = vsel %vm78, %v2413, 0
    %2446 = vmatprep.subr.mxu0 0.0
    %2447 = vmatpush1.msra.mxu0 0.0
    %2448 = vmatprep.subr.mxu0 0.0
    %2449 = vmatpush1.msra.mxu0 0.0
    %2450 = vmatprep.subr.mxu0 0.0
    %2451 = vmatpush1.msra.mxu0 0.0
    %2452 = vmatprep.subr.mxu0 0.0
    %2453 = vmatpush1.msra.mxu0 0.0
    %2454 = vmatprep.subr.mxu0 0.0
    %2455 = vmatpush1.msra.mxu0 0.0
    %2456 = vmatprep.subr.mxu0 0.0
    %2457 = vmatpush1.msra.mxu0 0.0
    %2458 = vmatprep.subr.mxu0 0.0
    %2459 = vmatpush1.msra.mxu0 0.0
    %2460 = vmatprep.subr.mxu0 0.0
    %2461 = vmatpush1.msra.mxu0 0.0
    %2462 = vmatprep.subr.mxu0 %v2429
    %2463 = vmatpush1.msra.mxu0 %v2428
    %2464 = vmatprep.subr.mxu0 %v2427
    %2465 = vmatpush1.msra.mxu0 %v2426
    %2466 = vmatprep.subr.mxu0 %v2425
    %2467 = vmatpush1.msra.mxu0 %v2424
    %2468 = vmatprep.subr.mxu0 %v2423
    %2469 = vmatpush1.msra.mxu0 %v2422
    %2470 = vmatprep.subr.mxu0 %v2421
    %2471 = vmatpush1.msra.mxu0 %v2420
    %2472 = vmatprep.subr.mxu0 %v2419
    %2473 = vmatpush1.msra.mxu0 %v2418
    %2474 = vmatprep.subr.mxu0 %v2417
    %2475 = vmatpush1.msra.mxu0 %v2416
    %2476 = vmatprep.subr.mxu0 %v2415
    %2477 = vmatpush1.msra.mxu0 %v2414
    %2478 = vmatprep.subr.mxu0 0.0
    %2479 = vmatpush2.msra.mxu0 0.0
    %2480 = vmatprep.subr.mxu0 0.0
    %2481 = vmatpush2.msra.mxu0 0.0
    %2482 = vmatprep.subr.mxu0 0.0
    %2483 = vmatpush2.msra.mxu0 0.0
    %2484 = vmatprep.subr.mxu0 0.0
    %2485 = vmatpush2.msra.mxu0 0.0
    %2486 = vmatprep.subr.mxu0 0.0
    %2487 = vmatpush2.msra.mxu0 0.0
    %2488 = vmatprep.subr.mxu0 0.0
    %2489 = vmatpush2.msra.mxu0 0.0
    %2490 = vmatprep.subr.mxu0 0.0
    %2491 = vmatpush2.msra.mxu0 0.0
    %2492 = vmatprep.subr.mxu0 0.0
    %2493 = vmatpush2.msra.mxu0 0.0
    %2494 = vmatprep.subr.mxu0 0.0
    %2495 = vmatpush2.msra.mxu0 0.0
    %2496 = vmatprep.subr.mxu0 0.0
    %2497 = vmatpush2.msra.mxu0 0.0
    %2498 = vmatprep.subr.mxu0 0.0
    %2499 = vmatpush2.msra.mxu0 0.0
    %2500 = vmatprep.subr.mxu0 0.0
    %2501 = vmatpush2.msra.mxu0 0.0
    %2502 = vmatprep.subr.mxu0 0.0
    %2503 = vmatpush2.msra.mxu0 0.0
    %2504 = vmatprep.subr.mxu0 0.0
    %2505 = vmatpush2.msra.mxu0 0.0
    %2506 = vmatprep.subr.mxu0 0.0
    %2507 = vmatpush2.msra.mxu0 0.0
    %2508 = vmatprep.subr.mxu0 0.0
    %2509 = vmatpush2.msra.mxu0 0.0
    %2510 = vmatprep.mubr.f32.mxu0 0.0
    %2511 = vmatmul.mubr.f32.gmra.mxu0 %v2444
    %v2512 = vpop.f32.mrf.mxu0
    %v2513 = vadd.f32 %v2436, %v2512
    %v2514 = vpop.f32.mrf.mxu0
    %v2515 = vadd.f32 %v2440, %v2514
    %2516 = vdwg.mxu0
    %v2517 = vmax.f32 %v2513, 0.0
    %v2518 = vmax.f32 %v2515, 0.0
    %v2519 = vsel %vm31, %v2517, %v2513
    %v2520 = vsel %vm32, %v2518, %v2515
    %v2521 = vld [vmem:[%s1 + $0x180] sm:$0xff]
    %v2522 = vld [vmem:[%s1 + $0x188] sm:$0xff]
    %v2523 = vld [vmem:[%s1 + $0x190] sm:$0xff]
    %v2524 = vld [vmem:[%s1 + $0x198] sm:$0xff]
    %v2525 = vld [vmem:[%s1 + $0x1a0] sm:$0xff]
    %v2526 = vld [vmem:[%s1 + $0x1a8] sm:$0xff]
    %v2527 = vld [vmem:[%s1 + $0x1b0] sm:$0xff]
    %v2528 = vld [vmem:[%s1 + $0x1b8] sm:$0xff]
    %v2529 = vld [vmem:[%s1 + $0x1c0] sm:$0xff]
    %v2530 = vld [vmem:[%s1 + $0x1c8] sm:$0xff]
    %v2531 = vld [vmem:[%s1 + $0x1d0] sm:$0xff]
    %v2532 = vld [vmem:[%s1 + $0x1d8] sm:$0xff]
    %v2533 = vld [vmem:[%s1 + $0x1e0] sm:$0xff]
    %v2534 = vld [vmem:[%s1 + $0x1e8] sm:$0xff]
    %v2535 = vld [vmem:[%s1 + $0x1f0] sm:$0xff]
    %v2536 = vld [vmem:[%s1 + $0x1f8] sm:$0xff]
    %v2537 = vld [vmem:[%s1 + $0x200] sm:$0xff]
    %v2538 = vld [vmem:[%s1 + $0x208] sm:$0xff]
    %v2539 = vld [vmem:[%s1 + $0x210] sm:$0xff]
    %v2540 = vld [vmem:[%s1 + $0x218] sm:$0xff]
    %v2541 = vld [vmem:[%s1 + $0x220] sm:$0xff]
    %v2542 = vld [vmem:[%s1 + $0x228] sm:$0xff]
    %v2543 = vld [vmem:[%s1 + $0x230] sm:$0xff]
    %v2544 = vld [vmem:[%s1 + $0x238] sm:$0xff]
    %v2545 = vld [vmem:[%s1 + $0x240] sm:$0xff]
    %v2546 = vld [vmem:[%s1 + $0x248] sm:$0xff]
    %v2547 = vld [vmem:[%s1 + $0x250] sm:$0xff]
    %v2548 = vld [vmem:[%s1 + $0x258] sm:$0xff]
    %v2549 = vld [vmem:[%s1 + $0x260] sm:$0xff]
    %v2550 = vld [vmem:[%s1 + $0x268] sm:$0xff]
    %v2551 = vld [vmem:[%s1 + $0x270] sm:$0xff]
    %v2552 = vld [vmem:[%s1 + $0x278] sm:$0xff]
    %v2553 = vld [vmem:[%s1 + $0x280] sm:$0xff]
    %v2554 = vld [vmem:[%s1 + $0x288] sm:$0xff]
    %v2555 = vld [vmem:[%s1 + $0x290] sm:$0xff]
    %v2556 = vld [vmem:[%s1 + $0x298] sm:$0xff]
    %v2557 = vld [vmem:[%s1 + $0x2a0] sm:$0xff]
    %v2558 = vld [vmem:[%s1 + $0x2a8] sm:$0xff]
    %v2559 = vld [vmem:[%s1 + $0x2b0] sm:$0xff]
    %v2560 = vld [vmem:[%s1 + $0x2b8] sm:$0xff]
    %v2561 = vld [vmem:[%s1 + $0x2c0] sm:$0xff]
    %v2562 = vld [vmem:[%s1 + $0x2c8] sm:$0xff]
    %v2563 = vld [vmem:[%s1 + $0x2d0] sm:$0xff]
    %v2564 = vld [vmem:[%s1 + $0x2d8] sm:$0xff]
    %v2565 = vld [vmem:[%s1 + $0x2e0] sm:$0xff]
    %v2566 = vld [vmem:[%s1 + $0x2e8] sm:$0xff]
    %v2567 = vld [vmem:[%s1 + $0x2f0] sm:$0xff]
    %v2568 = vld [vmem:[%s1 + $0x2f8] sm:$0xff]
    %v2569 = vld [vmem:[%s1 + $0x300] sm:$0xff]
    %v2570 = vld [vmem:[%s1 + $0x308] sm:$0xff]
    %v2571 = vld [vmem:[%s1 + $0x310] sm:$0xff]
    %v2572 = vld [vmem:[%s1 + $0x318] sm:$0xff]
    %v2573 = vld [vmem:[%s1 + $0x320] sm:$0xff]
    %v2574 = vld [vmem:[%s1 + $0x328] sm:$0xff]
    %v2575 = vld [vmem:[%s1 + $0x330] sm:$0xff]
    %v2576 = vld [vmem:[%s1 + $0x338] sm:$0xff]
    %v2577 = vld [vmem:[%s1 + $0x340] sm:$0xff]
    %v2578 = vld [vmem:[%s1 + $0x348] sm:$0xff]
    %v2579 = vld [vmem:[%s1 + $0x350] sm:$0xff]
    %v2580 = vld [vmem:[%s1 + $0x358] sm:$0xff]
    %v2581 = vld [vmem:[%s1 + $0x360] sm:$0xff]
    %v2582 = vld [vmem:[%s1 + $0x368] sm:$0xff]
    %v2583 = vld [vmem:[%s1 + $0x370] sm:$0xff]
    %v2584 = vld [vmem:[%s1 + $0x378] sm:$0xff]
    %s2585 = scalar_lea.vmem %s1, 899
    %v2586 = vld [vmem:[%s2585] ss:$8 sm:$0x3]
    %v2588 = vlaneseq
    %v2589 = vshrl.u32 %v2588, 7
    %v2590 = vsub.s32 0, %v2589
    %v2591 = vrot.slane %v2586, %v2590
    %v2592 = vlaneseq
    %v2593 = vshrl.u32 %v2592, 7
    %v2594 = vsub.s32 1, %v2593
    %v2595 = vrot.slane %v2586, %v2594
    %2598 = vmatprep.subr.mxu0 %v2552
    %2599 = vmatpush1.msra.mxu0 %v2551
    %2600 = vmatprep.subr.mxu0 %v2550
    %2601 = vmatpush1.msra.mxu0 %v2549
    %2602 = vmatprep.subr.mxu0 %v2548
    %2603 = vmatpush1.msra.mxu0 %v2547
    %2604 = vmatprep.subr.mxu0 %v2546
    %2605 = vmatpush1.msra.mxu0 %v2545
    %2606 = vmatprep.subr.mxu0 %v2544
    %2607 = vmatpush1.msra.mxu0 %v2543
    %2608 = vmatprep.subr.mxu0 %v2542
    %2609 = vmatpush1.msra.mxu0 %v2541
    %2610 = vmatprep.subr.mxu0 %v2540
    %2611 = vmatpush1.msra.mxu0 %v2539
    %2612 = vmatprep.subr.mxu0 %v2538
    %2613 = vmatpush1.msra.mxu0 %v2537
    %2614 = vmatprep.subr.mxu0 %v2536
    %2615 = vmatpush1.msra.mxu0 %v2535
    %2616 = vmatprep.subr.mxu0 %v2534
    %2617 = vmatpush1.msra.mxu0 %v2533
    %2618 = vmatprep.subr.mxu0 %v2532
    %2619 = vmatpush1.msra.mxu0 %v2531
    %2620 = vmatprep.subr.mxu0 %v2530
    %2621 = vmatpush1.msra.mxu0 %v2529
    %2622 = vmatprep.subr.mxu0 %v2528
    %2623 = vmatpush1.msra.mxu0 %v2527
    %2624 = vmatprep.subr.mxu0 %v2526
    %2625 = vmatpush1.msra.mxu0 %v2525
    %2626 = vmatprep.subr.mxu0 %v2524
    %2627 = vmatpush1.msra.mxu0 %v2523
    %2628 = vmatprep.subr.mxu0 %v2522
    %2629 = vmatpush1.msra.mxu0 %v2521
    %2630 = vmatprep.subr.mxu0 %v2584
    %2631 = vmatpush2.msra.mxu0 %v2583
    %2632 = vmatprep.subr.mxu0 %v2582
    %2633 = vmatpush2.msra.mxu0 %v2581
    %2634 = vmatprep.subr.mxu0 %v2580
    %2635 = vmatpush2.msra.mxu0 %v2579
    %2636 = vmatprep.subr.mxu0 %v2578
    %2637 = vmatpush2.msra.mxu0 %v2577
    %2638 = vmatprep.subr.mxu0 %v2576
    %2639 = vmatpush2.msra.mxu0 %v2575
    %2640 = vmatprep.subr.mxu0 %v2574
    %2641 = vmatpush2.msra.mxu0 %v2573
    %2642 = vmatprep.subr.mxu0 %v2572
    %2643 = vmatpush2.msra.mxu0 %v2571
    %2644 = vmatprep.subr.mxu0 %v2570
    %2645 = vmatpush2.msra.mxu0 %v2569
    %2646 = vmatprep.subr.mxu0 %v2568
    %2647 = vmatpush2.msra.mxu0 %v2567
    %2648 = vmatprep.subr.mxu0 %v2566
    %2649 = vmatpush2.msra.mxu0 %v2565
    %2650 = vmatprep.subr.mxu0 %v2564
    %2651 = vmatpush2.msra.mxu0 %v2563
    %2652 = vmatprep.subr.mxu0 %v2562
    %2653 = vmatpush2.msra.mxu0 %v2561
    %2654 = vmatprep.subr.mxu0 %v2560
    %2655 = vmatpush2.msra.mxu0 %v2559
    %2656 = vmatprep.subr.mxu0 %v2558
    %2657 = vmatpush2.msra.mxu0 %v2557
    %2658 = vmatprep.subr.mxu0 %v2556
    %2659 = vmatpush2.msra.mxu0 %v2555
    %2660 = vmatprep.subr.mxu0 %v2554
    %2661 = vmatpush2.msra.mxu0 %v2553
    %2662 = vmatprep.mubr.f32.mxu0 %v2520
    %2663 = vmatmul.mubr.f32.gmra.mxu0 %v2519
    %v2664 = vpop.f32.mrf.mxu0
    %v2665 = vadd.f32 %v2591, %v2664
    %v2666 = vpop.f32.mrf.mxu0
    %v2667 = vadd.f32 %v2595, %v2666
    %2668 = vdwg.mxu0
    %vm2669 = vcmp.lt.s32.totalorder %v29, 128
    %vm2670 = vcmp.lt.s32.totalorder %v30, 128
    %v2671 = vmax.f32 %v2665, 0.0
    %v2672 = vmax.f32 %v2667, 0.0
    %v2673 = vsel %vm2669, %v2671, %v2665
    %v2674 = vsel %vm2670, %v2672, %v2667
    %2675 = vst [vmem:[%s3] sm:$0xff] %v2673
    %2676 = vst [vmem:[%s3 + $0x8] sm:$0xff] %v2674
    // Predicated region
    $region18: #{netz_forward.1} parent=1 // pred_check
      _
    $region19: #{netz_forward.1} parent=1 // pred_check_branch
      %2678 = sbr.rel (0) target = $region21
    $region20: #{netz_forward.1} parent=1 // pred_region
      _
    $region21: #{netz_forward.1} parent=1 // pred_fallthru
      _
    // Predicated region
    $region22: #{netz_forward.1} parent=1 // pred_check
      _
    $region23: #{netz_forward.1} parent=1 // pred_check_branch
      %2680 = sbr.rel (0) target = $region25
    $region24: #{netz_forward.1} parent=1 // pred_region
      _
    $region25: #{netz_forward.1} parent=1 // pred_fallthru
      _
    %2681 = vsyncpa [#allocation4], 1

</llo_original>
